<compile_context>
chip_gen: v5e
topology: v5e:2x2
jax: 0.10.0
libtpu: 0.0.40
codegen_flags: <defaults>
</compile_context>

<pallas_src>
import jax
import jax.numpy as jnp
from jax import lax
from jax.experimental import pallas as pl
from jax.experimental.pallas import tpu as pltpu

EPS = 1e-5  # nn.BatchNorm3d default


# ------------------------------------------------------------------ helpers --
def _pick_tile(total, target, multiple):
    """Largest divisor of `total` that is <= target and a multiple of `multiple`;
    falls back to `total` (full extent) if none exists."""
    t = min(target, total)
    t = (t // multiple) * multiple
    while t >= multiple:
        if total % t == 0:
            return t
        t -= multiple
    return total


def _conv_tile_m(m, k):
    """M-tile for the conv pass: large (amortize ~0.35us/grid-step), capped so
    the double-buffered bf16 patch tiles stay ~8 MiB of VMEM, and kept to
    >= 2 grid steps so the "parallel" axis can shard across v7x's 2 cores."""
    vmem_rows = max(8, (8 * 1024 * 1024) // max(1, 2 * k * 2))
    target = min(2048, vmem_rows)
    if m >= 16:
        target = min(target, m // 2)
    return _pick_tile(m, max(8, target), 8)


# ------------------------------------------------------------------ kernels --
def _maxpool_kernel(win_ref, o_ref):
    # win_ref: (8, TL) bf16 -- the 8 corners of each 2x2x2 window, payload
    # flattened lane-dense as (M*C) in the last axis.
    o_ref[...] = jnp.max(win_ref[...], axis=0, keepdims=True)


def _conv_stats_kernel(p_ref, w_ref, b_ref, o_ref, s1_ref, s2_ref):
    # p_ref : (TM, K)      bf16 im2col patches, K = 27*Cin (taps folded into K)
    # w_ref : (K, Cout)    bf16 weights (resident across the grid)
    # b_ref : (1, Cout)    f32 conv bias
    # o_ref : (TM, Cout)   f32 conv + bias
    # s1/s2 : (1, 1, Cout) per-tile partial sum / sum-of-squares of the
    #                      *pre-bias* conv (bias re-added when finalizing mean).
    raw = jnp.dot(p_ref[...], w_ref[...], preferred_element_type=jnp.float32)
    o_ref[...] = raw + b_ref[...]
    s1_ref[...] = jnp.sum(raw, axis=0, keepdims=True)[None]
    s2_ref[...] = jnp.sum(raw * raw, axis=0, keepdims=True)[None]


def _bn_relu_kernel(x_ref, scale_ref, shift_ref, o_ref):
    # x_ref: (TM8, 8*Cout) f32 lane-dense view ; scale/shift: (1, 8*Cout) f32
    y = jnp.maximum(x_ref[...] * scale_ref[...] + shift_ref[...], 0.0)
    o_ref[...] = y.astype(o_ref.dtype)


# ------------------------------------------------------------- pallas calls --
def maxpool_pallas(wins):  # (8, L) bf16 -> (1, L) bf16
    _, L = wins.shape
    if L % 128 == 0:
        tl = _pick_tile(L, min(32768, max(128, L // 2)), 128)
    else:
        tl = L  # tiny/ragged fallback: single (masked) block
    return pl.pallas_call(
        _maxpool_kernel,
        out_shape=jax.ShapeDtypeStruct((1, L), wins.dtype),
        grid=(L // tl,),
        in_specs=[pl.BlockSpec((8, tl), lambda i: (0, i))],
        out_specs=pl.BlockSpec((1, tl), lambda i: (0, i)),
        compiler_params=pltpu.CompilerParams(
            dimension_semantics=("parallel",)),
    )(wins)


def conv_stats_pallas(patches, w, b, tm):
    # patches (M, K) bf16, w (K, Cout) bf16, b (1, Cout) f32
    M, K = patches.shape
    Cout = w.shape[-1]
    n_tiles = M // tm
    return pl.pallas_call(
        _conv_stats_kernel,
        out_shape=(
            jax.ShapeDtypeStruct((M, Cout), jnp.float32),
            jax.ShapeDtypeStruct((n_tiles, 1, Cout), jnp.float32),
            jax.ShapeDtypeStruct((n_tiles, 1, Cout), jnp.float32),
        ),
        grid=(n_tiles,),
        in_specs=[
            pl.BlockSpec((tm, K), lambda i: (i, 0)),
            pl.BlockSpec((K, Cout), lambda i: (0, 0)),   # weights resident
            pl.BlockSpec((1, Cout), lambda i: (0, 0)),
        ],
        out_specs=[
            pl.BlockSpec((tm, Cout), lambda i: (i, 0)),
            pl.BlockSpec((1, 1, Cout), lambda i: (i, 0, 0)),
            pl.BlockSpec((1, 1, Cout), lambda i: (i, 0, 0)),
        ],
        compiler_params=pltpu.CompilerParams(
            dimension_semantics=("parallel",),
            vmem_limit_bytes=32 * 1024 * 1024),
    )(patches, w, b)


def bn_relu_pallas(x, scale, shift, tm, out_dtype):
    # x (M, C) f32, scale/shift (1, C) f32 -> (M, C) out_dtype
    M, C = x.shape
    if (8 * C) % 128 == 0 and M % 8 == 0 and tm % 8 == 0:
        # Lane-dense view: last dim becomes a multiple of 128 -> dense vld/vst.
        x = x.reshape(M // 8, 8 * C)
        scale = jnp.tile(scale, (1, 8))   # column j of the dense view is channel j % C
        shift = jnp.tile(shift, (1, 8))
        tm = tm // 8
    Mr, Cr = x.shape
    out = pl.pallas_call(
        _bn_relu_kernel,
        out_shape=jax.ShapeDtypeStruct((Mr, Cr), out_dtype),
        grid=(Mr // tm,),
        in_specs=[
            pl.BlockSpec((tm, Cr), lambda i: (i, 0)),
            pl.BlockSpec((1, Cr), lambda i: (0, 0)),
            pl.BlockSpec((1, Cr), lambda i: (0, 0)),
        ],
        out_specs=pl.BlockSpec((tm, Cr), lambda i: (i, 0)),
        compiler_params=pltpu.CompilerParams(
            dimension_semantics=("parallel",),
            vmem_limit_bytes=32 * 1024 * 1024),
    )(x, scale, shift)
    return out.reshape(M, C)


# ------------------------------------------------------------------- glue ----
def conv_bn_relu_block(inp, w, b, gamma, beta, out_dtype):
    # inp: (N, D, H, W, Cin); w: (27*Cin, Cout) bf16; b/gamma/beta: (1, Cout) f32
    n, d, h, ww, c = inp.shape
    m = n * d * h * ww
    cout = w.shape[-1]

    # pad=1 'same' conv; im2col materialized directly in bf16 (halves its HBM
    # write+read).  TODO(synk): in-kernel halo-tile DMA instead (see header).
    xp = jnp.pad(inp.astype(jnp.bfloat16), ((0, 0), (1, 1), (1, 1), (1, 1), (0, 0)))
    patches = jnp.concatenate(
        [xp[:, kd:kd + d, kh:kh + h, kw:kw + ww, :].reshape(m, c)
         for kd in range(3) for kh in range(3) for kw in range(3)],
        axis=1,
    )  # (M, 27*Cin), tap-major / channel-minor, matching w's row order.

    tm = _conv_tile_m(m, 27 * c)
    conv, s1, s2 = conv_stats_pallas(patches, w, b, tm)

    # Finalize BN batch stats (biased variance, training-mode BatchNorm3d).
    # Stats were accumulated on the pre-bias conv -> add the bias back to mean;
    # variance is shift-invariant.
    e_raw = s1.sum(axis=0)[0] / m                       # (Cout,)
    var = s2.sum(axis=0)[0] / m - e_raw * e_raw
    mean = e_raw + b[0]
    scale = gamma[0] * lax.rsqrt(var + EPS)
    shift = beta[0] - mean * scale

    out = bn_relu_pallas(conv, scale[None], shift[None], tm, out_dtype)
    return out.reshape(n, d, h, ww, cout)


def down_forward(x_ncdhw, params):
    """Down.forward: NCDHW in, NCDHW out (spatial halved, channels -> Cout)."""
    N, Cin, D, H, W = x_ncdhw.shape
    x = jnp.transpose(x_ncdhw, (0, 2, 3, 4, 1)).astype(jnp.bfloat16)  # NDHWC bf16
    D2, H2, W2 = D // 2, H // 2, W // 2
    Mp = N * D2 * H2 * W2

    # MaxPool3d(2,2): bring the 8 window corners to the leading axis, flatten
    # the (Mp, C) payload lane-dense into the last axis, max-reduce in-kernel.
    # (max and bf16 round-to-nearest commute, so pooling in bf16 is exact.)
    wins = x.reshape(N, D2, 2, H2, 2, W2, 2, Cin)
    wins = jnp.transpose(wins, (2, 4, 6, 0, 1, 3, 5, 7)).reshape(8, Mp * Cin)
    pooled = maxpool_pallas(wins).reshape(N, D2, H2, W2, Cin)

    # Inter-layer activation in bf16 (layer 2 feeds it to the MXU in bf16
    # anyway); final layer output in f32 to match the module's output dtype.
    y = conv_bn_relu_block(pooled, params["w1"], params["b1"],
                           params["g1"], params["beta1"], jnp.bfloat16)
    y = conv_bn_relu_block(y, params["w2"], params["b2"],
                           params["g2"], params["beta2"], jnp.float32)
    return jnp.transpose(y, (0, 4, 1, 2, 3))  # back to NCDHW


# --------------------------------------------------------------- reference ---
def ref_forward(x_ncdhw, params, matmul_dtype=jnp.float32):
    x = jnp.transpose(x_ncdhw, (0, 2, 3, 4, 1))
    N, D, H, W, C = x.shape
    x = x.reshape(N, D // 2, 2, H // 2, 2, W // 2, 2, C).max(axis=(2, 4, 6))

    def block(inp, wflat, b, g, be):
        cin, cout = inp.shape[-1], wflat.shape[-1]
        wk = wflat.reshape(3, 3, 3, cin, cout)
        y = lax.conv_general_dilated(
            inp.astype(matmul_dtype), wk.astype(matmul_dtype),
            window_strides=(1, 1, 1), padding="SAME",
            dimension_numbers=("NDHWC", "DHWIO", "NDHWC"),
            preferred_element_type=jnp.float32)
        y = y + b[0]
        mean = y.mean(axis=(0, 1, 2, 3), keepdims=True)
        var = ((y - mean) ** 2).mean(axis=(0, 1, 2, 3), keepdims=True)
        return jnp.maximum((y - mean) * lax.rsqrt(var + EPS) * g[0] + be[0], 0.0)

    y = block(x, params["w1"], params["b1"], params["g1"], params["beta1"])
    y = block(y, params["w2"], params["b2"], params["g2"], params["beta2"])
    return jnp.transpose(y, (0, 4, 1, 2, 3))


# ---------------------------------------------------------------- params -----
def init_params(key, cin, cout):
    def conv_w(k, ci, co):
        # torch (O, I, kD, kH, kW) -> (kD, kH, kW, I, O) -> (27*I, O), stored
        # pre-cast to bf16 so there is no per-forward weight cast.
        w = jax.random.normal(k, (co, ci, 3, 3, 3), jnp.float32) * 0.1
        return jnp.transpose(w, (2, 3, 4, 1, 0)).reshape(27 * ci, co).astype(jnp.bfloat16)

    k1, k2, k3, k4 = jax.random.split(key, 4)
    return {
        "w1": conv_w(k1, cin, cout),
        "b1": jax.random.normal(k2, (1, cout), jnp.float32) * 0.1,
        "g1": jnp.ones((1, cout), jnp.float32),
        "beta1": jnp.zeros((1, cout), jnp.float32),
        "w2": conv_w(k3, cout, cout),
        "b2": jax.random.normal(k4, (1, cout), jnp.float32) * 0.1,
        "g2": jnp.ones((1, cout), jnp.float32),
        "beta2": jnp.zeros((1, cout), jnp.float32),
    }


if __name__ == "__main__":
    key = jax.random.PRNGKey(0)
    kx, kp = jax.random.split(key)
    N, Cin, Cout, S = 2, 4, 16, 16          # input NCDHW = (2, 4, 16, 16, 16)
    x = jax.random.normal(kx, (N, Cin, S, S, S), jnp.float32)
    params = init_params(kp, Cin, Cout)

    fwd = jax.jit(down_forward)
    out = jax.block_until_ready(fwd(x, params))
    assert out.shape == (N, Cout, S // 2, S // 2, S // 2), out.shape

    # Structural-correctness check vs. an XLA reference that uses the same bf16
    # MXU operands / f32 accumulation as the kernel.  Tolerance is sized for
    # bf16-operand rounding (~2^-8 relative) compounded over the two conv
    # layers and the bf16 inter-layer activation.
    ref = jax.block_until_ready(ref_forward(x, params, matmul_dtype=jnp.bfloat16))
    max_err = float(jnp.abs(out - ref).max())
    assert jnp.allclose(out, ref, atol=1e-2, rtol=1e-2), max_err

    # Informational: drift vs. pure-f32 math is just bf16 rounding.
    _ = float(jnp.abs(out - ref_forward(x, params, jnp.float32)).max())

    print("KERNEL_OK")
</pallas_src>

<mosaic_0001>
module attributes {stable_mosaic.version = 11 : i64} {
  func.func @_maxpool_kernel(%arg0: i32, %arg1: memref<8x2048xbf16, #tpu.memory_space<vmem>>, %arg2: memref<1x2048xbf16, #tpu.memory_space<vmem>>) attributes {dimension_semantics = [#tpu.dimension_semantics<parallel>], iteration_bounds = array<i64: 2>, scalar_prefetch = 0 : i64, scratch_operands = 0 : i64, tpu.core_type = #tpu.core_type<tc>, window_params = [{transform_indices = @transform_0, window_bounds = array<i64: 8, 2048>}, {transform_indices = @transform_1, window_bounds = array<i64: 1, 2048>}]} {
    %c0 = arith.constant 0 : index
    %c0_0 = arith.constant 0 : index
    %0 = vector.load %arg1[%c0, %c0_0] : memref<8x2048xbf16, #tpu.memory_space<vmem>>, vector<8x2048xbf16>
    %cst = arith.constant dense<0xFF80> : vector<2048xbf16>
    %1 = vector.multi_reduction <maximumf>, %0, %cst [0] : vector<8x2048xbf16> to vector<2048xbf16>
    %2 = vector.shape_cast %1 : vector<2048xbf16> to vector<1x2048xbf16>
    %c0_1 = arith.constant 0 : index
    %c0_2 = arith.constant 0 : index
    %3 = vector.load %arg2[%c0_1, %c0_2] : memref<1x2048xbf16, #tpu.memory_space<vmem>>, vector<1x2048xbf16>
    tpu.vector_store %arg2[%c0_1, %c0_2], %2 {strides = array<i32>} : memref<1x2048xbf16, #tpu.memory_space<vmem>>, vector<1x2048xbf16>,
    return
  }
  func.func @transform_0(%arg0: i32) -> (i32, i32) {
    %c0_i32 = arith.constant 0 : i32
    %c0_i32_0 = arith.constant 0 : i32
    return %c0_i32, %arg0 : i32, i32
  }
  func.func @transform_1(%arg0: i32) -> (i32, i32) {
    %c0_i32 = arith.constant 0 : i32
    %c0_i32_0 = arith.constant 0 : i32
    return %c0_i32, %arg0 : i32, i32
  }
}

module attributes {stable_mosaic.version = 11 : i64} {
  func.func @_conv_stats_kernel(%arg0: i32, %arg1: memref<512x108xbf16, #tpu.memory_space<vmem>>, %arg2: memref<108x16xbf16, #tpu.memory_space<vmem>>, %arg3: memref<1x16xf32, #tpu.memory_space<vmem>>, %arg4: memref<512x16xf32, #tpu.memory_space<vmem>>, %arg5: memref<1x1x16xf32, #tpu.memory_space<vmem>>, %arg6: memref<1x1x16xf32, #tpu.memory_space<vmem>>) attributes {dimension_semantics = [#tpu.dimension_semantics<parallel>], iteration_bounds = array<i64: 2>, scalar_prefetch = 0 : i64, scratch_operands = 0 : i64, tpu.core_type = #tpu.core_type<tc>, window_params = [{transform_indices = @transform_0, window_bounds = array<i64: 512, 108>}, {pipeline_mode = #tpu.pipeline_mode<synchronous>, transform_indices = @transform_1, window_bounds = array<i64: 108, 16>}, {pipeline_mode = #tpu.pipeline_mode<synchronous>, transform_indices = @transform_2, window_bounds = array<i64: 1, 16>}, {transform_indices = @transform_3, window_bounds = array<i64: 512, 16>}, {transform_indices = @transform_4, window_bounds = array<i64: 1, 1, 16>}, {transform_indices = @transform_5, window_bounds = array<i64: 1, 1, 16>}]} {
    %c0 = arith.constant 0 : index
    %c0_0 = arith.constant 0 : index
    %0 = vector.load %arg1[%c0, %c0_0] : memref<512x108xbf16, #tpu.memory_space<vmem>>, vector<512x108xbf16>
    %c0_1 = arith.constant 0 : index
    %c0_2 = arith.constant 0 : index
    %1 = vector.load %arg2[%c0_1, %c0_2] : memref<108x16xbf16, #tpu.memory_space<vmem>>, vector<108x16xbf16>
    %cst = arith.constant dense<0.000000e+00> : vector<512x16xf32>
    %2 = tpu.matmul %0, %1, %cst {dimension_numbers = #tpu.dot_dimension_numbers<[1], [0], [0], [1], [0, 0, 1, 1], [], []>} : vector<512x108xbf16>, vector<108x16xbf16>, vector<512x16xf32> -> vector<512x16xf32>
    %c0_3 = arith.constant 0 : index
    %c0_4 = arith.constant 0 : index
    %3 = vector.load %arg3[%c0_3, %c0_4] : memref<1x16xf32, #tpu.memory_space<vmem>>, vector<1x16xf32>
    %4 = vector.broadcast %3 : vector<1x16xf32> to vector<512x16xf32>
    %5 = arith.addf %2, %4 : vector<512x16xf32>
    %c0_5 = arith.constant 0 : index
    %c0_6 = arith.constant 0 : index
    %6 = vector.load %arg4[%c0_5, %c0_6] : memref<512x16xf32, #tpu.memory_space<vmem>>, vector<512x16xf32>
    tpu.vector_store %arg4[%c0_5, %c0_6], %5 {strides = array<i32>} : memref<512x16xf32, #tpu.memory_space<vmem>>, vector<512x16xf32>,
    %cst_7 = arith.constant dense<0.000000e+00> : vector<16xf32>
    %7 = vector.multi_reduction <add>, %2, %cst_7 [0] : vector<512x16xf32> to vector<16xf32>
    %8 = vector.shape_cast %7 : vector<16xf32> to vector<1x16xf32>
    %9 = vector.shape_cast %8 : vector<1x16xf32> to vector<1x1x16xf32>
    %c0_8 = arith.constant 0 : index
    %c0_9 = arith.constant 0 : index
    %c0_10 = arith.constant 0 : index
    %10 = vector.load %arg5[%c0_8, %c0_9, %c0_10] : memref<1x1x16xf32, #tpu.memory_space<vmem>>, vector<1x1x16xf32>
    tpu.vector_store %arg5[%c0_8, %c0_9, %c0_10], %9 {strides = array<i32>} : memref<1x1x16xf32, #tpu.memory_space<vmem>>, vector<1x1x16xf32>,
    %11 = arith.mulf %2, %2 : vector<512x16xf32>
    %cst_11 = arith.constant dense<0.000000e+00> : vector<16xf32>
    %12 = vector.multi_reduction <add>, %11, %cst_11 [0] : vector<512x16xf32> to vector<16xf32>
    %13 = vector.shape_cast %12 : vector<16xf32> to vector<1x16xf32>
    %14 = vector.shape_cast %13 : vector<1x16xf32> to vector<1x1x16xf32>
    %c0_12 = arith.constant 0 : index
    %c0_13 = arith.constant 0 : index
    %c0_14 = arith.constant 0 : index
    %15 = vector.load %arg6[%c0_12, %c0_13, %c0_14] : memref<1x1x16xf32, #tpu.memory_space<vmem>>, vector<1x1x16xf32>
    tpu.vector_store %arg6[%c0_12, %c0_13, %c0_14], %14 {strides = array<i32>} : memref<1x1x16xf32, #tpu.memory_space<vmem>>, vector<1x1x16xf32>,
    return
  }
  func.func @transform_0(%arg0: i32) -> (i32, i32) {
    %c0_i32 = arith.constant 0 : i32
    %c0_i32_0 = arith.constant 0 : i32
    return %arg0, %c0_i32 : i32, i32
  }
  func.func @transform_1(%arg0: i32) -> (i32, i32) {
    %c0_i32 = arith.constant 0 : i32
    %c0_i32_0 = arith.constant 0 : i32
    %c0_i32_1 = arith.constant 0 : i32
    return %c0_i32, %c0_i32_0 : i32, i32
  }
  func.func @transform_2(%arg0: i32) -> (i32, i32) {
    %c0_i32 = arith.constant 0 : i32
    %c0_i32_0 = arith.constant 0 : i32
    %c0_i32_1 = arith.constant 0 : i32
    return %c0_i32, %c0_i32_0 : i32, i32
  }
  func.func @transform_3(%arg0: i32) -> (i32, i32) {
    %c0_i32 = arith.constant 0 : i32
    %c0_i32_0 = arith.constant 0 : i32
    return %arg0, %c0_i32 : i32, i32
  }
  func.func @transform_4(%arg0: i32) -> (i32, i32, i32) {
    %c0_i32 = arith.constant 0 : i32
    %c0_i32_0 = arith.constant 0 : i32
    %c0_i32_1 = arith.constant 0 : i32
    return %arg0, %c0_i32, %c0_i32_0 : i32, i32, i32
  }
  func.func @transform_5(%arg0: i32) -> (i32, i32, i32) {
    %c0_i32 = arith.constant 0 : i32
    %c0_i32_0 = arith.constant 0 : i32
    %c0_i32_1 = arith.constant 0 : i32
    return %arg0, %c0_i32, %c0_i32_0 : i32, i32, i32
  }
}

module attributes {stable_mosaic.version = 11 : i64} {
  func.func @_bn_relu_kernel(%arg0: i32, %arg1: memref<64x128xf32, #tpu.memory_space<vmem>>, %arg2: memref<1x128xf32, #tpu.memory_space<vmem>>, %arg3: memref<1x128xf32, #tpu.memory_space<vmem>>, %arg4: memref<64x128xbf16, #tpu.memory_space<vmem>>) attributes {dimension_semantics = [#tpu.dimension_semantics<parallel>], iteration_bounds = array<i64: 2>, scalar_prefetch = 0 : i64, scratch_operands = 0 : i64, tpu.core_type = #tpu.core_type<tc>, window_params = [{transform_indices = @transform_0, window_bounds = array<i64: 64, 128>}, {pipeline_mode = #tpu.pipeline_mode<synchronous>, transform_indices = @transform_1, window_bounds = array<i64: 1, 128>}, {pipeline_mode = #tpu.pipeline_mode<synchronous>, transform_indices = @transform_2, window_bounds = array<i64: 1, 128>}, {transform_indices = @transform_3, window_bounds = array<i64: 64, 128>}]} {
    %c0 = arith.constant 0 : index
    %c0_0 = arith.constant 0 : index
    %0 = vector.load %arg1[%c0, %c0_0] : memref<64x128xf32, #tpu.memory_space<vmem>>, vector<64x128xf32>
    %c0_1 = arith.constant 0 : index
    %c0_2 = arith.constant 0 : index
    %1 = vector.load %arg2[%c0_1, %c0_2] : memref<1x128xf32, #tpu.memory_space<vmem>>, vector<1x128xf32>
    %2 = vector.broadcast %1 : vector<1x128xf32> to vector<64x128xf32>
    %3 = arith.mulf %0, %2 : vector<64x128xf32>
    %c0_3 = arith.constant 0 : index
    %c0_4 = arith.constant 0 : index
    %4 = vector.load %arg3[%c0_3, %c0_4] : memref<1x128xf32, #tpu.memory_space<vmem>>, vector<1x128xf32>
    %5 = vector.broadcast %4 : vector<1x128xf32> to vector<64x128xf32>
    %6 = arith.addf %3, %5 : vector<64x128xf32>
    %cst = arith.constant 0.000000e+00 : f32
    %7 = vector.broadcast %cst : f32 to vector<64x128xf32>
    %8 = arith.maximumf %6, %7 : vector<64x128xf32>
    %9 = arith.truncf %8 : vector<64x128xf32> to vector<64x128xbf16>
    %c0_5 = arith.constant 0 : index
    %c0_6 = arith.constant 0 : index
    %10 = vector.load %arg4[%c0_5, %c0_6] : memref<64x128xbf16, #tpu.memory_space<vmem>>, vector<64x128xbf16>
    tpu.vector_store %arg4[%c0_5, %c0_6], %9 {strides = array<i32>} : memref<64x128xbf16, #tpu.memory_space<vmem>>, vector<64x128xbf16>,
    return
  }
  func.func @transform_0(%arg0: i32) -> (i32, i32) {
    %c0_i32 = arith.constant 0 : i32
    %c0_i32_0 = arith.constant 0 : i32
    return %arg0, %c0_i32 : i32, i32
  }
  func.func @transform_1(%arg0: i32) -> (i32, i32) {
    %c0_i32 = arith.constant 0 : i32
    %c0_i32_0 = arith.constant 0 : i32
    %c0_i32_1 = arith.constant 0 : i32
    return %c0_i32, %c0_i32_0 : i32, i32
  }
  func.func @transform_2(%arg0: i32) -> (i32, i32) {
    %c0_i32 = arith.constant 0 : i32
    %c0_i32_0 = arith.constant 0 : i32
    %c0_i32_1 = arith.constant 0 : i32
    return %c0_i32, %c0_i32_0 : i32, i32
  }
  func.func @transform_3(%arg0: i32) -> (i32, i32) {
    %c0_i32 = arith.constant 0 : i32
    %c0_i32_0 = arith.constant 0 : i32
    return %arg0, %c0_i32 : i32, i32
  }
}

module attributes {stable_mosaic.version = 11 : i64} {
  func.func @_conv_stats_kernel(%arg0: i32, %arg1: memref<512x432xbf16, #tpu.memory_space<vmem>>, %arg2: memref<432x16xbf16, #tpu.memory_space<vmem>>, %arg3: memref<1x16xf32, #tpu.memory_space<vmem>>, %arg4: memref<512x16xf32, #tpu.memory_space<vmem>>, %arg5: memref<1x1x16xf32, #tpu.memory_space<vmem>>, %arg6: memref<1x1x16xf32, #tpu.memory_space<vmem>>) attributes {dimension_semantics = [#tpu.dimension_semantics<parallel>], iteration_bounds = array<i64: 2>, scalar_prefetch = 0 : i64, scratch_operands = 0 : i64, tpu.core_type = #tpu.core_type<tc>, window_params = [{transform_indices = @transform_0, window_bounds = array<i64: 512, 432>}, {pipeline_mode = #tpu.pipeline_mode<synchronous>, transform_indices = @transform_1, window_bounds = array<i64: 432, 16>}, {pipeline_mode = #tpu.pipeline_mode<synchronous>, transform_indices = @transform_2, window_bounds = array<i64: 1, 16>}, {transform_indices = @transform_3, window_bounds = array<i64: 512, 16>}, {transform_indices = @transform_4, window_bounds = array<i64: 1, 1, 16>}, {transform_indices = @transform_5, window_bounds = array<i64: 1, 1, 16>}]} {
    %c0 = arith.constant 0 : index
    %c0_0 = arith.constant 0 : index
    %0 = vector.load %arg1[%c0, %c0_0] : memref<512x432xbf16, #tpu.memory_space<vmem>>, vector<512x432xbf16>
    %c0_1 = arith.constant 0 : index
    %c0_2 = arith.constant 0 : index
    %1 = vector.load %arg2[%c0_1, %c0_2] : memref<432x16xbf16, #tpu.memory_space<vmem>>, vector<432x16xbf16>
    %cst = arith.constant dense<0.000000e+00> : vector<512x16xf32>
    %2 = tpu.matmul %0, %1, %cst {dimension_numbers = #tpu.dot_dimension_numbers<[1], [0], [0], [1], [0, 0, 1, 1], [], []>} : vector<512x432xbf16>, vector<432x16xbf16>, vector<512x16xf32> -> vector<512x16xf32>
    %c0_3 = arith.constant 0 : index
    %c0_4 = arith.constant 0 : index
    %3 = vector.load %arg3[%c0_3, %c0_4] : memref<1x16xf32, #tpu.memory_space<vmem>>, vector<1x16xf32>
    %4 = vector.broadcast %3 : vector<1x16xf32> to vector<512x16xf32>
    %5 = arith.addf %2, %4 : vector<512x16xf32>
    %c0_5 = arith.constant 0 : index
    %c0_6 = arith.constant 0 : index
    %6 = vector.load %arg4[%c0_5, %c0_6] : memref<512x16xf32, #tpu.memory_space<vmem>>, vector<512x16xf32>
    tpu.vector_store %arg4[%c0_5, %c0_6], %5 {strides = array<i32>} : memref<512x16xf32, #tpu.memory_space<vmem>>, vector<512x16xf32>,
    %cst_7 = arith.constant dense<0.000000e+00> : vector<16xf32>
    %7 = vector.multi_reduction <add>, %2, %cst_7 [0] : vector<512x16xf32> to vector<16xf32>
    %8 = vector.shape_cast %7 : vector<16xf32> to vector<1x16xf32>
    %9 = vector.shape_cast %8 : vector<1x16xf32> to vector<1x1x16xf32>
    %c0_8 = arith.constant 0 : index
    %c0_9 = arith.constant 0 : index
    %c0_10 = arith.constant 0 : index
    %10 = vector.load %arg5[%c0_8, %c0_9, %c0_10] : memref<1x1x16xf32, #tpu.memory_space<vmem>>, vector<1x1x16xf32>
    tpu.vector_store %arg5[%c0_8, %c0_9, %c0_10], %9 {strides = array<i32>} : memref<1x1x16xf32, #tpu.memory_space<vmem>>, vector<1x1x16xf32>,
    %11 = arith.mulf %2, %2 : vector<512x16xf32>
    %cst_11 = arith.constant dense<0.000000e+00> : vector<16xf32>
    %12 = vector.multi_reduction <add>, %11, %cst_11 [0] : vector<512x16xf32> to vector<16xf32>
    %13 = vector.shape_cast %12 : vector<16xf32> to vector<1x16xf32>
    %14 = vector.shape_cast %13 : vector<1x16xf32> to vector<1x1x16xf32>
    %c0_12 = arith.constant 0 : index
    %c0_13 = arith.constant 0 : index
    %c0_14 = arith.constant 0 : index
    %15 = vector.load %arg6[%c0_12, %c0_13, %c0_14] : memref<1x1x16xf32, #tpu.memory_space<vmem>>, vector<1x1x16xf32>
    tpu.vector_store %arg6[%c0_12, %c0_13, %c0_14], %14 {strides = array<i32>} : memref<1x1x16xf32, #tpu.memory_space<vmem>>, vector<1x1x16xf32>,
    return
  }
  func.func @transform_0(%arg0: i32) -> (i32, i32) {
    %c0_i32 = arith.constant 0 : i32
    %c0_i32_0 = arith.constant 0 : i32
    return %arg0, %c0_i32 : i32, i32
  }
  func.func @transform_1(%arg0: i32) -> (i32, i32) {
    %c0_i32 = arith.constant 0 : i32
    %c0_i32_0 = arith.constant 0 : i32
    %c0_i32_1 = arith.constant 0 : i32
    return %c0_i32, %c0_i32_0 : i32, i32
  }
  func.func @transform_2(%arg0: i32) -> (i32, i32) {
    %c0_i32 = arith.constant 0 : i32
    %c0_i32_0 = arith.constant 0 : i32
    %c0_i32_1 = arith.constant 0 : i32
    return %c0_i32, %c0_i32_0 : i32, i32
  }
  func.func @transform_3(%arg0: i32) -> (i32, i32) {
    %c0_i32 = arith.constant 0 : i32
    %c0_i32_0 = arith.constant 0 : i32
    return %arg0, %c0_i32 : i32, i32
  }
  func.func @transform_4(%arg0: i32) -> (i32, i32, i32) {
    %c0_i32 = arith.constant 0 : i32
    %c0_i32_0 = arith.constant 0 : i32
    %c0_i32_1 = arith.constant 0 : i32
    return %arg0, %c0_i32, %c0_i32_0 : i32, i32, i32
  }
  func.func @transform_5(%arg0: i32) -> (i32, i32, i32) {
    %c0_i32 = arith.constant 0 : i32
    %c0_i32_0 = arith.constant 0 : i32
    %c0_i32_1 = arith.constant 0 : i32
    return %arg0, %c0_i32, %c0_i32_0 : i32, i32, i32
  }
}

module attributes {stable_mosaic.version = 11 : i64} {
  func.func @_bn_relu_kernel(%arg0: i32, %arg1: memref<64x128xf32, #tpu.memory_space<vmem>>, %arg2: memref<1x128xf32, #tpu.memory_space<vmem>>, %arg3: memref<1x128xf32, #tpu.memory_space<vmem>>, %arg4: memref<64x128xf32, #tpu.memory_space<vmem>>) attributes {dimension_semantics = [#tpu.dimension_semantics<parallel>], iteration_bounds = array<i64: 2>, scalar_prefetch = 0 : i64, scratch_operands = 0 : i64, tpu.core_type = #tpu.core_type<tc>, window_params = [{transform_indices = @transform_0, window_bounds = array<i64: 64, 128>}, {pipeline_mode = #tpu.pipeline_mode<synchronous>, transform_indices = @transform_1, window_bounds = array<i64: 1, 128>}, {pipeline_mode = #tpu.pipeline_mode<synchronous>, transform_indices = @transform_2, window_bounds = array<i64: 1, 128>}, {transform_indices = @transform_3, window_bounds = array<i64: 64, 128>}]} {
    %c0 = arith.constant 0 : index
    %c0_0 = arith.constant 0 : index
    %0 = vector.load %arg1[%c0, %c0_0] : memref<64x128xf32, #tpu.memory_space<vmem>>, vector<64x128xf32>
    %c0_1 = arith.constant 0 : index
    %c0_2 = arith.constant 0 : index
    %1 = vector.load %arg2[%c0_1, %c0_2] : memref<1x128xf32, #tpu.memory_space<vmem>>, vector<1x128xf32>
    %2 = vector.broadcast %1 : vector<1x128xf32> to vector<64x128xf32>
    %3 = arith.mulf %0, %2 : vector<64x128xf32>
    %c0_3 = arith.constant 0 : index
    %c0_4 = arith.constant 0 : index
    %4 = vector.load %arg3[%c0_3, %c0_4] : memref<1x128xf32, #tpu.memory_space<vmem>>, vector<1x128xf32>
    %5 = vector.broadcast %4 : vector<1x128xf32> to vector<64x128xf32>
    %6 = arith.addf %3, %5 : vector<64x128xf32>
    %cst = arith.constant 0.000000e+00 : f32
    %7 = vector.broadcast %cst : f32 to vector<64x128xf32>
    %8 = arith.maximumf %6, %7 : vector<64x128xf32>
    %c0_5 = arith.constant 0 : index
    %c0_6 = arith.constant 0 : index
    %9 = vector.load %arg4[%c0_5, %c0_6] : memref<64x128xf32, #tpu.memory_space<vmem>>, vector<64x128xf32>
    tpu.vector_store %arg4[%c0_5, %c0_6], %8 {strides = array<i32>} : memref<64x128xf32, #tpu.memory_space<vmem>>, vector<64x128xf32>,
    return
  }
  func.func @transform_0(%arg0: i32) -> (i32, i32) {
    %c0_i32 = arith.constant 0 : i32
    %c0_i32_0 = arith.constant 0 : i32
    return %arg0, %c0_i32 : i32, i32
  }
  func.func @transform_1(%arg0: i32) -> (i32, i32) {
    %c0_i32 = arith.constant 0 : i32
    %c0_i32_0 = arith.constant 0 : i32
    %c0_i32_1 = arith.constant 0 : i32
    return %c0_i32, %c0_i32_0 : i32, i32
  }
  func.func @transform_2(%arg0: i32) -> (i32, i32) {
    %c0_i32 = arith.constant 0 : i32
    %c0_i32_0 = arith.constant 0 : i32
    %c0_i32_1 = arith.constant 0 : i32
    return %c0_i32, %c0_i32_0 : i32, i32
  }
  func.func @transform_3(%arg0: i32) -> (i32, i32) {
    %c0_i32 = arith.constant 0 : i32
    %c0_i32_0 = arith.constant 0 : i32
    return %arg0, %c0_i32 : i32, i32
  }
}

</mosaic_0001>

<llo_original>
// kernel: down_forward.5
$region0: #{down_forward.5}
  #allocation0 [shape = 'u32[]', space=smem, size = 0x4, offset = 0x4, fixed_abs, tag = 'smem constant byte address 0x4 - core index']
  #allocation1 [shape = 'u32[72,128]{1,0:T(1,128)}', space=vmem, size = 0x9000, scoped, tag = 'internal scratch']
  %s0 = inlined_call_operand.vmem [shape: bf16[8,4096], index: 0, kind: input, shape index: {}]
  %s1 = inlined_call_operand.vmem [shape: bf16[1,4096], index: 1, kind: output, shape index: {}]
  %s2 = sld [smem:[#allocation0]]
  $region37: #{down_forward.5} parent=0
    _
  %s4 = ssub.s32 1, %s2
  %s5 = scalar_select 0, %s4, %s2
  loop: start=0, step=1, limit=4
  $region2: #{down_forward.5} parent=0 // loop_pre_header
    _
  $region3: #{down_forward.5} parent=0 // loop_header
    %s7 = sphi 0, %s11
    %p8 = scmp.ge.s32.totalorder %s7, 4
    %s17 = sphi 0, %s19
    %s20 = sphi 0, %s17
    %s21 = sphi 0, %s20
    %s37 = sphi 0, %s21
    %s43 = sphi 0, %s45
    %s46 = sphi 0, %s43
    %s47 = sphi 0, %s46
    %s63 = sphi 0, %s47
  $region4: #{down_forward.5} parent=0 // loop_header_branch
    %10 = sbr.rel (%p8) target = $region8
  $region5: #{down_forward.5} parent=0 // loop_body
    %s12 = ssub.s32 %s7, 1
    %s13 = ssub.s32 %s7, 2
    %s14 = sadd.s32 %s7, 1
    %s15 = ssub.s32 %s7, %s14
    %p16 = scmp.eq.s32.totalorder %s15, 0
    %s18 = sadd.s32 %s17, 1
    %s19 = scalar_select %p16, %s17, %s18
    %p22 = pneg %p16
    %p23 = scmp.eq.s32.totalorder %s7, 1
    %p24 = por %p22, %p23
    %p25 = scmp.ne.s32.totalorder %s17, %s20
    %p26 = scmp.eq.s32.totalorder %s7, 0
    %p27 = por %p25, %p26
    %p28 = scmp.ne.s32.totalorder %s17, %s20
    %p29 = scmp.eq.s32.totalorder %s12, 1
    %p30 = por %p28, %p29
    %p31 = scmp.ne.s32.totalorder %s20, %s21
    %p32 = scmp.eq.s32.totalorder %s12, 0
    %p33 = por %p31, %p32
    %p34 = scmp.ne.s32.totalorder %s20, %s21
    %p35 = scmp.eq.s32.totalorder %s13, 1
    %p36 = por %p34, %p35
    %p38 = scmp.ne.s32.totalorder %s21, %s37
    %p39 = scmp.eq.s32.totalorder %s13, 0
    %p40 = por %p38, %p39
    %s41 = ssub.s32 %s7, %s14
    %p42 = scmp.eq.s32.totalorder %s41, 0
    %s44 = sadd.s32 %s43, 1
    %s45 = scalar_select %p42, %s43, %s44
    %p48 = pneg %p42
    %p49 = scmp.eq.s32.totalorder %s7, 1
    %p50 = por %p48, %p49
    %p51 = scmp.ne.s32.totalorder %s43, %s46
    %p52 = scmp.eq.s32.totalorder %s7, 0
    %p53 = por %p51, %p52
    %p54 = scmp.ne.s32.totalorder %s43, %s46
    %p55 = scmp.eq.s32.totalorder %s12, 1
    %p56 = por %p54, %p55
    %p57 = scmp.ne.s32.totalorder %s46, %s47
    %p58 = scmp.eq.s32.totalorder %s12, 0
    %p59 = por %p57, %p58
    %p60 = scmp.ne.s32.totalorder %s46, %s47
    %p61 = scmp.eq.s32.totalorder %s13, 1
    %p62 = por %p60, %p61
    %p64 = scmp.ne.s32.totalorder %s47, %s63
    %p65 = scmp.eq.s32.totalorder %s13, 0
    %p66 = por %p64, %p65
    %p67 = scmp.le.s32.totalorder 1, %s7
    %p68 = scmp.lt.s32.totalorder %s7, 3
    %p69 = pnand %p67, %p68
    %p70 = pneg %p69
    // Predicated region
    $region9: #{down_forward.5} parent=5 // pred_check
      _
    $region10: #{down_forward.5} parent=5 // pred_check_branch
      %72 = sbr.rel (%p69) target = $region12
    $region11: #{down_forward.5} parent=5 // pred_region
      %s73 = ssub.s32 %s7, 1
    $region12: #{down_forward.5} parent=5 // pred_fallthru
      _
    %p74 = scmp.lt.s32.totalorder %s7, 2
    // Predicated region
    $region13: #{down_forward.5} parent=5 // pred_check
      %p75 = pneg %p74
    $region14: #{down_forward.5} parent=5 // pred_check_branch
      %77 = sbr.rel (%p75) target = $region16
    $region15: #{down_forward.5} parent=5 // pred_region
      // Predicated region
      $region17: #{down_forward.5} parent=15 // pred_check
        %p78 = pneg %p27
      $region18: #{down_forward.5} parent=15 // pred_check_branch
        %80 = sbr.rel (%p78) target = $region20
      $region19: #{down_forward.5} parent=15 // pred_region
        %s81 = smul.u32 16, %s7
        %p82 = scmp.lt.s32.totalorder %s81, 31
        %s83 = scalar_select %p82, %s81, 31
        %s84 = smul.addr %s83, 4
        %s85 = scalar_lea.vmem %s0, %s84
        %s86 = smul.u32 16, %s7
      $region20: #{down_forward.5} parent=15 // pred_fallthru
        _
    $region16: #{down_forward.5} parent=5 // pred_fallthru
      _
    %p87 = scmp.le.s32.totalorder 1, %s7
    %p88 = scmp.lt.s32.totalorder %s7, 3
    %p89 = pnand %p87, %p88
    %p90 = pneg %p89
    // Predicated region
    $region21: #{down_forward.5} parent=5 // pred_check
      _
    $region22: #{down_forward.5} parent=5 // pred_check_branch
      %92 = sbr.rel (%p89) target = $region24
    $region23: #{down_forward.5} parent=5 // pred_region
      %s93 = ssub.s32 %s7, 1
      %s94 = smul.u32 16, %s12
      %p95 = scmp.lt.s32.totalorder %s94, 31
      %s96 = scalar_select %p95, %s94, 31
      %s97 = smul.addr %s96, 4
      %s98 = scalar_lea.vmem %s0, %s97
      %p99 = pneg %p33
      %p100 = pneg %p30
      %p101 = pneg %p59
      %p102 = pneg %p56
      %s103 = smul.u32 16, %s12
      %p104 = scmp.lt.s32.totalorder %s103, 31
      %s105 = scalar_select %p104, %s103, 31
      %s106 = scalar_lea.vmem %s1, %s105
      %s107 = smul.u32 16, %s12
      %p108 = scmp.lt.s32.totalorder %s107, 31
      %s109 = scalar_select %p108, %s107, 31
      %s110 = smul.addr %s109, 4
      %s111 = scalar_lea.vmem %s0, %s110
      %s112 = smul.u32 16, %s12
      %s113 = smul.u32 16, %s12
      %p114 = scmp.lt.s32.totalorder %s113, 31
      %s115 = scalar_select %p114, %s113, 31
      %s116 = scalar_lea.vmem %s1, %s115
      %s117 = smul.u32 16, %s12
      %v118 = vld [vmem:[%s111] sm:$0xff]
      %v119 = vld [vmem:[%s111 + $0x8] sm:$0xff]
      %v120 = vld [vmem:[%s111 + $0x10] sm:$0xff]
      %v121 = vld [vmem:[%s111 + $0x18] sm:$0xff]
      %v122 = vld [vmem:[%s111 + $0x20] sm:$0xff]
      %v123 = vld [vmem:[%s111 + $0x28] sm:$0xff]
      %v124 = vld [vmem:[%s111 + $0x30] sm:$0xff]
      %v125 = vld [vmem:[%s111 + $0x38] sm:$0xff]
      %v126 = vunpack.c.l.bf16 %v118
      %v127 = vunpack.c.h.bf16 %v118
      %v128 = vunpack.c.l.bf16 %v119
      %v129 = vunpack.c.h.bf16 %v119
      %v130 = vunpack.c.l.bf16 %v120
      %v131 = vunpack.c.h.bf16 %v120
      %v132 = vunpack.c.l.bf16 %v121
      %v133 = vunpack.c.h.bf16 %v121
      %v134 = vunpack.c.l.bf16 %v122
      %v135 = vunpack.c.h.bf16 %v122
      %v136 = vunpack.c.l.bf16 %v123
      %v137 = vunpack.c.h.bf16 %v123
      %v138 = vunpack.c.l.bf16 %v124
      %v139 = vunpack.c.h.bf16 %v124
      %v140 = vunpack.c.l.bf16 %v125
      %v141 = vunpack.c.h.bf16 %v125
      %v142 = vrot.slane %v126, 4
      %v143 = vmax.f32 %v126, %v142
      %v144 = vrot.slane %v143, 2
      %v145 = vmax.f32 %v143, %v144
      %v146 = vrot.slane %v145, 1
      %v147 = vmax.f32 %v145, %v146
      %v148 = vrot.slane %v127, 4
      %v149 = vmax.f32 %v127, %v148
      %v150 = vrot.slane %v149, 2
      %v151 = vmax.f32 %v149, %v150
      %v152 = vrot.slane %v151, 1
      %v153 = vmax.f32 %v151, %v152
      %v154 = vrot.slane %v128, 4
      %v155 = vmax.f32 %v128, %v154
      %v156 = vrot.slane %v155, 2
      %v157 = vmax.f32 %v155, %v156
      %v158 = vrot.slane %v157, 1
      %v159 = vmax.f32 %v157, %v158
      %v160 = vrot.slane %v129, 4
      %v161 = vmax.f32 %v129, %v160
      %v162 = vrot.slane %v161, 2
      %v163 = vmax.f32 %v161, %v162
      %v164 = vrot.slane %v163, 1
      %v165 = vmax.f32 %v163, %v164
      %v166 = vrot.slane %v130, 4
      %v167 = vmax.f32 %v130, %v166
      %v168 = vrot.slane %v167, 2
      %v169 = vmax.f32 %v167, %v168
      %v170 = vrot.slane %v169, 1
      %v171 = vmax.f32 %v169, %v170
      %v172 = vrot.slane %v131, 4
      %v173 = vmax.f32 %v131, %v172
      %v174 = vrot.slane %v173, 2
      %v175 = vmax.f32 %v173, %v174
      %v176 = vrot.slane %v175, 1
      %v177 = vmax.f32 %v175, %v176
      %v178 = vrot.slane %v132, 4
      %v179 = vmax.f32 %v132, %v178
      %v180 = vrot.slane %v179, 2
      %v181 = vmax.f32 %v179, %v180
      %v182 = vrot.slane %v181, 1
      %v183 = vmax.f32 %v181, %v182
      %v184 = vrot.slane %v133, 4
      %v185 = vmax.f32 %v133, %v184
      %v186 = vrot.slane %v185, 2
      %v187 = vmax.f32 %v185, %v186
      %v188 = vrot.slane %v187, 1
      %v189 = vmax.f32 %v187, %v188
      %v190 = vrot.slane %v134, 4
      %v191 = vmax.f32 %v134, %v190
      %v192 = vrot.slane %v191, 2
      %v193 = vmax.f32 %v191, %v192
      %v194 = vrot.slane %v193, 1
      %v195 = vmax.f32 %v193, %v194
      %v196 = vrot.slane %v135, 4
      %v197 = vmax.f32 %v135, %v196
      %v198 = vrot.slane %v197, 2
      %v199 = vmax.f32 %v197, %v198
      %v200 = vrot.slane %v199, 1
      %v201 = vmax.f32 %v199, %v200
      %v202 = vrot.slane %v136, 4
      %v203 = vmax.f32 %v136, %v202
      %v204 = vrot.slane %v203, 2
      %v205 = vmax.f32 %v203, %v204
      %v206 = vrot.slane %v205, 1
      %v207 = vmax.f32 %v205, %v206
      %v208 = vrot.slane %v137, 4
      %v209 = vmax.f32 %v137, %v208
      %v210 = vrot.slane %v209, 2
      %v211 = vmax.f32 %v209, %v210
      %v212 = vrot.slane %v211, 1
      %v213 = vmax.f32 %v211, %v212
      %v214 = vrot.slane %v138, 4
      %v215 = vmax.f32 %v138, %v214
      %v216 = vrot.slane %v215, 2
      %v217 = vmax.f32 %v215, %v216
      %v218 = vrot.slane %v217, 1
      %v219 = vmax.f32 %v217, %v218
      %v220 = vrot.slane %v139, 4
      %v221 = vmax.f32 %v139, %v220
      %v222 = vrot.slane %v221, 2
      %v223 = vmax.f32 %v221, %v222
      %v224 = vrot.slane %v223, 1
      %v225 = vmax.f32 %v223, %v224
      %v226 = vrot.slane %v140, 4
      %v227 = vmax.f32 %v140, %v226
      %v228 = vrot.slane %v227, 2
      %v229 = vmax.f32 %v227, %v228
      %v230 = vrot.slane %v229, 1
      %v231 = vmax.f32 %v229, %v230
      %v232 = vrot.slane %v141, 4
      %v233 = vmax.f32 %v141, %v232
      %v234 = vrot.slane %v233, 2
      %v235 = vmax.f32 %v233, %v234
      %v236 = vrot.slane %v235, 1
      %v237 = vmax.f32 %v235, %v236
      %v238 = vpack.c.bf16 %v153, %v147
      %v239 = vpack.c.bf16 %v165, %v159
      %v240 = vpack.c.bf16 %v177, %v171
      %v241 = vpack.c.bf16 %v189, %v183
      %v242 = vpack.c.bf16 %v201, %v195
      %v243 = vpack.c.bf16 %v213, %v207
      %v244 = vpack.c.bf16 %v225, %v219
      %v245 = vpack.c.bf16 %v237, %v231
      %v254 = vrot.slane %v238, 3
      %v255 = vrot.slane %v239, 6
      %v256 = vrot.slane %v239, 1
      %v257 = vrot.slane %v240, 4
      %v258 = vrot.slane %v240, 7
      %v259 = vrot.slane %v241, 2
      %v260 = vrot.slane %v241, 5
      %v261 = vrot.slane %v242, 3
      %v262 = vrot.slane %v243, 6
      %v263 = vrot.slane %v243, 1
      %v264 = vrot.slane %v244, 4
      %v265 = vrot.slane %v244, 7
      %v266 = vrot.slane %v245, 2
      %v267 = vrot.slane %v245, 5
      %vm268 = vcmask 1040384
      %v271 = vsel %vm268, %v238, %v254
      %vm272 = vcmask 1042434
      %v275 = vsel %vm272, %v255, %v256
      %vm276 = vcmask 1041408
      %v277 = vsel %vm276, %v271, %v275
      %vm278 = vcmask 1044484
      %v281 = vsel %vm278, %v257, %v258
      %vm282 = vcmask 1046534
      %v285 = vsel %vm282, %v259, %v260
      %vm286 = vcmask 1045508
      %v287 = vsel %vm286, %v281, %v285
      %vm288 = vcmask 1043456
      %v289 = vsel %vm288, %v277, %v287
      %v292 = vsel %vm268, %v242, %v261
      %v295 = vsel %vm272, %v262, %v263
      %v296 = vsel %vm276, %v292, %v295
      %v299 = vsel %vm278, %v264, %v265
      %v302 = vsel %vm282, %v266, %v267
      %v303 = vsel %vm286, %v299, %v302
      %v304 = vsel %vm288, %v296, %v303
      %vm307 = vcmask 1040384
      %vm308 = vsmask.f32 256
      %vm309 = vmand %vm307, %vm308
      %vm310 = vcmask 1041409
      %vm311 = vsmask.f32 1280
      %vm312 = vmand %vm310, %vm311
      %vm313 = vmor %vm312, %vm309
      %vm314 = vcmask 1042434
      %vm315 = vsmask.f32 2304
      %vm316 = vmand %vm314, %vm315
      %vm317 = vmor %vm316, %vm313
      %vm318 = vcmask 1043459
      %vm319 = vsmask.f32 3328
      %vm320 = vmand %vm318, %vm319
      %vm321 = vmor %vm320, %vm317
      %vm322 = vcmask 1044484
      %vm323 = vsmask.f32 4352
      %vm324 = vmand %vm322, %vm323
      %vm325 = vmor %vm324, %vm321
      %vm326 = vcmask 1045509
      %vm327 = vsmask.f32 5376
      %vm328 = vmand %vm326, %vm327
      %vm329 = vmor %vm328, %vm325
      %vm330 = vcmask 1046534
      %vm331 = vsmask.f32 6400
      %vm332 = vmand %vm330, %vm331
      %vm333 = vmor %vm332, %vm329
      %vm334 = vcmask 1047559
      %vm335 = vsmask.f32 7424
      %vm336 = vmand %vm334, %vm335
      %vm337 = vmor %vm336, %vm333
      %v338 = vld [vmem:[%s116] sm:$0xff]
      %v339 = vsel %vm337, %v289, %v338
      %340 = vst [vmem:[%s116] sm:$0xff] %v339
      %v341 = vld [vmem:[%s116 + $0x8] sm:$0xff]
      %v342 = vsel %vm337, %v304, %v341
      %343 = vst [vmem:[%s116 + $0x8] sm:$0xff] %v342
      %s344 = smul.u32 16, %s12
      %p345 = scmp.lt.s32.totalorder %s344, 31
      %s346 = scalar_select %p345, %s344, 31
      %s347 = scalar_lea.vmem %s1, %s346
      // Predicated region
      $region25: #{down_forward.5} parent=23 // pred_check
        %p348 = pneg %p56
      $region26: #{down_forward.5} parent=23 // pred_check_branch
        %350 = sbr.rel (%p348) target = $region28
      $region27: #{down_forward.5} parent=23 // pred_region
        %s351 = smul.u32 16, %s12
      $region28: #{down_forward.5} parent=23 // pred_fallthru
        _
    $region24: #{down_forward.5} parent=5 // pred_fallthru
      _
    %p352 = scmp.le.s32.totalorder 2, %s7
    // Predicated region
    $region29: #{down_forward.5} parent=5 // pred_check
      %p353 = pneg %p352
    $region30: #{down_forward.5} parent=5 // pred_check_branch
      %355 = sbr.rel (%p353) target = $region32
    $region31: #{down_forward.5} parent=5 // pred_region
      %s356 = ssub.s32 %s7, 2
      // Predicated region
      $region33: #{down_forward.5} parent=31 // pred_check
        %p357 = pneg %p62
      $region34: #{down_forward.5} parent=31 // pred_check_branch
        %359 = sbr.rel (%p357) target = $region36
      $region35: #{down_forward.5} parent=31 // pred_region
        %s360 = smul.u32 16, %s13
        %p361 = scmp.lt.s32.totalorder %s360, 31
        %s362 = scalar_select %p361, %s360, 31
        %s363 = scalar_lea.vmem %s1, %s362
      $region36: #{down_forward.5} parent=31 // pred_fallthru
        _
    $region32: #{down_forward.5} parent=5 // pred_fallthru
      _
  $region6: #{down_forward.5} parent=0 // loop_footer
    %s11 = sadd.s32 1, %s7
  $region7: #{down_forward.5} parent=0 // loop_footer_branch
    %6 = sbr.rel target = $region3
  $region8: #{down_forward.5} parent=0 // loop_exit
    _

// kernel: down_forward.6
$region0: #{down_forward.6}
  #allocation0 [shape = 'u32[]', space=smem, size = 0x4, offset = 0x4, fixed_abs, tag = 'smem constant byte address 0x4 - core index']
  #allocation1 [shape = 'u32[72,128]{1,0:T(1,128)}', space=vmem, size = 0x9000, scoped, tag = 'internal scratch']
  %s0 = inlined_call_operand.vmem [shape: bf16[1024,108], index: 0, kind: input, shape index: {}]
  %s1 = inlined_call_operand.vmem [shape: bf16[108,16], index: 1, kind: input, shape index: {}]
  %s2 = inlined_call_operand.vmem [shape: f32[1,16], index: 2, kind: input, shape index: {}]
  %s3 = inlined_call_operand.vmem [shape: f32[1024,16], index: 3, kind: output, shape index: {0}]
  %s4 = inlined_call_operand.vmem [shape: f32[2,1,16], index: 4, kind: output, shape index: {1}]
  %s5 = inlined_call_operand.vmem [shape: f32[2,1,16], index: 5, kind: output, shape index: {2}]
  %6 = xla_tuple %s3, %s4, %s5
  %s7 = sld [smem:[#allocation0]]
  $region61: #{down_forward.6} parent=0
    _
  %s9 = ssub.s32 1, %s7
  %s10 = scalar_select 0, %s9, %s7
  loop: start=0, step=1, limit=4
  $region2: #{down_forward.6} parent=0 // loop_pre_header
    _
  $region3: #{down_forward.6} parent=0 // loop_header
    %s12 = sphi 0, %s16
    %p13 = scmp.ge.s32.totalorder %s12, 4
    %s22 = sphi 0, %s24
    %s25 = sphi 0, %s22
    %s26 = sphi 0, %s25
    %s42 = sphi 0, %s26
    %s46 = sphi 0, %s46
    %s48 = sphi 0, %s46
    %s49 = sphi 0, %s48
    %s63 = sphi 0, %s49
    %s67 = sphi 0, %s67
    %s69 = sphi 0, %s67
    %s70 = sphi 0, %s69
    %s84 = sphi 0, %s70
    %s90 = sphi 0, %s92
    %s93 = sphi 0, %s90
    %s94 = sphi 0, %s93
    %s110 = sphi 0, %s94
    %s116 = sphi 0, %s118
    %s119 = sphi 0, %s116
    %s120 = sphi 0, %s119
    %s136 = sphi 0, %s120
    %s142 = sphi 0, %s144
    %s145 = sphi 0, %s142
    %s146 = sphi 0, %s145
    %s162 = sphi 0, %s146
  $region4: #{down_forward.6} parent=0 // loop_header_branch
    %15 = sbr.rel (%p13) target = $region8
  $region5: #{down_forward.6} parent=0 // loop_body
    %s17 = ssub.s32 %s12, 1
    %s18 = ssub.s32 %s12, 2
    %s19 = sadd.s32 %s12, 1
    %s20 = ssub.s32 %s12, %s19
    %p21 = scmp.eq.s32.totalorder %s20, 0
    %s23 = sadd.s32 %s22, 1
    %s24 = scalar_select %p21, %s22, %s23
    %p27 = pneg %p21
    %p28 = scmp.eq.s32.totalorder %s12, 1
    %p29 = por %p27, %p28
    %p30 = scmp.ne.s32.totalorder %s22, %s25
    %p31 = scmp.eq.s32.totalorder %s12, 0
    %p32 = por %p30, %p31
    %p33 = scmp.ne.s32.totalorder %s22, %s25
    %p34 = scmp.eq.s32.totalorder %s17, 1
    %p35 = por %p33, %p34
    %p36 = scmp.ne.s32.totalorder %s25, %s26
    %p37 = scmp.eq.s32.totalorder %s17, 0
    %p38 = por %p36, %p37
    %p39 = scmp.ne.s32.totalorder %s25, %s26
    %p40 = scmp.eq.s32.totalorder %s18, 1
    %p41 = por %p39, %p40
    %p43 = scmp.ne.s32.totalorder %s26, %s42
    %p44 = scmp.eq.s32.totalorder %s18, 0
    %p45 = por %p43, %p44
    %s47 = sadd.s32 %s46, 1
    %p50 = scmp.eq.s32.totalorder %s12, 1
    %p51 = scmp.ne.s32.totalorder %s46, %s48
    %p52 = scmp.eq.s32.totalorder %s12, 0
    %p53 = por %p51, %p52
    %p54 = scmp.ne.s32.totalorder %s46, %s48
    %p55 = scmp.eq.s32.totalorder %s17, 1
    %p56 = por %p54, %p55
    %p57 = scmp.ne.s32.totalorder %s48, %s49
    %p58 = scmp.eq.s32.totalorder %s17, 0
    %p59 = por %p57, %p58
    %p60 = scmp.ne.s32.totalorder %s48, %s49
    %p61 = scmp.eq.s32.totalorder %s18, 1
    %p62 = por %p60, %p61
    %p64 = scmp.ne.s32.totalorder %s49, %s63
    %p65 = scmp.eq.s32.totalorder %s18, 0
    %p66 = por %p64, %p65
    %s68 = sadd.s32 %s67, 1
    %p71 = scmp.eq.s32.totalorder %s12, 1
    %p72 = scmp.ne.s32.totalorder %s67, %s69
    %p73 = scmp.eq.s32.totalorder %s12, 0
    %p74 = por %p72, %p73
    %p75 = scmp.ne.s32.totalorder %s67, %s69
    %p76 = scmp.eq.s32.totalorder %s17, 1
    %p77 = por %p75, %p76
    %p78 = scmp.ne.s32.totalorder %s69, %s70
    %p79 = scmp.eq.s32.totalorder %s17, 0
    %p80 = por %p78, %p79
    %p81 = scmp.ne.s32.totalorder %s69, %s70
    %p82 = scmp.eq.s32.totalorder %s18, 1
    %p83 = por %p81, %p82
    %p85 = scmp.ne.s32.totalorder %s70, %s84
    %p86 = scmp.eq.s32.totalorder %s18, 0
    %p87 = por %p85, %p86
    %s88 = ssub.s32 %s12, %s19
    %p89 = scmp.eq.s32.totalorder %s88, 0
    %s91 = sadd.s32 %s90, 1
    %s92 = scalar_select %p89, %s90, %s91
    %p95 = pneg %p89
    %p96 = scmp.eq.s32.totalorder %s12, 1
    %p97 = por %p95, %p96
    %p98 = scmp.ne.s32.totalorder %s90, %s93
    %p99 = scmp.eq.s32.totalorder %s12, 0
    %p100 = por %p98, %p99
    %p101 = scmp.ne.s32.totalorder %s90, %s93
    %p102 = scmp.eq.s32.totalorder %s17, 1
    %p103 = por %p101, %p102
    %p104 = scmp.ne.s32.totalorder %s93, %s94
    %p105 = scmp.eq.s32.totalorder %s17, 0
    %p106 = por %p104, %p105
    %p107 = scmp.ne.s32.totalorder %s93, %s94
    %p108 = scmp.eq.s32.totalorder %s18, 1
    %p109 = por %p107, %p108
    %p111 = scmp.ne.s32.totalorder %s94, %s110
    %p112 = scmp.eq.s32.totalorder %s18, 0
    %p113 = por %p111, %p112
    %s114 = ssub.s32 %s12, %s19
    %p115 = scmp.eq.s32.totalorder %s114, 0
    %s117 = sadd.s32 %s116, 1
    %s118 = scalar_select %p115, %s116, %s117
    %p121 = pneg %p115
    %p122 = scmp.eq.s32.totalorder %s12, 1
    %p123 = por %p121, %p122
    %p124 = scmp.ne.s32.totalorder %s116, %s119
    %p125 = scmp.eq.s32.totalorder %s12, 0
    %p126 = por %p124, %p125
    %p127 = scmp.ne.s32.totalorder %s116, %s119
    %p128 = scmp.eq.s32.totalorder %s17, 1
    %p129 = por %p127, %p128
    %p130 = scmp.ne.s32.totalorder %s119, %s120
    %p131 = scmp.eq.s32.totalorder %s17, 0
    %p132 = por %p130, %p131
    %p133 = scmp.ne.s32.totalorder %s119, %s120
    %p134 = scmp.eq.s32.totalorder %s18, 1
    %p135 = por %p133, %p134
    %p137 = scmp.ne.s32.totalorder %s120, %s136
    %p138 = scmp.eq.s32.totalorder %s18, 0
    %p139 = por %p137, %p138
    %s140 = ssub.s32 %s12, %s19
    %p141 = scmp.eq.s32.totalorder %s140, 0
    %s143 = sadd.s32 %s142, 1
    %s144 = scalar_select %p141, %s142, %s143
    %p147 = pneg %p141
    %p148 = scmp.eq.s32.totalorder %s12, 1
    %p149 = por %p147, %p148
    %p150 = scmp.ne.s32.totalorder %s142, %s145
    %p151 = scmp.eq.s32.totalorder %s12, 0
    %p152 = por %p150, %p151
    %p153 = scmp.ne.s32.totalorder %s142, %s145
    %p154 = scmp.eq.s32.totalorder %s17, 1
    %p155 = por %p153, %p154
    %p156 = scmp.ne.s32.totalorder %s145, %s146
    %p157 = scmp.eq.s32.totalorder %s17, 0
    %p158 = por %p156, %p157
    %p159 = scmp.ne.s32.totalorder %s145, %s146
    %p160 = scmp.eq.s32.totalorder %s18, 1
    %p161 = por %p159, %p160
    %p163 = scmp.ne.s32.totalorder %s146, %s162
    %p164 = scmp.eq.s32.totalorder %s18, 0
    %p165 = por %p163, %p164
    %p166 = scmp.le.s32.totalorder 1, %s12
    %p167 = scmp.lt.s32.totalorder %s12, 3
    %p168 = pnand %p166, %p167
    %p169 = pneg %p168
    // Predicated region
    $region9: #{down_forward.6} parent=5 // pred_check
      _
    $region10: #{down_forward.6} parent=5 // pred_check_branch
      %171 = sbr.rel (%p168) target = $region12
    $region11: #{down_forward.6} parent=5 // pred_region
      %s172 = ssub.s32 %s12, 1
      // Predicated region
      $region13: #{down_forward.6} parent=11 // pred_check
        %p173 = pneg %p59
      $region14: #{down_forward.6} parent=11 // pred_check_branch
        %175 = sbr.rel (%p173) target = $region16
      $region15: #{down_forward.6} parent=11 // pred_region
        _
      $region16: #{down_forward.6} parent=11 // pred_fallthru
        _
      // Predicated region
      $region17: #{down_forward.6} parent=11 // pred_check
        %p176 = pneg %p80
      $region18: #{down_forward.6} parent=11 // pred_check_branch
        %178 = sbr.rel (%p176) target = $region20
      $region19: #{down_forward.6} parent=11 // pred_region
        _
      $region20: #{down_forward.6} parent=11 // pred_fallthru
        _
    $region12: #{down_forward.6} parent=5 // pred_fallthru
      _
    %p179 = scmp.lt.s32.totalorder %s12, 2
    // Predicated region
    $region21: #{down_forward.6} parent=5 // pred_check
      %p180 = pneg %p179
    $region22: #{down_forward.6} parent=5 // pred_check_branch
      %182 = sbr.rel (%p180) target = $region24
    $region23: #{down_forward.6} parent=5 // pred_region
      // Predicated region
      $region25: #{down_forward.6} parent=23 // pred_check
        %p183 = pneg %p32
      $region26: #{down_forward.6} parent=23 // pred_check_branch
        %185 = sbr.rel (%p183) target = $region28
      $region27: #{down_forward.6} parent=23 // pred_region
        %s186 = smul.u32 64, %s12
        %p187 = scmp.lt.s32.totalorder %s186, 127
        %s188 = scalar_select %p187, %s186, 127
        %s189 = smul.addr %s188, 4
        %s190 = scalar_lea.vmem %s0, %s189
        %s191 = smul.u32 64, %s12
      $region28: #{down_forward.6} parent=23 // pred_fallthru
        _
    $region24: #{down_forward.6} parent=5 // pred_fallthru
      _
    %p192 = scmp.le.s32.totalorder 1, %s12
    %p193 = scmp.lt.s32.totalorder %s12, 3
    %p194 = pnand %p192, %p193
    %p195 = pneg %p194
    // Predicated region
    $region29: #{down_forward.6} parent=5 // pred_check
      _
    $region30: #{down_forward.6} parent=5 // pred_check_branch
      %197 = sbr.rel (%p194) target = $region32
    $region31: #{down_forward.6} parent=5 // pred_region
      %s198 = ssub.s32 %s12, 1
      %s199 = smul.u32 64, %s17
      %p200 = scmp.lt.s32.totalorder %s199, 127
      %s201 = scalar_select %p200, %s199, 127
      %s202 = smul.addr %s201, 4
      %s203 = scalar_lea.vmem %s0, %s202
      %p204 = pneg %p38
      %p205 = pneg %p35
      %p206 = pneg %p59
      %p207 = pneg %p56
      %p208 = pneg %p80
      %p209 = pneg %p77
      %p210 = pneg %p106
      %p211 = pneg %p103
      %s212 = smul.u32 64, %s17
      %p213 = scmp.lt.s32.totalorder %s212, 127
      %s214 = scalar_select %p213, %s212, 127
      %s215 = smul.addr %s214, 8
      %s216 = scalar_lea.vmem %s3, %s215
      %p217 = pneg %p132
      %p218 = pneg %p129
      %p219 = scmp.lt.s32.totalorder %s17, 1
      %s220 = scalar_select %p219, %s17, 1
      %s221 = scalar_lea.vmem %s4, %s220
      %p222 = pneg %p158
      %p223 = pneg %p155
      %p224 = scmp.lt.s32.totalorder %s17, 1
      %s225 = scalar_select %p224, %s17, 1
      %s226 = scalar_lea.vmem %s5, %s225
      %s227 = smul.u32 64, %s17
      %p228 = scmp.lt.s32.totalorder %s227, 127
      %s229 = scalar_select %p228, %s227, 127
      %s230 = smul.addr %s229, 4
      %s231 = scalar_lea.vmem %s0, %s230
      %s232 = smul.u32 64, %s17
      %s233 = smul.u32 64, %s17
      %p234 = scmp.lt.s32.totalorder %s233, 127
      %s235 = scalar_select %p234, %s233, 127
      %s236 = smul.addr %s235, 8
      %s237 = scalar_lea.vmem %s3, %s236
      %s238 = smul.u32 64, %s17
      %p239 = scmp.lt.s32.totalorder %s17, 1
      %s240 = scalar_select %p239, %s17, 1
      %s241 = scalar_lea.vmem %s4, %s240
      %p242 = scmp.lt.s32.totalorder %s17, 1
      %s243 = scalar_select %p242, %s17, 1
      %s244 = scalar_lea.vmem %s5, %s243
      %v246 = vld [vmem:[%s231] sm:$0xf]
      %v247 = vld [vmem:[%s231 + $0x4] sm:$0xf]
      %v248 = vld [vmem:[%s231 + $0x8] sm:$0xf]
      %v249 = vld [vmem:[%s231 + $0xc] sm:$0xf]
      %v250 = vld [vmem:[%s231 + $0x10] sm:$0xf]
      %v251 = vld [vmem:[%s231 + $0x14] sm:$0xf]
      %v252 = vld [vmem:[%s231 + $0x18] sm:$0xf]
      %v253 = vld [vmem:[%s231 + $0x1c] sm:$0xf]
      %v254 = vld [vmem:[%s231 + $0x20] sm:$0xf]
      %v255 = vld [vmem:[%s231 + $0x24] sm:$0xf]
      %v256 = vld [vmem:[%s231 + $0x28] sm:$0xf]
      %v257 = vld [vmem:[%s231 + $0x2c] sm:$0xf]
      %v258 = vld [vmem:[%s231 + $0x30] sm:$0xf]
      %v259 = vld [vmem:[%s231 + $0x34] sm:$0xf]
      %v260 = vld [vmem:[%s231 + $0x38] sm:$0xf]
      %v261 = vld [vmem:[%s231 + $0x3c] sm:$0xf]
      %v262 = vld [vmem:[%s231 + $0x40] sm:$0xf]
      %v263 = vld [vmem:[%s231 + $0x44] sm:$0xf]
      %v264 = vld [vmem:[%s231 + $0x48] sm:$0xf]
      %v265 = vld [vmem:[%s231 + $0x4c] sm:$0xf]
      %v266 = vld [vmem:[%s231 + $0x50] sm:$0xf]
      %v267 = vld [vmem:[%s231 + $0x54] sm:$0xf]
      %v268 = vld [vmem:[%s231 + $0x58] sm:$0xf]
      %v269 = vld [vmem:[%s231 + $0x5c] sm:$0xf]
      %v270 = vld [vmem:[%s231 + $0x60] sm:$0xf]
      %v271 = vld [vmem:[%s231 + $0x64] sm:$0xf]
      %v272 = vld [vmem:[%s231 + $0x68] sm:$0xf]
      %v273 = vld [vmem:[%s231 + $0x6c] sm:$0xf]
      %v274 = vld [vmem:[%s231 + $0x70] sm:$0xf]
      %v275 = vld [vmem:[%s231 + $0x74] sm:$0xf]
      %v276 = vld [vmem:[%s231 + $0x78] sm:$0xf]
      %v277 = vld [vmem:[%s231 + $0x7c] sm:$0xf]
      %v278 = vld [vmem:[%s231 + $0x80] sm:$0xf]
      %v279 = vld [vmem:[%s231 + $0x84] sm:$0xf]
      %v280 = vld [vmem:[%s231 + $0x88] sm:$0xf]
      %v281 = vld [vmem:[%s231 + $0x8c] sm:$0xf]
      %v282 = vld [vmem:[%s231 + $0x90] sm:$0xf]
      %v283 = vld [vmem:[%s231 + $0x94] sm:$0xf]
      %v284 = vld [vmem:[%s231 + $0x98] sm:$0xf]
      %v285 = vld [vmem:[%s231 + $0x9c] sm:$0xf]
      %v286 = vld [vmem:[%s231 + $0xa0] sm:$0xf]
      %v287 = vld [vmem:[%s231 + $0xa4] sm:$0xf]
      %v288 = vld [vmem:[%s231 + $0xa8] sm:$0xf]
      %v289 = vld [vmem:[%s231 + $0xac] sm:$0xf]
      %v290 = vld [vmem:[%s231 + $0xb0] sm:$0xf]
      %v291 = vld [vmem:[%s231 + $0xb4] sm:$0xf]
      %v292 = vld [vmem:[%s231 + $0xb8] sm:$0xf]
      %v293 = vld [vmem:[%s231 + $0xbc] sm:$0xf]
      %v294 = vld [vmem:[%s231 + $0xc0] sm:$0xf]
      %v295 = vld [vmem:[%s231 + $0xc4] sm:$0xf]
      %v296 = vld [vmem:[%s231 + $0xc8] sm:$0xf]
      %v297 = vld [vmem:[%s231 + $0xcc] sm:$0xf]
      %v298 = vld [vmem:[%s231 + $0xd0] sm:$0xf]
      %v299 = vld [vmem:[%s231 + $0xd4] sm:$0xf]
      %v300 = vld [vmem:[%s231 + $0xd8] sm:$0xf]
      %v301 = vld [vmem:[%s231 + $0xdc] sm:$0xf]
      %v302 = vld [vmem:[%s231 + $0xe0] sm:$0xf]
      %v303 = vld [vmem:[%s231 + $0xe4] sm:$0xf]
      %v304 = vld [vmem:[%s231 + $0xe8] sm:$0xf]
      %v305 = vld [vmem:[%s231 + $0xec] sm:$0xf]
      %v306 = vld [vmem:[%s231 + $0xf0] sm:$0xf]
      %v307 = vld [vmem:[%s231 + $0xf4] sm:$0xf]
      %v308 = vld [vmem:[%s231 + $0xf8] sm:$0xf]
      %v309 = vld [vmem:[%s231 + $0xfc] sm:$0xf]
      %v310 = vld [vmem:[%s1] sm:$0xf]
      %v311 = vld [vmem:[%s1 + $0x4] sm:$0xf]
      %v312 = vld [vmem:[%s1 + $0x8] sm:$0xf]
      %v313 = vld [vmem:[%s1 + $0xc] sm:$0xf]
      %v314 = vld [vmem:[%s1 + $0x10] sm:$0xf]
      %v315 = vld [vmem:[%s1 + $0x14] sm:$0xf]
      %v316 = vld [vmem:[%s1 + $0x18] sm:$0xf]
      %v317 = vld [vmem:[%s1 + $0x1c] sm:$0xf]
      %v318 = vld [vmem:[%s1 + $0x20] sm:$0xf]
      %v319 = vld [vmem:[%s1 + $0x24] sm:$0xf]
      %v320 = vld [vmem:[%s1 + $0x28] sm:$0xf]
      %v321 = vld [vmem:[%s1 + $0x2c] sm:$0xf]
      %v322 = vld [vmem:[%s1 + $0x30] sm:$0xf]
      %v323 = vld [vmem:[%s1 + $0x34] sm:$0x3]
      %v388 = vunpack.c.l.b16 %v246
      %v389 = vunpack.c.l.b16 %v247
      %v390 = vunpack.c.l.b16 %v248
      %v391 = vunpack.c.l.b16 %v249
      %v392 = vunpack.c.l.b16 %v250
      %v393 = vunpack.c.l.b16 %v251
      %v394 = vunpack.c.l.b16 %v252
      %v395 = vunpack.c.l.b16 %v253
      %v396 = vunpack.c.l.b16 %v254
      %v397 = vunpack.c.l.b16 %v255
      %v398 = vunpack.c.l.b16 %v256
      %v399 = vunpack.c.l.b16 %v257
      %v400 = vunpack.c.l.b16 %v258
      %v401 = vunpack.c.l.b16 %v259
      %v402 = vunpack.c.l.b16 %v260
      %v403 = vunpack.c.l.b16 %v261
      %v404 = vunpack.c.l.b16 %v262
      %v405 = vunpack.c.l.b16 %v263
      %v406 = vunpack.c.l.b16 %v264
      %v407 = vunpack.c.l.b16 %v265
      %v408 = vunpack.c.l.b16 %v266
      %v409 = vunpack.c.l.b16 %v267
      %v410 = vunpack.c.l.b16 %v268
      %v411 = vunpack.c.l.b16 %v269
      %v412 = vunpack.c.l.b16 %v270
      %v413 = vunpack.c.l.b16 %v271
      %v414 = vunpack.c.l.b16 %v272
      %v415 = vunpack.c.l.b16 %v273
      %v416 = vunpack.c.l.b16 %v274
      %v417 = vunpack.c.l.b16 %v275
      %v418 = vunpack.c.l.b16 %v276
      %v419 = vunpack.c.l.b16 %v277
      %v420 = vunpack.c.l.b16 %v278
      %v421 = vunpack.c.l.b16 %v279
      %v422 = vunpack.c.l.b16 %v280
      %v423 = vunpack.c.l.b16 %v281
      %v424 = vunpack.c.l.b16 %v282
      %v425 = vunpack.c.l.b16 %v283
      %v426 = vunpack.c.l.b16 %v284
      %v427 = vunpack.c.l.b16 %v285
      %v428 = vunpack.c.l.b16 %v286
      %v429 = vunpack.c.l.b16 %v287
      %v430 = vunpack.c.l.b16 %v288
      %v431 = vunpack.c.l.b16 %v289
      %v432 = vunpack.c.l.b16 %v290
      %v433 = vunpack.c.l.b16 %v291
      %v434 = vunpack.c.l.b16 %v292
      %v435 = vunpack.c.l.b16 %v293
      %v436 = vunpack.c.l.b16 %v294
      %v437 = vunpack.c.l.b16 %v295
      %v438 = vunpack.c.l.b16 %v296
      %v439 = vunpack.c.l.b16 %v297
      %v440 = vunpack.c.l.b16 %v298
      %v441 = vunpack.c.l.b16 %v299
      %v442 = vunpack.c.l.b16 %v300
      %v443 = vunpack.c.l.b16 %v301
      %v444 = vunpack.c.l.b16 %v302
      %v445 = vunpack.c.l.b16 %v303
      %v446 = vunpack.c.l.b16 %v304
      %v447 = vunpack.c.l.b16 %v305
      %v448 = vunpack.c.l.b16 %v306
      %v449 = vunpack.c.l.b16 %v307
      %v450 = vunpack.c.l.b16 %v308
      %v451 = vunpack.c.l.b16 %v309
      %v452 = vpack.c.b16 %v389, %v388
      %v453 = vpack.c.b16 %v391, %v390
      %v454 = vpack.c.b16 %v393, %v392
      %v455 = vpack.c.b16 %v395, %v394
      %v456 = vpack.c.b16 %v397, %v396
      %v457 = vpack.c.b16 %v399, %v398
      %v458 = vpack.c.b16 %v401, %v400
      %v459 = vpack.c.b16 %v403, %v402
      %v460 = vpack.c.b16 %v405, %v404
      %v461 = vpack.c.b16 %v407, %v406
      %v462 = vpack.c.b16 %v409, %v408
      %v463 = vpack.c.b16 %v411, %v410
      %v464 = vpack.c.b16 %v413, %v412
      %v465 = vpack.c.b16 %v415, %v414
      %v466 = vpack.c.b16 %v417, %v416
      %v467 = vpack.c.b16 %v419, %v418
      %v468 = vpack.c.b16 %v421, %v420
      %v469 = vpack.c.b16 %v423, %v422
      %v470 = vpack.c.b16 %v425, %v424
      %v471 = vpack.c.b16 %v427, %v426
      %v472 = vpack.c.b16 %v429, %v428
      %v473 = vpack.c.b16 %v431, %v430
      %v474 = vpack.c.b16 %v433, %v432
      %v475 = vpack.c.b16 %v435, %v434
      %v476 = vpack.c.b16 %v437, %v436
      %v477 = vpack.c.b16 %v439, %v438
      %v478 = vpack.c.b16 %v441, %v440
      %v479 = vpack.c.b16 %v443, %v442
      %v480 = vpack.c.b16 %v445, %v444
      %v481 = vpack.c.b16 %v447, %v446
      %v482 = vpack.c.b16 %v449, %v448
      %v483 = vpack.c.b16 %v451, %v450
      %v498 = vunpack.c.l.b16 %v310
      %v499 = vunpack.c.l.b16 %v311
      %v500 = vunpack.c.l.b16 %v312
      %v501 = vunpack.c.l.b16 %v313
      %v502 = vunpack.c.l.b16 %v314
      %v503 = vunpack.c.l.b16 %v315
      %v504 = vunpack.c.l.b16 %v316
      %v505 = vunpack.c.l.b16 %v317
      %v506 = vunpack.c.l.b16 %v318
      %v507 = vunpack.c.l.b16 %v319
      %v508 = vunpack.c.l.b16 %v320
      %v509 = vunpack.c.l.b16 %v321
      %v510 = vunpack.c.l.b16 %v322
      %v511 = vunpack.c.l.b16 %v323
      %v512 = vpack.c.b16 %v499, %v498
      %v513 = vpack.c.b16 %v501, %v500
      %v514 = vpack.c.b16 %v503, %v502
      %v515 = vpack.c.b16 %v505, %v504
      %v516 = vpack.c.b16 %v507, %v506
      %v517 = vpack.c.b16 %v509, %v508
      %v518 = vpack.c.b16 %v511, %v510
      %vm525 = vcmask 883712
      %v527 = vsel %vm525, %v452, 0
      %v530 = vsel %vm525, %v453, 0
      %v533 = vsel %vm525, %v454, 0
      %v536 = vsel %vm525, %v455, 0
      %v539 = vsel %vm525, %v456, 0
      %v542 = vsel %vm525, %v457, 0
      %v545 = vsel %vm525, %v458, 0
      %v548 = vsel %vm525, %v459, 0
      %v551 = vsel %vm525, %v460, 0
      %v554 = vsel %vm525, %v461, 0
      %v557 = vsel %vm525, %v462, 0
      %v560 = vsel %vm525, %v463, 0
      %v563 = vsel %vm525, %v464, 0
      %v566 = vsel %vm525, %v465, 0
      %v569 = vsel %vm525, %v466, 0
      %v572 = vsel %vm525, %v467, 0
      %v575 = vsel %vm525, %v468, 0
      %v578 = vsel %vm525, %v469, 0
      %v581 = vsel %vm525, %v470, 0
      %v584 = vsel %vm525, %v471, 0
      %v587 = vsel %vm525, %v472, 0
      %v590 = vsel %vm525, %v473, 0
      %v593 = vsel %vm525, %v474, 0
      %v596 = vsel %vm525, %v475, 0
      %v599 = vsel %vm525, %v476, 0
      %v602 = vsel %vm525, %v477, 0
      %v605 = vsel %vm525, %v478, 0
      %v608 = vsel %vm525, %v479, 0
      %v611 = vsel %vm525, %v480, 0
      %v614 = vsel %vm525, %v481, 0
      %v617 = vsel %vm525, %v482, 0
      %v620 = vsel %vm525, %v483, 0
      %vm622 = vcmask 1045504
      %v624 = vsel %vm622, %v518, 0
      %626 = vmatpush.bf16.msra.mxu0 0
      %627 = vmatpush.bf16.msra.mxu0 %v624
      %628 = vmatpush.bf16.msra.mxu0 %v517
      %629 = vmatpush.bf16.msra.mxu0 %v516
      %630 = vmatpush.bf16.msra.mxu0 %v515
      %631 = vmatpush.bf16.msra.mxu0 %v514
      %632 = vmatpush.bf16.msra.mxu0 %v513
      %633 = vmatpush.bf16.msra.mxu0 %v512
      %634 = vmatmul.bf16.gmra.mxu0 %v527
      %v635 = vpop.f32.mrf.mxu0
      %v636 = vadd.f32 0.0, %v635
      %v637 = vpop.f32.mrf.mxu0
      %v638 = vadd.f32 0.0, %v637
      %639 = vmatmul.bf16.gmra.mxu0 %v530
      %v640 = vpop.f32.mrf.mxu0
      %v641 = vadd.f32 0.0, %v640
      %v642 = vpop.f32.mrf.mxu0
      %v643 = vadd.f32 0.0, %v642
      %644 = vmatmul.bf16.gmra.mxu0 %v533
      %v645 = vpop.f32.mrf.mxu0
      %v646 = vadd.f32 0.0, %v645
      %v647 = vpop.f32.mrf.mxu0
      %v648 = vadd.f32 0.0, %v647
      %649 = vmatmul.bf16.gmra.mxu0 %v536
      %v650 = vpop.f32.mrf.mxu0
      %v651 = vadd.f32 0.0, %v650
      %v652 = vpop.f32.mrf.mxu0
      %v653 = vadd.f32 0.0, %v652
      %654 = vmatmul.bf16.gmra.mxu0 %v539
      %v655 = vpop.f32.mrf.mxu0
      %v656 = vadd.f32 0.0, %v655
      %v657 = vpop.f32.mrf.mxu0
      %v658 = vadd.f32 0.0, %v657
      %659 = vmatmul.bf16.gmra.mxu0 %v542
      %v660 = vpop.f32.mrf.mxu0
      %v661 = vadd.f32 0.0, %v660
      %v662 = vpop.f32.mrf.mxu0
      %v663 = vadd.f32 0.0, %v662
      %664 = vmatmul.bf16.gmra.mxu0 %v545
      %v665 = vpop.f32.mrf.mxu0
      %v666 = vadd.f32 0.0, %v665
      %v667 = vpop.f32.mrf.mxu0
      %v668 = vadd.f32 0.0, %v667
      %669 = vmatmul.bf16.gmra.mxu0 %v548
      %v670 = vpop.f32.mrf.mxu0
      %v671 = vadd.f32 0.0, %v670
      %v672 = vpop.f32.mrf.mxu0
      %v673 = vadd.f32 0.0, %v672
      %674 = vmatmul.bf16.gmra.mxu0 %v551
      %v675 = vpop.f32.mrf.mxu0
      %v676 = vadd.f32 0.0, %v675
      %v677 = vpop.f32.mrf.mxu0
      %v678 = vadd.f32 0.0, %v677
      %679 = vmatmul.bf16.gmra.mxu0 %v554
      %v680 = vpop.f32.mrf.mxu0
      %v681 = vadd.f32 0.0, %v680
      %v682 = vpop.f32.mrf.mxu0
      %v683 = vadd.f32 0.0, %v682
      %684 = vmatmul.bf16.gmra.mxu0 %v557
      %v685 = vpop.f32.mrf.mxu0
      %v686 = vadd.f32 0.0, %v685
      %v687 = vpop.f32.mrf.mxu0
      %v688 = vadd.f32 0.0, %v687
      %689 = vmatmul.bf16.gmra.mxu0 %v560
      %v690 = vpop.f32.mrf.mxu0
      %v691 = vadd.f32 0.0, %v690
      %v692 = vpop.f32.mrf.mxu0
      %v693 = vadd.f32 0.0, %v692
      %694 = vmatmul.bf16.gmra.mxu0 %v563
      %v695 = vpop.f32.mrf.mxu0
      %v696 = vadd.f32 0.0, %v695
      %v697 = vpop.f32.mrf.mxu0
      %v698 = vadd.f32 0.0, %v697
      %699 = vmatmul.bf16.gmra.mxu0 %v566
      %v700 = vpop.f32.mrf.mxu0
      %v701 = vadd.f32 0.0, %v700
      %v702 = vpop.f32.mrf.mxu0
      %v703 = vadd.f32 0.0, %v702
      %704 = vmatmul.bf16.gmra.mxu0 %v569
      %v705 = vpop.f32.mrf.mxu0
      %v706 = vadd.f32 0.0, %v705
      %v707 = vpop.f32.mrf.mxu0
      %v708 = vadd.f32 0.0, %v707
      %709 = vmatmul.bf16.gmra.mxu0 %v572
      %v710 = vpop.f32.mrf.mxu0
      %v711 = vadd.f32 0.0, %v710
      %v712 = vpop.f32.mrf.mxu0
      %v713 = vadd.f32 0.0, %v712
      %714 = vmatmul.bf16.gmra.mxu0 %v575
      %v715 = vpop.f32.mrf.mxu0
      %v716 = vadd.f32 0.0, %v715
      %v717 = vpop.f32.mrf.mxu0
      %v718 = vadd.f32 0.0, %v717
      %719 = vmatmul.bf16.gmra.mxu0 %v578
      %v720 = vpop.f32.mrf.mxu0
      %v721 = vadd.f32 0.0, %v720
      %v722 = vpop.f32.mrf.mxu0
      %v723 = vadd.f32 0.0, %v722
      %724 = vmatmul.bf16.gmra.mxu0 %v581
      %v725 = vpop.f32.mrf.mxu0
      %v726 = vadd.f32 0.0, %v725
      %v727 = vpop.f32.mrf.mxu0
      %v728 = vadd.f32 0.0, %v727
      %729 = vmatmul.bf16.gmra.mxu0 %v584
      %v730 = vpop.f32.mrf.mxu0
      %v731 = vadd.f32 0.0, %v730
      %v732 = vpop.f32.mrf.mxu0
      %v733 = vadd.f32 0.0, %v732
      %734 = vmatmul.bf16.gmra.mxu0 %v587
      %v735 = vpop.f32.mrf.mxu0
      %v736 = vadd.f32 0.0, %v735
      %v737 = vpop.f32.mrf.mxu0
      %v738 = vadd.f32 0.0, %v737
      %739 = vmatmul.bf16.gmra.mxu0 %v590
      %v740 = vpop.f32.mrf.mxu0
      %v741 = vadd.f32 0.0, %v740
      %v742 = vpop.f32.mrf.mxu0
      %v743 = vadd.f32 0.0, %v742
      %744 = vmatmul.bf16.gmra.mxu0 %v593
      %v745 = vpop.f32.mrf.mxu0
      %v746 = vadd.f32 0.0, %v745
      %v747 = vpop.f32.mrf.mxu0
      %v748 = vadd.f32 0.0, %v747
      %749 = vmatmul.bf16.gmra.mxu0 %v596
      %v750 = vpop.f32.mrf.mxu0
      %v751 = vadd.f32 0.0, %v750
      %v752 = vpop.f32.mrf.mxu0
      %v753 = vadd.f32 0.0, %v752
      %754 = vmatmul.bf16.gmra.mxu0 %v599
      %v755 = vpop.f32.mrf.mxu0
      %v756 = vadd.f32 0.0, %v755
      %v757 = vpop.f32.mrf.mxu0
      %v758 = vadd.f32 0.0, %v757
      %759 = vmatmul.bf16.gmra.mxu0 %v602
      %v760 = vpop.f32.mrf.mxu0
      %v761 = vadd.f32 0.0, %v760
      %v762 = vpop.f32.mrf.mxu0
      %v763 = vadd.f32 0.0, %v762
      %764 = vmatmul.bf16.gmra.mxu0 %v605
      %v765 = vpop.f32.mrf.mxu0
      %v766 = vadd.f32 0.0, %v765
      %v767 = vpop.f32.mrf.mxu0
      %v768 = vadd.f32 0.0, %v767
      %769 = vmatmul.bf16.gmra.mxu0 %v608
      %v770 = vpop.f32.mrf.mxu0
      %v771 = vadd.f32 0.0, %v770
      %v772 = vpop.f32.mrf.mxu0
      %v773 = vadd.f32 0.0, %v772
      %774 = vmatmul.bf16.gmra.mxu0 %v611
      %v775 = vpop.f32.mrf.mxu0
      %v776 = vadd.f32 0.0, %v775
      %v777 = vpop.f32.mrf.mxu0
      %v778 = vadd.f32 0.0, %v777
      %779 = vmatmul.bf16.gmra.mxu0 %v614
      %v780 = vpop.f32.mrf.mxu0
      %v781 = vadd.f32 0.0, %v780
      %v782 = vpop.f32.mrf.mxu0
      %v783 = vadd.f32 0.0, %v782
      %784 = vmatmul.bf16.gmra.mxu0 %v617
      %v785 = vpop.f32.mrf.mxu0
      %v786 = vadd.f32 0.0, %v785
      %v787 = vpop.f32.mrf.mxu0
      %v788 = vadd.f32 0.0, %v787
      %789 = vmatmul.bf16.gmra.mxu0 %v620
      %v790 = vpop.f32.mrf.mxu0
      %v791 = vadd.f32 0.0, %v790
      %v792 = vpop.f32.mrf.mxu0
      %v793 = vadd.f32 0.0, %v792
      %794 = vdwg.mxu0
      %v795 = vld [vmem:[%s2] sm:$0x1]
      %v797 = vperm.slane %v795, 0
      %v799 = vadd.f32 %v636, %v797
      %v800 = vadd.f32 %v638, %v797
      %v801 = vadd.f32 %v641, %v797
      %v802 = vadd.f32 %v643, %v797
      %v803 = vadd.f32 %v646, %v797
      %v804 = vadd.f32 %v648, %v797
      %v805 = vadd.f32 %v651, %v797
      %v806 = vadd.f32 %v653, %v797
      %v807 = vadd.f32 %v656, %v797
      %v808 = vadd.f32 %v658, %v797
      %v809 = vadd.f32 %v661, %v797
      %v810 = vadd.f32 %v663, %v797
      %v811 = vadd.f32 %v666, %v797
      %v812 = vadd.f32 %v668, %v797
      %v813 = vadd.f32 %v671, %v797
      %v814 = vadd.f32 %v673, %v797
      %v815 = vadd.f32 %v676, %v797
      %v816 = vadd.f32 %v678, %v797
      %v817 = vadd.f32 %v681, %v797
      %v818 = vadd.f32 %v683, %v797
      %v819 = vadd.f32 %v686, %v797
      %v820 = vadd.f32 %v688, %v797
      %v821 = vadd.f32 %v691, %v797
      %v822 = vadd.f32 %v693, %v797
      %v823 = vadd.f32 %v696, %v797
      %v824 = vadd.f32 %v698, %v797
      %v825 = vadd.f32 %v701, %v797
      %v826 = vadd.f32 %v703, %v797
      %v827 = vadd.f32 %v706, %v797
      %v828 = vadd.f32 %v708, %v797
      %v829 = vadd.f32 %v711, %v797
      %v830 = vadd.f32 %v713, %v797
      %v831 = vadd.f32 %v716, %v797
      %v832 = vadd.f32 %v718, %v797
      %v833 = vadd.f32 %v721, %v797
      %v834 = vadd.f32 %v723, %v797
      %v835 = vadd.f32 %v726, %v797
      %v836 = vadd.f32 %v728, %v797
      %v837 = vadd.f32 %v731, %v797
      %v838 = vadd.f32 %v733, %v797
      %v839 = vadd.f32 %v736, %v797
      %v840 = vadd.f32 %v738, %v797
      %v841 = vadd.f32 %v741, %v797
      %v842 = vadd.f32 %v743, %v797
      %v843 = vadd.f32 %v746, %v797
      %v844 = vadd.f32 %v748, %v797
      %v845 = vadd.f32 %v751, %v797
      %v846 = vadd.f32 %v753, %v797
      %v847 = vadd.f32 %v756, %v797
      %v848 = vadd.f32 %v758, %v797
      %v849 = vadd.f32 %v761, %v797
      %v850 = vadd.f32 %v763, %v797
      %v851 = vadd.f32 %v766, %v797
      %v852 = vadd.f32 %v768, %v797
      %v853 = vadd.f32 %v771, %v797
      %v854 = vadd.f32 %v773, %v797
      %v855 = vadd.f32 %v776, %v797
      %v856 = vadd.f32 %v778, %v797
      %v857 = vadd.f32 %v781, %v797
      %v858 = vadd.f32 %v783, %v797
      %v859 = vadd.f32 %v786, %v797
      %v860 = vadd.f32 %v788, %v797
      %v861 = vadd.f32 %v791, %v797
      %v862 = vadd.f32 %v793, %v797
      %vm863 = vcmask 130048
      %864 = vst.msk [vmem:[%s237] sm:$0xff] %vm863, %v799
      %865 = vst.msk [vmem:[%s237 + $0x8] sm:$0xff] %vm863, %v800
      %866 = vst.msk [vmem:[%s237 + $0x10] sm:$0xff] %vm863, %v801
      %867 = vst.msk [vmem:[%s237 + $0x18] sm:$0xff] %vm863, %v802
      %868 = vst.msk [vmem:[%s237 + $0x20] sm:$0xff] %vm863, %v803
      %869 = vst.msk [vmem:[%s237 + $0x28] sm:$0xff] %vm863, %v804
      %870 = vst.msk [vmem:[%s237 + $0x30] sm:$0xff] %vm863, %v805
      %871 = vst.msk [vmem:[%s237 + $0x38] sm:$0xff] %vm863, %v806
      %872 = vst.msk [vmem:[%s237 + $0x40] sm:$0xff] %vm863, %v807
      %873 = vst.msk [vmem:[%s237 + $0x48] sm:$0xff] %vm863, %v808
      %874 = vst.msk [vmem:[%s237 + $0x50] sm:$0xff] %vm863, %v809
      %875 = vst.msk [vmem:[%s237 + $0x58] sm:$0xff] %vm863, %v810
      %876 = vst.msk [vmem:[%s237 + $0x60] sm:$0xff] %vm863, %v811
      %877 = vst.msk [vmem:[%s237 + $0x68] sm:$0xff] %vm863, %v812
      %878 = vst.msk [vmem:[%s237 + $0x70] sm:$0xff] %vm863, %v813
      %879 = vst.msk [vmem:[%s237 + $0x78] sm:$0xff] %vm863, %v814
      %880 = vst.msk [vmem:[%s237 + $0x80] sm:$0xff] %vm863, %v815
      %881 = vst.msk [vmem:[%s237 + $0x88] sm:$0xff] %vm863, %v816
      %882 = vst.msk [vmem:[%s237 + $0x90] sm:$0xff] %vm863, %v817
      %883 = vst.msk [vmem:[%s237 + $0x98] sm:$0xff] %vm863, %v818
      %884 = vst.msk [vmem:[%s237 + $0xa0] sm:$0xff] %vm863, %v819
      %885 = vst.msk [vmem:[%s237 + $0xa8] sm:$0xff] %vm863, %v820
      %886 = vst.msk [vmem:[%s237 + $0xb0] sm:$0xff] %vm863, %v821
      %887 = vst.msk [vmem:[%s237 + $0xb8] sm:$0xff] %vm863, %v822
      %888 = vst.msk [vmem:[%s237 + $0xc0] sm:$0xff] %vm863, %v823
      %889 = vst.msk [vmem:[%s237 + $0xc8] sm:$0xff] %vm863, %v824
      %890 = vst.msk [vmem:[%s237 + $0xd0] sm:$0xff] %vm863, %v825
      %891 = vst.msk [vmem:[%s237 + $0xd8] sm:$0xff] %vm863, %v826
      %892 = vst.msk [vmem:[%s237 + $0xe0] sm:$0xff] %vm863, %v827
      %893 = vst.msk [vmem:[%s237 + $0xe8] sm:$0xff] %vm863, %v828
      %894 = vst.msk [vmem:[%s237 + $0xf0] sm:$0xff] %vm863, %v829
      %895 = vst.msk [vmem:[%s237 + $0xf8] sm:$0xff] %vm863, %v830
      %896 = vst.msk [vmem:[%s237 + $0x100] sm:$0xff] %vm863, %v831
      %897 = vst.msk [vmem:[%s237 + $0x108] sm:$0xff] %vm863, %v832
      %898 = vst.msk [vmem:[%s237 + $0x110] sm:$0xff] %vm863, %v833
      %899 = vst.msk [vmem:[%s237 + $0x118] sm:$0xff] %vm863, %v834
      %900 = vst.msk [vmem:[%s237 + $0x120] sm:$0xff] %vm863, %v835
      %901 = vst.msk [vmem:[%s237 + $0x128] sm:$0xff] %vm863, %v836
      %902 = vst.msk [vmem:[%s237 + $0x130] sm:$0xff] %vm863, %v837
      %903 = vst.msk [vmem:[%s237 + $0x138] sm:$0xff] %vm863, %v838
      %904 = vst.msk [vmem:[%s237 + $0x140] sm:$0xff] %vm863, %v839
      %905 = vst.msk [vmem:[%s237 + $0x148] sm:$0xff] %vm863, %v840
      %906 = vst.msk [vmem:[%s237 + $0x150] sm:$0xff] %vm863, %v841
      %907 = vst.msk [vmem:[%s237 + $0x158] sm:$0xff] %vm863, %v842
      %908 = vst.msk [vmem:[%s237 + $0x160] sm:$0xff] %vm863, %v843
      %909 = vst.msk [vmem:[%s237 + $0x168] sm:$0xff] %vm863, %v844
      %910 = vst.msk [vmem:[%s237 + $0x170] sm:$0xff] %vm863, %v845
      %911 = vst.msk [vmem:[%s237 + $0x178] sm:$0xff] %vm863, %v846
      %912 = vst.msk [vmem:[%s237 + $0x180] sm:$0xff] %vm863, %v847
      %913 = vst.msk [vmem:[%s237 + $0x188] sm:$0xff] %vm863, %v848
      %914 = vst.msk [vmem:[%s237 + $0x190] sm:$0xff] %vm863, %v849
      %915 = vst.msk [vmem:[%s237 + $0x198] sm:$0xff] %vm863, %v850
      %916 = vst.msk [vmem:[%s237 + $0x1a0] sm:$0xff] %vm863, %v851
      %917 = vst.msk [vmem:[%s237 + $0x1a8] sm:$0xff] %vm863, %v852
      %918 = vst.msk [vmem:[%s237 + $0x1b0] sm:$0xff] %vm863, %v853
      %919 = vst.msk [vmem:[%s237 + $0x1b8] sm:$0xff] %vm863, %v854
      %920 = vst.msk [vmem:[%s237 + $0x1c0] sm:$0xff] %vm863, %v855
      %921 = vst.msk [vmem:[%s237 + $0x1c8] sm:$0xff] %vm863, %v856
      %922 = vst.msk [vmem:[%s237 + $0x1d0] sm:$0xff] %vm863, %v857
      %923 = vst.msk [vmem:[%s237 + $0x1d8] sm:$0xff] %vm863, %v858
      %924 = vst.msk [vmem:[%s237 + $0x1e0] sm:$0xff] %vm863, %v859
      %925 = vst.msk [vmem:[%s237 + $0x1e8] sm:$0xff] %vm863, %v860
      %926 = vst.msk [vmem:[%s237 + $0x1f0] sm:$0xff] %vm863, %v861
      %927 = vst.msk [vmem:[%s237 + $0x1f8] sm:$0xff] %vm863, %v862
      %v928 = vsel %vm863, %v636, 0.0
      %v929 = vsel %vm863, %v638, 0.0
      %v930 = vadd.f32 %v928, %v929
      %v931 = vsel %vm863, %v641, 0.0
      %v932 = vadd.f32 %v930, %v931
      %v933 = vsel %vm863, %v643, 0.0
      %v934 = vadd.f32 %v932, %v933
      %v935 = vsel %vm863, %v646, 0.0
      %v936 = vadd.f32 %v934, %v935
      %v937 = vsel %vm863, %v648, 0.0
      %v938 = vadd.f32 %v936, %v937
      %v939 = vsel %vm863, %v651, 0.0
      %v940 = vadd.f32 %v938, %v939
      %v941 = vsel %vm863, %v653, 0.0
      %v942 = vadd.f32 %v940, %v941
      %v943 = vsel %vm863, %v656, 0.0
      %v944 = vadd.f32 %v942, %v943
      %v945 = vsel %vm863, %v658, 0.0
      %v946 = vadd.f32 %v944, %v945
      %v947 = vsel %vm863, %v661, 0.0
      %v948 = vadd.f32 %v946, %v947
      %v949 = vsel %vm863, %v663, 0.0
      %v950 = vadd.f32 %v948, %v949
      %v951 = vsel %vm863, %v666, 0.0
      %v952 = vadd.f32 %v950, %v951
      %v953 = vsel %vm863, %v668, 0.0
      %v954 = vadd.f32 %v952, %v953
      %v955 = vsel %vm863, %v671, 0.0
      %v956 = vadd.f32 %v954, %v955
      %v957 = vsel %vm863, %v673, 0.0
      %v958 = vadd.f32 %v956, %v957
      %v959 = vsel %vm863, %v676, 0.0
      %v960 = vadd.f32 %v958, %v959
      %v961 = vsel %vm863, %v678, 0.0
      %v962 = vadd.f32 %v960, %v961
      %v963 = vsel %vm863, %v681, 0.0
      %v964 = vadd.f32 %v962, %v963
      %v965 = vsel %vm863, %v683, 0.0
      %v966 = vadd.f32 %v964, %v965
      %v967 = vsel %vm863, %v686, 0.0
      %v968 = vadd.f32 %v966, %v967
      %v969 = vsel %vm863, %v688, 0.0
      %v970 = vadd.f32 %v968, %v969
      %v971 = vsel %vm863, %v691, 0.0
      %v972 = vadd.f32 %v970, %v971
      %v973 = vsel %vm863, %v693, 0.0
      %v974 = vadd.f32 %v972, %v973
      %v975 = vsel %vm863, %v696, 0.0
      %v976 = vadd.f32 %v974, %v975
      %v977 = vsel %vm863, %v698, 0.0
      %v978 = vadd.f32 %v976, %v977
      %v979 = vsel %vm863, %v701, 0.0
      %v980 = vadd.f32 %v978, %v979
      %v981 = vsel %vm863, %v703, 0.0
      %v982 = vadd.f32 %v980, %v981
      %v983 = vsel %vm863, %v706, 0.0
      %v984 = vadd.f32 %v982, %v983
      %v985 = vsel %vm863, %v708, 0.0
      %v986 = vadd.f32 %v984, %v985
      %v987 = vsel %vm863, %v711, 0.0
      %v988 = vadd.f32 %v986, %v987
      %v989 = vsel %vm863, %v713, 0.0
      %v990 = vadd.f32 %v988, %v989
      %v991 = vsel %vm863, %v716, 0.0
      %v992 = vadd.f32 %v990, %v991
      %v993 = vsel %vm863, %v718, 0.0
      %v994 = vadd.f32 %v992, %v993
      %v995 = vsel %vm863, %v721, 0.0
      %v996 = vadd.f32 %v994, %v995
      %v997 = vsel %vm863, %v723, 0.0
      %v998 = vadd.f32 %v996, %v997
      %v999 = vsel %vm863, %v726, 0.0
      %v1000 = vadd.f32 %v998, %v999
      %v1001 = vsel %vm863, %v728, 0.0
      %v1002 = vadd.f32 %v1000, %v1001
      %v1003 = vsel %vm863, %v731, 0.0
      %v1004 = vadd.f32 %v1002, %v1003
      %v1005 = vsel %vm863, %v733, 0.0
      %v1006 = vadd.f32 %v1004, %v1005
      %v1007 = vsel %vm863, %v736, 0.0
      %v1008 = vadd.f32 %v1006, %v1007
      %v1009 = vsel %vm863, %v738, 0.0
      %v1010 = vadd.f32 %v1008, %v1009
      %v1011 = vsel %vm863, %v741, 0.0
      %v1012 = vadd.f32 %v1010, %v1011
      %v1013 = vsel %vm863, %v743, 0.0
      %v1014 = vadd.f32 %v1012, %v1013
      %v1015 = vsel %vm863, %v746, 0.0
      %v1016 = vadd.f32 %v1014, %v1015
      %v1017 = vsel %vm863, %v748, 0.0
      %v1018 = vadd.f32 %v1016, %v1017
      %v1019 = vsel %vm863, %v751, 0.0
      %v1020 = vadd.f32 %v1018, %v1019
      %v1021 = vsel %vm863, %v753, 0.0
      %v1022 = vadd.f32 %v1020, %v1021
      %v1023 = vsel %vm863, %v756, 0.0
      %v1024 = vadd.f32 %v1022, %v1023
      %v1025 = vsel %vm863, %v758, 0.0
      %v1026 = vadd.f32 %v1024, %v1025
      %v1027 = vsel %vm863, %v761, 0.0
      %v1028 = vadd.f32 %v1026, %v1027
      %v1029 = vsel %vm863, %v763, 0.0
      %v1030 = vadd.f32 %v1028, %v1029
      %v1031 = vsel %vm863, %v766, 0.0
      %v1032 = vadd.f32 %v1030, %v1031
      %v1033 = vsel %vm863, %v768, 0.0
      %v1034 = vadd.f32 %v1032, %v1033
      %v1035 = vsel %vm863, %v771, 0.0
      %v1036 = vadd.f32 %v1034, %v1035
      %v1037 = vsel %vm863, %v773, 0.0
      %v1038 = vadd.f32 %v1036, %v1037
      %v1039 = vsel %vm863, %v776, 0.0
      %v1040 = vadd.f32 %v1038, %v1039
      %v1041 = vsel %vm863, %v778, 0.0
      %v1042 = vadd.f32 %v1040, %v1041
      %v1043 = vsel %vm863, %v781, 0.0
      %v1044 = vadd.f32 %v1042, %v1043
      %v1045 = vsel %vm863, %v783, 0.0
      %v1046 = vadd.f32 %v1044, %v1045
      %v1047 = vsel %vm863, %v786, 0.0
      %v1048 = vadd.f32 %v1046, %v1047
      %v1049 = vsel %vm863, %v788, 0.0
      %v1050 = vadd.f32 %v1048, %v1049
      %v1051 = vsel %vm863, %v791, 0.0
      %v1052 = vadd.f32 %v1050, %v1051
      %v1053 = vsel %vm863, %v793, 0.0
      %v1054 = vadd.f32 %v1052, %v1053
      %v1055 = vrot.slane %v1054, 4
      %v1056 = vadd.f32 %v1054, %v1055
      %v1057 = vrot.slane %v1056, 2
      %v1058 = vadd.f32 %v1056, %v1057
      %v1059 = vrot.slane %v1058, 1
      %v1060 = vadd.f32 %v1058, %v1059
      %vm1061 = vcmask 122880
      %1062 = vst.msk [vmem:[%s241] sm:$0x1] %vm1061, %v1060
      %v1063 = vmul.f32 %v636, %v636
      %v1064 = vmul.f32 %v638, %v638
      %v1065 = vmul.f32 %v641, %v641
      %v1066 = vmul.f32 %v643, %v643
      %v1067 = vmul.f32 %v646, %v646
      %v1068 = vmul.f32 %v648, %v648
      %v1069 = vmul.f32 %v651, %v651
      %v1070 = vmul.f32 %v653, %v653
      %v1071 = vmul.f32 %v656, %v656
      %v1072 = vmul.f32 %v658, %v658
      %v1073 = vmul.f32 %v661, %v661
      %v1074 = vmul.f32 %v663, %v663
      %v1075 = vmul.f32 %v666, %v666
      %v1076 = vmul.f32 %v668, %v668
      %v1077 = vmul.f32 %v671, %v671
      %v1078 = vmul.f32 %v673, %v673
      %v1079 = vmul.f32 %v676, %v676
      %v1080 = vmul.f32 %v678, %v678
      %v1081 = vmul.f32 %v681, %v681
      %v1082 = vmul.f32 %v683, %v683
      %v1083 = vmul.f32 %v686, %v686
      %v1084 = vmul.f32 %v688, %v688
      %v1085 = vmul.f32 %v691, %v691
      %v1086 = vmul.f32 %v693, %v693
      %v1087 = vmul.f32 %v696, %v696
      %v1088 = vmul.f32 %v698, %v698
      %v1089 = vmul.f32 %v701, %v701
      %v1090 = vmul.f32 %v703, %v703
      %v1091 = vmul.f32 %v706, %v706
      %v1092 = vmul.f32 %v708, %v708
      %v1093 = vmul.f32 %v711, %v711
      %v1094 = vmul.f32 %v713, %v713
      %v1095 = vmul.f32 %v716, %v716
      %v1096 = vmul.f32 %v718, %v718
      %v1097 = vmul.f32 %v721, %v721
      %v1098 = vmul.f32 %v723, %v723
      %v1099 = vmul.f32 %v726, %v726
      %v1100 = vmul.f32 %v728, %v728
      %v1101 = vmul.f32 %v731, %v731
      %v1102 = vmul.f32 %v733, %v733
      %v1103 = vmul.f32 %v736, %v736
      %v1104 = vmul.f32 %v738, %v738
      %v1105 = vmul.f32 %v741, %v741
      %v1106 = vmul.f32 %v743, %v743
      %v1107 = vmul.f32 %v746, %v746
      %v1108 = vmul.f32 %v748, %v748
      %v1109 = vmul.f32 %v751, %v751
      %v1110 = vmul.f32 %v753, %v753
      %v1111 = vmul.f32 %v756, %v756
      %v1112 = vmul.f32 %v758, %v758
      %v1113 = vmul.f32 %v761, %v761
      %v1114 = vmul.f32 %v763, %v763
      %v1115 = vmul.f32 %v766, %v766
      %v1116 = vmul.f32 %v768, %v768
      %v1117 = vmul.f32 %v771, %v771
      %v1118 = vmul.f32 %v773, %v773
      %v1119 = vmul.f32 %v776, %v776
      %v1120 = vmul.f32 %v778, %v778
      %v1121 = vmul.f32 %v781, %v781
      %v1122 = vmul.f32 %v783, %v783
      %v1123 = vmul.f32 %v786, %v786
      %v1124 = vmul.f32 %v788, %v788
      %v1125 = vmul.f32 %v791, %v791
      %v1126 = vmul.f32 %v793, %v793
      %v1127 = vsel %vm863, %v1063, 0.0
      %v1128 = vsel %vm863, %v1064, 0.0
      %v1129 = vadd.f32 %v1127, %v1128
      %v1130 = vsel %vm863, %v1065, 0.0
      %v1131 = vadd.f32 %v1129, %v1130
      %v1132 = vsel %vm863, %v1066, 0.0
      %v1133 = vadd.f32 %v1131, %v1132
      %v1134 = vsel %vm863, %v1067, 0.0
      %v1135 = vadd.f32 %v1133, %v1134
      %v1136 = vsel %vm863, %v1068, 0.0
      %v1137 = vadd.f32 %v1135, %v1136
      %v1138 = vsel %vm863, %v1069, 0.0
      %v1139 = vadd.f32 %v1137, %v1138
      %v1140 = vsel %vm863, %v1070, 0.0
      %v1141 = vadd.f32 %v1139, %v1140
      %v1142 = vsel %vm863, %v1071, 0.0
      %v1143 = vadd.f32 %v1141, %v1142
      %v1144 = vsel %vm863, %v1072, 0.0
      %v1145 = vadd.f32 %v1143, %v1144
      %v1146 = vsel %vm863, %v1073, 0.0
      %v1147 = vadd.f32 %v1145, %v1146
      %v1148 = vsel %vm863, %v1074, 0.0
      %v1149 = vadd.f32 %v1147, %v1148
      %v1150 = vsel %vm863, %v1075, 0.0
      %v1151 = vadd.f32 %v1149, %v1150
      %v1152 = vsel %vm863, %v1076, 0.0
      %v1153 = vadd.f32 %v1151, %v1152
      %v1154 = vsel %vm863, %v1077, 0.0
      %v1155 = vadd.f32 %v1153, %v1154
      %v1156 = vsel %vm863, %v1078, 0.0
      %v1157 = vadd.f32 %v1155, %v1156
      %v1158 = vsel %vm863, %v1079, 0.0
      %v1159 = vadd.f32 %v1157, %v1158
      %v1160 = vsel %vm863, %v1080, 0.0
      %v1161 = vadd.f32 %v1159, %v1160
      %v1162 = vsel %vm863, %v1081, 0.0
      %v1163 = vadd.f32 %v1161, %v1162
      %v1164 = vsel %vm863, %v1082, 0.0
      %v1165 = vadd.f32 %v1163, %v1164
      %v1166 = vsel %vm863, %v1083, 0.0
      %v1167 = vadd.f32 %v1165, %v1166
      %v1168 = vsel %vm863, %v1084, 0.0
      %v1169 = vadd.f32 %v1167, %v1168
      %v1170 = vsel %vm863, %v1085, 0.0
      %v1171 = vadd.f32 %v1169, %v1170
      %v1172 = vsel %vm863, %v1086, 0.0
      %v1173 = vadd.f32 %v1171, %v1172
      %v1174 = vsel %vm863, %v1087, 0.0
      %v1175 = vadd.f32 %v1173, %v1174
      %v1176 = vsel %vm863, %v1088, 0.0
      %v1177 = vadd.f32 %v1175, %v1176
      %v1178 = vsel %vm863, %v1089, 0.0
      %v1179 = vadd.f32 %v1177, %v1178
      %v1180 = vsel %vm863, %v1090, 0.0
      %v1181 = vadd.f32 %v1179, %v1180
      %v1182 = vsel %vm863, %v1091, 0.0
      %v1183 = vadd.f32 %v1181, %v1182
      %v1184 = vsel %vm863, %v1092, 0.0
      %v1185 = vadd.f32 %v1183, %v1184
      %v1186 = vsel %vm863, %v1093, 0.0
      %v1187 = vadd.f32 %v1185, %v1186
      %v1188 = vsel %vm863, %v1094, 0.0
      %v1189 = vadd.f32 %v1187, %v1188
      %v1190 = vsel %vm863, %v1095, 0.0
      %v1191 = vadd.f32 %v1189, %v1190
      %v1192 = vsel %vm863, %v1096, 0.0
      %v1193 = vadd.f32 %v1191, %v1192
      %v1194 = vsel %vm863, %v1097, 0.0
      %v1195 = vadd.f32 %v1193, %v1194
      %v1196 = vsel %vm863, %v1098, 0.0
      %v1197 = vadd.f32 %v1195, %v1196
      %v1198 = vsel %vm863, %v1099, 0.0
      %v1199 = vadd.f32 %v1197, %v1198
      %v1200 = vsel %vm863, %v1100, 0.0
      %v1201 = vadd.f32 %v1199, %v1200
      %v1202 = vsel %vm863, %v1101, 0.0
      %v1203 = vadd.f32 %v1201, %v1202
      %v1204 = vsel %vm863, %v1102, 0.0
      %v1205 = vadd.f32 %v1203, %v1204
      %v1206 = vsel %vm863, %v1103, 0.0
      %v1207 = vadd.f32 %v1205, %v1206
      %v1208 = vsel %vm863, %v1104, 0.0
      %v1209 = vadd.f32 %v1207, %v1208
      %v1210 = vsel %vm863, %v1105, 0.0
      %v1211 = vadd.f32 %v1209, %v1210
      %v1212 = vsel %vm863, %v1106, 0.0
      %v1213 = vadd.f32 %v1211, %v1212
      %v1214 = vsel %vm863, %v1107, 0.0
      %v1215 = vadd.f32 %v1213, %v1214
      %v1216 = vsel %vm863, %v1108, 0.0
      %v1217 = vadd.f32 %v1215, %v1216
      %v1218 = vsel %vm863, %v1109, 0.0
      %v1219 = vadd.f32 %v1217, %v1218
      %v1220 = vsel %vm863, %v1110, 0.0
      %v1221 = vadd.f32 %v1219, %v1220
      %v1222 = vsel %vm863, %v1111, 0.0
      %v1223 = vadd.f32 %v1221, %v1222
      %v1224 = vsel %vm863, %v1112, 0.0
      %v1225 = vadd.f32 %v1223, %v1224
      %v1226 = vsel %vm863, %v1113, 0.0
      %v1227 = vadd.f32 %v1225, %v1226
      %v1228 = vsel %vm863, %v1114, 0.0
      %v1229 = vadd.f32 %v1227, %v1228
      %v1230 = vsel %vm863, %v1115, 0.0
      %v1231 = vadd.f32 %v1229, %v1230
      %v1232 = vsel %vm863, %v1116, 0.0
      %v1233 = vadd.f32 %v1231, %v1232
      %v1234 = vsel %vm863, %v1117, 0.0
      %v1235 = vadd.f32 %v1233, %v1234
      %v1236 = vsel %vm863, %v1118, 0.0
      %v1237 = vadd.f32 %v1235, %v1236
      %v1238 = vsel %vm863, %v1119, 0.0
      %v1239 = vadd.f32 %v1237, %v1238
      %v1240 = vsel %vm863, %v1120, 0.0
      %v1241 = vadd.f32 %v1239, %v1240
      %v1242 = vsel %vm863, %v1121, 0.0
      %v1243 = vadd.f32 %v1241, %v1242
      %v1244 = vsel %vm863, %v1122, 0.0
      %v1245 = vadd.f32 %v1243, %v1244
      %v1246 = vsel %vm863, %v1123, 0.0
      %v1247 = vadd.f32 %v1245, %v1246
      %v1248 = vsel %vm863, %v1124, 0.0
      %v1249 = vadd.f32 %v1247, %v1248
      %v1250 = vsel %vm863, %v1125, 0.0
      %v1251 = vadd.f32 %v1249, %v1250
      %v1252 = vsel %vm863, %v1126, 0.0
      %v1253 = vadd.f32 %v1251, %v1252
      %v1254 = vrot.slane %v1253, 4
      %v1255 = vadd.f32 %v1253, %v1254
      %v1256 = vrot.slane %v1255, 2
      %v1257 = vadd.f32 %v1255, %v1256
      %v1258 = vrot.slane %v1257, 1
      %v1259 = vadd.f32 %v1257, %v1258
      %1260 = vst.msk [vmem:[%s244] sm:$0x1] %vm1061, %v1259
      %s1261 = smul.u32 64, %s17
      %p1262 = scmp.lt.s32.totalorder %s1261, 127
      %s1263 = scalar_select %p1262, %s1261, 127
      %s1264 = smul.addr %s1263, 8
      %s1265 = scalar_lea.vmem %s3, %s1264
      %p1266 = scmp.lt.s32.totalorder %s17, 1
      %s1267 = scalar_select %p1266, %s17, 1
      %s1268 = scalar_lea.vmem %s4, %s1267
      %p1269 = scmp.lt.s32.totalorder %s17, 1
      %s1270 = scalar_select %p1269, %s17, 1
      %s1271 = scalar_lea.vmem %s5, %s1270
      // Predicated region
      $region33: #{down_forward.6} parent=31 // pred_check
        %p1272 = pneg %p103
      $region34: #{down_forward.6} parent=31 // pred_check_branch
        %1274 = sbr.rel (%p1272) target = $region36
      $region35: #{down_forward.6} parent=31 // pred_region
        %s1275 = smul.u32 64, %s17
      $region36: #{down_forward.6} parent=31 // pred_fallthru
        _
      // Predicated region
      $region37: #{down_forward.6} parent=31 // pred_check
        %p1276 = pneg %p129
      $region38: #{down_forward.6} parent=31 // pred_check_branch
        %1278 = sbr.rel (%p1276) target = $region40
      $region39: #{down_forward.6} parent=31 // pred_region
        _
      $region40: #{down_forward.6} parent=31 // pred_fallthru
        _
      // Predicated region
      $region41: #{down_forward.6} parent=31 // pred_check
        %p1279 = pneg %p155
      $region42: #{down_forward.6} parent=31 // pred_check_branch
        %1281 = sbr.rel (%p1279) target = $region44
      $region43: #{down_forward.6} parent=31 // pred_region
        _
      $region44: #{down_forward.6} parent=31 // pred_fallthru
        _
    $region32: #{down_forward.6} parent=5 // pred_fallthru
      _
    %p1282 = scmp.le.s32.totalorder 2, %s12
    // Predicated region
    $region45: #{down_forward.6} parent=5 // pred_check
      %p1283 = pneg %p1282
    $region46: #{down_forward.6} parent=5 // pred_check_branch
      %1285 = sbr.rel (%p1283) target = $region48
    $region47: #{down_forward.6} parent=5 // pred_region
      %s1286 = ssub.s32 %s12, 2
      // Predicated region
      $region49: #{down_forward.6} parent=47 // pred_check
        %p1287 = pneg %p109
      $region50: #{down_forward.6} parent=47 // pred_check_branch
        %1289 = sbr.rel (%p1287) target = $region52
      $region51: #{down_forward.6} parent=47 // pred_region
        %s1290 = smul.u32 64, %s18
        %p1291 = scmp.lt.s32.totalorder %s1290, 127
        %s1292 = scalar_select %p1291, %s1290, 127
        %s1293 = smul.addr %s1292, 8
        %s1294 = scalar_lea.vmem %s3, %s1293
      $region52: #{down_forward.6} parent=47 // pred_fallthru
        _
      // Predicated region
      $region53: #{down_forward.6} parent=47 // pred_check
        %p1295 = pneg %p135
      $region54: #{down_forward.6} parent=47 // pred_check_branch
        %1297 = sbr.rel (%p1295) target = $region56
      $region55: #{down_forward.6} parent=47 // pred_region
        %p1298 = scmp.lt.s32.totalorder %s18, 1
        %s1299 = scalar_select %p1298, %s18, 1
        %s1300 = scalar_lea.vmem %s4, %s1299
      $region56: #{down_forward.6} parent=47 // pred_fallthru
        _
      // Predicated region
      $region57: #{down_forward.6} parent=47 // pred_check
        %p1301 = pneg %p161
      $region58: #{down_forward.6} parent=47 // pred_check_branch
        %1303 = sbr.rel (%p1301) target = $region60
      $region59: #{down_forward.6} parent=47 // pred_region
        %p1304 = scmp.lt.s32.totalorder %s18, 1
        %s1305 = scalar_select %p1304, %s18, 1
        %s1306 = scalar_lea.vmem %s5, %s1305
      $region60: #{down_forward.6} parent=47 // pred_fallthru
        _
    $region48: #{down_forward.6} parent=5 // pred_fallthru
      _
  $region6: #{down_forward.6} parent=0 // loop_footer
    %s16 = sadd.s32 1, %s12
  $region7: #{down_forward.6} parent=0 // loop_footer_branch
    %11 = sbr.rel target = $region3
  $region8: #{down_forward.6} parent=0 // loop_exit
    _

// kernel: down_forward.7
$region0: #{down_forward.7}
  #allocation0 [shape = 'u32[]', space=smem, size = 0x4, offset = 0x4, fixed_abs, tag = 'smem constant byte address 0x4 - core index']
  #allocation1 [shape = 'u32[72,128]{1,0:T(1,128)}', space=vmem, size = 0x9000, scoped, tag = 'internal scratch']
  %s0 = inlined_call_operand.vmem [shape: f32[128,128], index: 0, kind: input, shape index: {}]
  %s1 = inlined_call_operand.vmem [shape: f32[1,128], index: 1, kind: input, shape index: {}]
  %s2 = inlined_call_operand.vmem [shape: f32[1,128], index: 2, kind: input, shape index: {}]
  %s3 = inlined_call_operand.vmem [shape: bf16[128,128], index: 3, kind: output, shape index: {}]
  %s4 = sld [smem:[#allocation0]]
  $region45: #{down_forward.7} parent=0
    _
  %s6 = ssub.s32 1, %s4
  %s7 = scalar_select 0, %s6, %s4
  loop: start=0, step=1, limit=4
  $region2: #{down_forward.7} parent=0 // loop_pre_header
    _
  $region3: #{down_forward.7} parent=0 // loop_header
    %s9 = sphi 0, %s13
    %p10 = scmp.ge.s32.totalorder %s9, 4
    %s19 = sphi 0, %s21
    %s22 = sphi 0, %s19
    %s23 = sphi 0, %s22
    %s39 = sphi 0, %s23
    %s43 = sphi 0, %s43
    %s45 = sphi 0, %s43
    %s46 = sphi 0, %s45
    %s60 = sphi 0, %s46
    %s64 = sphi 0, %s64
    %s66 = sphi 0, %s64
    %s67 = sphi 0, %s66
    %s81 = sphi 0, %s67
    %s87 = sphi 0, %s89
    %s90 = sphi 0, %s87
    %s91 = sphi 0, %s90
    %s107 = sphi 0, %s91
  $region4: #{down_forward.7} parent=0 // loop_header_branch
    %12 = sbr.rel (%p10) target = $region8
  $region5: #{down_forward.7} parent=0 // loop_body
    %s14 = ssub.s32 %s9, 1
    %s15 = ssub.s32 %s9, 2
    %s16 = sadd.s32 %s9, 1
    %s17 = ssub.s32 %s9, %s16
    %p18 = scmp.eq.s32.totalorder %s17, 0
    %s20 = sadd.s32 %s19, 1
    %s21 = scalar_select %p18, %s19, %s20
    %p24 = pneg %p18
    %p25 = scmp.eq.s32.totalorder %s9, 1
    %p26 = por %p24, %p25
    %p27 = scmp.ne.s32.totalorder %s19, %s22
    %p28 = scmp.eq.s32.totalorder %s9, 0
    %p29 = por %p27, %p28
    %p30 = scmp.ne.s32.totalorder %s19, %s22
    %p31 = scmp.eq.s32.totalorder %s14, 1
    %p32 = por %p30, %p31
    %p33 = scmp.ne.s32.totalorder %s22, %s23
    %p34 = scmp.eq.s32.totalorder %s14, 0
    %p35 = por %p33, %p34
    %p36 = scmp.ne.s32.totalorder %s22, %s23
    %p37 = scmp.eq.s32.totalorder %s15, 1
    %p38 = por %p36, %p37
    %p40 = scmp.ne.s32.totalorder %s23, %s39
    %p41 = scmp.eq.s32.totalorder %s15, 0
    %p42 = por %p40, %p41
    %s44 = sadd.s32 %s43, 1
    %p47 = scmp.eq.s32.totalorder %s9, 1
    %p48 = scmp.ne.s32.totalorder %s43, %s45
    %p49 = scmp.eq.s32.totalorder %s9, 0
    %p50 = por %p48, %p49
    %p51 = scmp.ne.s32.totalorder %s43, %s45
    %p52 = scmp.eq.s32.totalorder %s14, 1
    %p53 = por %p51, %p52
    %p54 = scmp.ne.s32.totalorder %s45, %s46
    %p55 = scmp.eq.s32.totalorder %s14, 0
    %p56 = por %p54, %p55
    %p57 = scmp.ne.s32.totalorder %s45, %s46
    %p58 = scmp.eq.s32.totalorder %s15, 1
    %p59 = por %p57, %p58
    %p61 = scmp.ne.s32.totalorder %s46, %s60
    %p62 = scmp.eq.s32.totalorder %s15, 0
    %p63 = por %p61, %p62
    %s65 = sadd.s32 %s64, 1
    %p68 = scmp.eq.s32.totalorder %s9, 1
    %p69 = scmp.ne.s32.totalorder %s64, %s66
    %p70 = scmp.eq.s32.totalorder %s9, 0
    %p71 = por %p69, %p70
    %p72 = scmp.ne.s32.totalorder %s64, %s66
    %p73 = scmp.eq.s32.totalorder %s14, 1
    %p74 = por %p72, %p73
    %p75 = scmp.ne.s32.totalorder %s66, %s67
    %p76 = scmp.eq.s32.totalorder %s14, 0
    %p77 = por %p75, %p76
    %p78 = scmp.ne.s32.totalorder %s66, %s67
    %p79 = scmp.eq.s32.totalorder %s15, 1
    %p80 = por %p78, %p79
    %p82 = scmp.ne.s32.totalorder %s67, %s81
    %p83 = scmp.eq.s32.totalorder %s15, 0
    %p84 = por %p82, %p83
    %s85 = ssub.s32 %s9, %s16
    %p86 = scmp.eq.s32.totalorder %s85, 0
    %s88 = sadd.s32 %s87, 1
    %s89 = scalar_select %p86, %s87, %s88
    %p92 = pneg %p86
    %p93 = scmp.eq.s32.totalorder %s9, 1
    %p94 = por %p92, %p93
    %p95 = scmp.ne.s32.totalorder %s87, %s90
    %p96 = scmp.eq.s32.totalorder %s9, 0
    %p97 = por %p95, %p96
    %p98 = scmp.ne.s32.totalorder %s87, %s90
    %p99 = scmp.eq.s32.totalorder %s14, 1
    %p100 = por %p98, %p99
    %p101 = scmp.ne.s32.totalorder %s90, %s91
    %p102 = scmp.eq.s32.totalorder %s14, 0
    %p103 = por %p101, %p102
    %p104 = scmp.ne.s32.totalorder %s90, %s91
    %p105 = scmp.eq.s32.totalorder %s15, 1
    %p106 = por %p104, %p105
    %p108 = scmp.ne.s32.totalorder %s91, %s107
    %p109 = scmp.eq.s32.totalorder %s15, 0
    %p110 = por %p108, %p109
    %p111 = scmp.le.s32.totalorder 1, %s9
    %p112 = scmp.lt.s32.totalorder %s9, 3
    %p113 = pnand %p111, %p112
    %p114 = pneg %p113
    // Predicated region
    $region9: #{down_forward.7} parent=5 // pred_check
      _
    $region10: #{down_forward.7} parent=5 // pred_check_branch
      %116 = sbr.rel (%p113) target = $region12
    $region11: #{down_forward.7} parent=5 // pred_region
      %s117 = ssub.s32 %s9, 1
      // Predicated region
      $region13: #{down_forward.7} parent=11 // pred_check
        %p118 = pneg %p56
      $region14: #{down_forward.7} parent=11 // pred_check_branch
        %120 = sbr.rel (%p118) target = $region16
      $region15: #{down_forward.7} parent=11 // pred_region
        _
      $region16: #{down_forward.7} parent=11 // pred_fallthru
        _
      // Predicated region
      $region17: #{down_forward.7} parent=11 // pred_check
        %p121 = pneg %p77
      $region18: #{down_forward.7} parent=11 // pred_check_branch
        %123 = sbr.rel (%p121) target = $region20
      $region19: #{down_forward.7} parent=11 // pred_region
        _
      $region20: #{down_forward.7} parent=11 // pred_fallthru
        _
    $region12: #{down_forward.7} parent=5 // pred_fallthru
      _
    %p124 = scmp.lt.s32.totalorder %s9, 2
    // Predicated region
    $region21: #{down_forward.7} parent=5 // pred_check
      %p125 = pneg %p124
    $region22: #{down_forward.7} parent=5 // pred_check_branch
      %127 = sbr.rel (%p125) target = $region24
    $region23: #{down_forward.7} parent=5 // pred_region
      // Predicated region
      $region25: #{down_forward.7} parent=23 // pred_check
        %p128 = pneg %p29
      $region26: #{down_forward.7} parent=23 // pred_check_branch
        %130 = sbr.rel (%p128) target = $region28
      $region27: #{down_forward.7} parent=23 // pred_region
        %s131 = smul.u32 8, %s9
        %p132 = scmp.lt.s32.totalorder %s131, 15
        %s133 = scalar_select %p132, %s131, 15
        %s134 = smul.addr %s133, 8
        %s135 = scalar_lea.vmem %s0, %s134
        %s136 = smul.u32 8, %s9
      $region28: #{down_forward.7} parent=23 // pred_fallthru
        _
    $region24: #{down_forward.7} parent=5 // pred_fallthru
      _
    %p137 = scmp.le.s32.totalorder 1, %s9
    %p138 = scmp.lt.s32.totalorder %s9, 3
    %p139 = pnand %p137, %p138
    %p140 = pneg %p139
    // Predicated region
    $region29: #{down_forward.7} parent=5 // pred_check
      _
    $region30: #{down_forward.7} parent=5 // pred_check_branch
      %142 = sbr.rel (%p139) target = $region32
    $region31: #{down_forward.7} parent=5 // pred_region
      %s143 = ssub.s32 %s9, 1
      %s144 = smul.u32 8, %s14
      %p145 = scmp.lt.s32.totalorder %s144, 15
      %s146 = scalar_select %p145, %s144, 15
      %s147 = smul.addr %s146, 8
      %s148 = scalar_lea.vmem %s0, %s147
      %p149 = pneg %p35
      %p150 = pneg %p32
      %p151 = pneg %p56
      %p152 = pneg %p53
      %p153 = pneg %p77
      %p154 = pneg %p74
      %p155 = pneg %p103
      %p156 = pneg %p100
      %s157 = smul.u32 8, %s14
      %p158 = scmp.lt.s32.totalorder %s157, 15
      %s159 = scalar_select %p158, %s157, 15
      %s160 = smul.addr %s159, 4
      %s161 = scalar_lea.vmem %s3, %s160
      %s162 = smul.u32 8, %s14
      %p163 = scmp.lt.s32.totalorder %s162, 15
      %s164 = scalar_select %p163, %s162, 15
      %s165 = smul.addr %s164, 8
      %s166 = scalar_lea.vmem %s0, %s165
      %s167 = smul.u32 8, %s14
      %s168 = smul.u32 8, %s14
      %p169 = scmp.lt.s32.totalorder %s168, 15
      %s170 = scalar_select %p169, %s168, 15
      %s171 = smul.addr %s170, 4
      %s172 = scalar_lea.vmem %s3, %s171
      %s173 = smul.u32 8, %s14
      %v174 = vld [vmem:[%s166] sm:$0xff]
      %v175 = vld [vmem:[%s166 + $0x8] sm:$0xff]
      %v176 = vld [vmem:[%s166 + $0x10] sm:$0xff]
      %v177 = vld [vmem:[%s166 + $0x18] sm:$0xff]
      %v178 = vld [vmem:[%s166 + $0x20] sm:$0xff]
      %v179 = vld [vmem:[%s166 + $0x28] sm:$0xff]
      %v180 = vld [vmem:[%s166 + $0x30] sm:$0xff]
      %v181 = vld [vmem:[%s166 + $0x38] sm:$0xff]
      %v182 = vld [vmem:[%s1] sm:$0x1]
      %v184 = vperm.slane %v182, 0
      %v186 = vmul.f32 %v174, %v184
      %v187 = vmul.f32 %v175, %v184
      %v188 = vmul.f32 %v176, %v184
      %v189 = vmul.f32 %v177, %v184
      %v190 = vmul.f32 %v178, %v184
      %v191 = vmul.f32 %v179, %v184
      %v192 = vmul.f32 %v180, %v184
      %v193 = vmul.f32 %v181, %v184
      %v194 = vld [vmem:[%s2] sm:$0x1]
      %v196 = vperm.slane %v194, 0
      %v198 = vadd.f32 %v186, %v196
      %v199 = vadd.f32 %v187, %v196
      %v200 = vadd.f32 %v188, %v196
      %v201 = vadd.f32 %v189, %v196
      %v202 = vadd.f32 %v190, %v196
      %v203 = vadd.f32 %v191, %v196
      %v204 = vadd.f32 %v192, %v196
      %v205 = vadd.f32 %v193, %v196
      %v206 = vmax.f32 %v198, 0.0
      %v207 = vmax.f32 %v199, 0.0
      %v208 = vmax.f32 %v200, 0.0
      %v209 = vmax.f32 %v201, 0.0
      %v210 = vmax.f32 %v202, 0.0
      %v211 = vmax.f32 %v203, 0.0
      %v212 = vmax.f32 %v204, 0.0
      %v213 = vmax.f32 %v205, 0.0
      %v214 = vpack.c.bf16 %v206, %v206
      %v215 = vpack.c.bf16 %v207, %v207
      %v216 = vpack.c.bf16 %v208, %v208
      %v217 = vpack.c.bf16 %v209, %v209
      %v218 = vpack.c.bf16 %v210, %v210
      %v219 = vpack.c.bf16 %v211, %v211
      %v220 = vpack.c.bf16 %v212, %v212
      %v221 = vpack.c.bf16 %v213, %v213
      %222 = vst [vmem:[%s172] sm:$0xf] %v214
      %223 = vst [vmem:[%s172 + $0x4] sm:$0xf] %v215
      %224 = vst [vmem:[%s172 + $0x8] sm:$0xf] %v216
      %225 = vst [vmem:[%s172 + $0xc] sm:$0xf] %v217
      %226 = vst [vmem:[%s172 + $0x10] sm:$0xf] %v218
      %227 = vst [vmem:[%s172 + $0x14] sm:$0xf] %v219
      %228 = vst [vmem:[%s172 + $0x18] sm:$0xf] %v220
      %229 = vst [vmem:[%s172 + $0x1c] sm:$0xf] %v221
      %s230 = smul.u32 8, %s14
      %p231 = scmp.lt.s32.totalorder %s230, 15
      %s232 = scalar_select %p231, %s230, 15
      %s233 = smul.addr %s232, 4
      %s234 = scalar_lea.vmem %s3, %s233
      // Predicated region
      $region33: #{down_forward.7} parent=31 // pred_check
        %p235 = pneg %p100
      $region34: #{down_forward.7} parent=31 // pred_check_branch
        %237 = sbr.rel (%p235) target = $region36
      $region35: #{down_forward.7} parent=31 // pred_region
        %s238 = smul.u32 8, %s14
      $region36: #{down_forward.7} parent=31 // pred_fallthru
        _
    $region32: #{down_forward.7} parent=5 // pred_fallthru
      _
    %p239 = scmp.le.s32.totalorder 2, %s9
    // Predicated region
    $region37: #{down_forward.7} parent=5 // pred_check
      %p240 = pneg %p239
    $region38: #{down_forward.7} parent=5 // pred_check_branch
      %242 = sbr.rel (%p240) target = $region40
    $region39: #{down_forward.7} parent=5 // pred_region
      %s243 = ssub.s32 %s9, 2
      // Predicated region
      $region41: #{down_forward.7} parent=39 // pred_check
        %p244 = pneg %p106
      $region42: #{down_forward.7} parent=39 // pred_check_branch
        %246 = sbr.rel (%p244) target = $region44
      $region43: #{down_forward.7} parent=39 // pred_region
        %s247 = smul.u32 8, %s15
        %p248 = scmp.lt.s32.totalorder %s247, 15
        %s249 = scalar_select %p248, %s247, 15
        %s250 = smul.addr %s249, 4
        %s251 = scalar_lea.vmem %s3, %s250
      $region44: #{down_forward.7} parent=39 // pred_fallthru
        _
    $region40: #{down_forward.7} parent=5 // pred_fallthru
      _
  $region6: #{down_forward.7} parent=0 // loop_footer
    %s13 = sadd.s32 1, %s9
  $region7: #{down_forward.7} parent=0 // loop_footer_branch
    %8 = sbr.rel target = $region3
  $region8: #{down_forward.7} parent=0 // loop_exit
    _

// kernel: down_forward.9
$region0: #{down_forward.9}
  #allocation0 [shape = 'u32[]', space=smem, size = 0x4, offset = 0x4, fixed_abs, tag = 'smem constant byte address 0x4 - core index']
  #allocation1 [shape = 'u32[72,128]{1,0:T(1,128)}', space=vmem, size = 0x9000, scoped, tag = 'internal scratch']
  %s0 = inlined_call_operand.vmem [shape: f32[128,128], index: 0, kind: input, shape index: {}]
  %s1 = inlined_call_operand.vmem [shape: f32[1,128], index: 1, kind: input, shape index: {}]
  %s2 = inlined_call_operand.vmem [shape: f32[1,128], index: 2, kind: input, shape index: {}]
  %s3 = inlined_call_operand.vmem [shape: f32[128,128], index: 3, kind: output, shape index: {}]
  %s4 = sld [smem:[#allocation0]]
  $region45: #{down_forward.9} parent=0
    _
  %s6 = ssub.s32 1, %s4
  %s7 = scalar_select 0, %s6, %s4
  loop: start=0, step=1, limit=4
  $region2: #{down_forward.9} parent=0 // loop_pre_header
    _
  $region3: #{down_forward.9} parent=0 // loop_header
    %s9 = sphi 0, %s13
    %p10 = scmp.ge.s32.totalorder %s9, 4
    %s19 = sphi 0, %s21
    %s22 = sphi 0, %s19
    %s23 = sphi 0, %s22
    %s39 = sphi 0, %s23
    %s43 = sphi 0, %s43
    %s45 = sphi 0, %s43
    %s46 = sphi 0, %s45
    %s60 = sphi 0, %s46
    %s64 = sphi 0, %s64
    %s66 = sphi 0, %s64
    %s67 = sphi 0, %s66
    %s81 = sphi 0, %s67
    %s87 = sphi 0, %s89
    %s90 = sphi 0, %s87
    %s91 = sphi 0, %s90
    %s107 = sphi 0, %s91
  $region4: #{down_forward.9} parent=0 // loop_header_branch
    %12 = sbr.rel (%p10) target = $region8
  $region5: #{down_forward.9} parent=0 // loop_body
    %s14 = ssub.s32 %s9, 1
    %s15 = ssub.s32 %s9, 2
    %s16 = sadd.s32 %s9, 1
    %s17 = ssub.s32 %s9, %s16
    %p18 = scmp.eq.s32.totalorder %s17, 0
    %s20 = sadd.s32 %s19, 1
    %s21 = scalar_select %p18, %s19, %s20
    %p24 = pneg %p18
    %p25 = scmp.eq.s32.totalorder %s9, 1
    %p26 = por %p24, %p25
    %p27 = scmp.ne.s32.totalorder %s19, %s22
    %p28 = scmp.eq.s32.totalorder %s9, 0
    %p29 = por %p27, %p28
    %p30 = scmp.ne.s32.totalorder %s19, %s22
    %p31 = scmp.eq.s32.totalorder %s14, 1
    %p32 = por %p30, %p31
    %p33 = scmp.ne.s32.totalorder %s22, %s23
    %p34 = scmp.eq.s32.totalorder %s14, 0
    %p35 = por %p33, %p34
    %p36 = scmp.ne.s32.totalorder %s22, %s23
    %p37 = scmp.eq.s32.totalorder %s15, 1
    %p38 = por %p36, %p37
    %p40 = scmp.ne.s32.totalorder %s23, %s39
    %p41 = scmp.eq.s32.totalorder %s15, 0
    %p42 = por %p40, %p41
    %s44 = sadd.s32 %s43, 1
    %p47 = scmp.eq.s32.totalorder %s9, 1
    %p48 = scmp.ne.s32.totalorder %s43, %s45
    %p49 = scmp.eq.s32.totalorder %s9, 0
    %p50 = por %p48, %p49
    %p51 = scmp.ne.s32.totalorder %s43, %s45
    %p52 = scmp.eq.s32.totalorder %s14, 1
    %p53 = por %p51, %p52
    %p54 = scmp.ne.s32.totalorder %s45, %s46
    %p55 = scmp.eq.s32.totalorder %s14, 0
    %p56 = por %p54, %p55
    %p57 = scmp.ne.s32.totalorder %s45, %s46
    %p58 = scmp.eq.s32.totalorder %s15, 1
    %p59 = por %p57, %p58
    %p61 = scmp.ne.s32.totalorder %s46, %s60
    %p62 = scmp.eq.s32.totalorder %s15, 0
    %p63 = por %p61, %p62
    %s65 = sadd.s32 %s64, 1
    %p68 = scmp.eq.s32.totalorder %s9, 1
    %p69 = scmp.ne.s32.totalorder %s64, %s66
    %p70 = scmp.eq.s32.totalorder %s9, 0
    %p71 = por %p69, %p70
    %p72 = scmp.ne.s32.totalorder %s64, %s66
    %p73 = scmp.eq.s32.totalorder %s14, 1
    %p74 = por %p72, %p73
    %p75 = scmp.ne.s32.totalorder %s66, %s67
    %p76 = scmp.eq.s32.totalorder %s14, 0
    %p77 = por %p75, %p76
    %p78 = scmp.ne.s32.totalorder %s66, %s67
    %p79 = scmp.eq.s32.totalorder %s15, 1
    %p80 = por %p78, %p79
    %p82 = scmp.ne.s32.totalorder %s67, %s81
    %p83 = scmp.eq.s32.totalorder %s15, 0
    %p84 = por %p82, %p83
    %s85 = ssub.s32 %s9, %s16
    %p86 = scmp.eq.s32.totalorder %s85, 0
    %s88 = sadd.s32 %s87, 1
    %s89 = scalar_select %p86, %s87, %s88
    %p92 = pneg %p86
    %p93 = scmp.eq.s32.totalorder %s9, 1
    %p94 = por %p92, %p93
    %p95 = scmp.ne.s32.totalorder %s87, %s90
    %p96 = scmp.eq.s32.totalorder %s9, 0
    %p97 = por %p95, %p96
    %p98 = scmp.ne.s32.totalorder %s87, %s90
    %p99 = scmp.eq.s32.totalorder %s14, 1
    %p100 = por %p98, %p99
    %p101 = scmp.ne.s32.totalorder %s90, %s91
    %p102 = scmp.eq.s32.totalorder %s14, 0
    %p103 = por %p101, %p102
    %p104 = scmp.ne.s32.totalorder %s90, %s91
    %p105 = scmp.eq.s32.totalorder %s15, 1
    %p106 = por %p104, %p105
    %p108 = scmp.ne.s32.totalorder %s91, %s107
    %p109 = scmp.eq.s32.totalorder %s15, 0
    %p110 = por %p108, %p109
    %p111 = scmp.le.s32.totalorder 1, %s9
    %p112 = scmp.lt.s32.totalorder %s9, 3
    %p113 = pnand %p111, %p112
    %p114 = pneg %p113
    // Predicated region
    $region9: #{down_forward.9} parent=5 // pred_check
      _
    $region10: #{down_forward.9} parent=5 // pred_check_branch
      %116 = sbr.rel (%p113) target = $region12
    $region11: #{down_forward.9} parent=5 // pred_region
      %s117 = ssub.s32 %s9, 1
      // Predicated region
      $region13: #{down_forward.9} parent=11 // pred_check
        %p118 = pneg %p56
      $region14: #{down_forward.9} parent=11 // pred_check_branch
        %120 = sbr.rel (%p118) target = $region16
      $region15: #{down_forward.9} parent=11 // pred_region
        _
      $region16: #{down_forward.9} parent=11 // pred_fallthru
        _
      // Predicated region
      $region17: #{down_forward.9} parent=11 // pred_check
        %p121 = pneg %p77
      $region18: #{down_forward.9} parent=11 // pred_check_branch
        %123 = sbr.rel (%p121) target = $region20
      $region19: #{down_forward.9} parent=11 // pred_region
        _
      $region20: #{down_forward.9} parent=11 // pred_fallthru
        _
    $region12: #{down_forward.9} parent=5 // pred_fallthru
      _
    %p124 = scmp.lt.s32.totalorder %s9, 2
    // Predicated region
    $region21: #{down_forward.9} parent=5 // pred_check
      %p125 = pneg %p124
    $region22: #{down_forward.9} parent=5 // pred_check_branch
      %127 = sbr.rel (%p125) target = $region24
    $region23: #{down_forward.9} parent=5 // pred_region
      // Predicated region
      $region25: #{down_forward.9} parent=23 // pred_check
        %p128 = pneg %p29
      $region26: #{down_forward.9} parent=23 // pred_check_branch
        %130 = sbr.rel (%p128) target = $region28
      $region27: #{down_forward.9} parent=23 // pred_region
        %s131 = smul.u32 8, %s9
        %p132 = scmp.lt.s32.totalorder %s131, 15
        %s133 = scalar_select %p132, %s131, 15
        %s134 = smul.addr %s133, 8
        %s135 = scalar_lea.vmem %s0, %s134
        %s136 = smul.u32 8, %s9
      $region28: #{down_forward.9} parent=23 // pred_fallthru
        _
    $region24: #{down_forward.9} parent=5 // pred_fallthru
      _
    %p137 = scmp.le.s32.totalorder 1, %s9
    %p138 = scmp.lt.s32.totalorder %s9, 3
    %p139 = pnand %p137, %p138
    %p140 = pneg %p139
    // Predicated region
    $region29: #{down_forward.9} parent=5 // pred_check
      _
    $region30: #{down_forward.9} parent=5 // pred_check_branch
      %142 = sbr.rel (%p139) target = $region32
    $region31: #{down_forward.9} parent=5 // pred_region
      %s143 = ssub.s32 %s9, 1
      %s144 = smul.u32 8, %s14
      %p145 = scmp.lt.s32.totalorder %s144, 15
      %s146 = scalar_select %p145, %s144, 15
      %s147 = smul.addr %s146, 8
      %s148 = scalar_lea.vmem %s0, %s147
      %p149 = pneg %p35
      %p150 = pneg %p32
      %p151 = pneg %p56
      %p152 = pneg %p53
      %p153 = pneg %p77
      %p154 = pneg %p74
      %p155 = pneg %p103
      %p156 = pneg %p100
      %s157 = smul.u32 8, %s14
      %p158 = scmp.lt.s32.totalorder %s157, 15
      %s159 = scalar_select %p158, %s157, 15
      %s160 = smul.addr %s159, 8
      %s161 = scalar_lea.vmem %s3, %s160
      %s162 = smul.u32 8, %s14
      %p163 = scmp.lt.s32.totalorder %s162, 15
      %s164 = scalar_select %p163, %s162, 15
      %s165 = smul.addr %s164, 8
      %s166 = scalar_lea.vmem %s0, %s165
      %s167 = smul.u32 8, %s14
      %s168 = smul.u32 8, %s14
      %p169 = scmp.lt.s32.totalorder %s168, 15
      %s170 = scalar_select %p169, %s168, 15
      %s171 = smul.addr %s170, 8
      %s172 = scalar_lea.vmem %s3, %s171
      %s173 = smul.u32 8, %s14
      %v174 = vld [vmem:[%s166] sm:$0xff]
      %v175 = vld [vmem:[%s166 + $0x8] sm:$0xff]
      %v176 = vld [vmem:[%s166 + $0x10] sm:$0xff]
      %v177 = vld [vmem:[%s166 + $0x18] sm:$0xff]
      %v178 = vld [vmem:[%s166 + $0x20] sm:$0xff]
      %v179 = vld [vmem:[%s166 + $0x28] sm:$0xff]
      %v180 = vld [vmem:[%s166 + $0x30] sm:$0xff]
      %v181 = vld [vmem:[%s166 + $0x38] sm:$0xff]
      %v182 = vld [vmem:[%s1] sm:$0x1]
      %v184 = vperm.slane %v182, 0
      %v186 = vmul.f32 %v174, %v184
      %v187 = vmul.f32 %v175, %v184
      %v188 = vmul.f32 %v176, %v184
      %v189 = vmul.f32 %v177, %v184
      %v190 = vmul.f32 %v178, %v184
      %v191 = vmul.f32 %v179, %v184
      %v192 = vmul.f32 %v180, %v184
      %v193 = vmul.f32 %v181, %v184
      %v194 = vld [vmem:[%s2] sm:$0x1]
      %v196 = vperm.slane %v194, 0
      %v198 = vadd.f32 %v186, %v196
      %v199 = vadd.f32 %v187, %v196
      %v200 = vadd.f32 %v188, %v196
      %v201 = vadd.f32 %v189, %v196
      %v202 = vadd.f32 %v190, %v196
      %v203 = vadd.f32 %v191, %v196
      %v204 = vadd.f32 %v192, %v196
      %v205 = vadd.f32 %v193, %v196
      %v206 = vmax.f32 %v198, 0.0
      %v207 = vmax.f32 %v199, 0.0
      %v208 = vmax.f32 %v200, 0.0
      %v209 = vmax.f32 %v201, 0.0
      %v210 = vmax.f32 %v202, 0.0
      %v211 = vmax.f32 %v203, 0.0
      %v212 = vmax.f32 %v204, 0.0
      %v213 = vmax.f32 %v205, 0.0
      %214 = vst [vmem:[%s172] sm:$0xff] %v206
      %215 = vst [vmem:[%s172 + $0x8] sm:$0xff] %v207
      %216 = vst [vmem:[%s172 + $0x10] sm:$0xff] %v208
      %217 = vst [vmem:[%s172 + $0x18] sm:$0xff] %v209
      %218 = vst [vmem:[%s172 + $0x20] sm:$0xff] %v210
      %219 = vst [vmem:[%s172 + $0x28] sm:$0xff] %v211
      %220 = vst [vmem:[%s172 + $0x30] sm:$0xff] %v212
      %221 = vst [vmem:[%s172 + $0x38] sm:$0xff] %v213
      %s222 = smul.u32 8, %s14
      %p223 = scmp.lt.s32.totalorder %s222, 15
      %s224 = scalar_select %p223, %s222, 15
      %s225 = smul.addr %s224, 8
      %s226 = scalar_lea.vmem %s3, %s225
      // Predicated region
      $region33: #{down_forward.9} parent=31 // pred_check
        %p227 = pneg %p100
      $region34: #{down_forward.9} parent=31 // pred_check_branch
        %229 = sbr.rel (%p227) target = $region36
      $region35: #{down_forward.9} parent=31 // pred_region
        %s230 = smul.u32 8, %s14
      $region36: #{down_forward.9} parent=31 // pred_fallthru
        _
    $region32: #{down_forward.9} parent=5 // pred_fallthru
      _
    %p231 = scmp.le.s32.totalorder 2, %s9
    // Predicated region
    $region37: #{down_forward.9} parent=5 // pred_check
      %p232 = pneg %p231
    $region38: #{down_forward.9} parent=5 // pred_check_branch
      %234 = sbr.rel (%p232) target = $region40
    $region39: #{down_forward.9} parent=5 // pred_region
      %s235 = ssub.s32 %s9, 2
      // Predicated region
      $region41: #{down_forward.9} parent=39 // pred_check
        %p236 = pneg %p106
      $region42: #{down_forward.9} parent=39 // pred_check_branch
        %238 = sbr.rel (%p236) target = $region44
      $region43: #{down_forward.9} parent=39 // pred_region
        %s239 = smul.u32 8, %s15
        %p240 = scmp.lt.s32.totalorder %s239, 15
        %s241 = scalar_select %p240, %s239, 15
        %s242 = smul.addr %s241, 8
        %s243 = scalar_lea.vmem %s3, %s242
      $region44: #{down_forward.9} parent=39 // pred_fallthru
        _
    $region40: #{down_forward.9} parent=5 // pred_fallthru
      _
  $region6: #{down_forward.9} parent=0 // loop_footer
    %s13 = sadd.s32 1, %s9
  $region7: #{down_forward.9} parent=0 // loop_footer_branch
    %8 = sbr.rel target = $region3
  $region8: #{down_forward.9} parent=0 // loop_exit
    _

// kernel: down_forward.8
$region0: #{down_forward.8}
  #allocation0 [shape = 'u32[]', space=smem, size = 0x4, offset = 0x4, fixed_abs, tag = 'smem constant byte address 0x4 - core index']
  #allocation1 [shape = 'u32[72,128]{1,0:T(1,128)}', space=vmem, size = 0x9000, scoped, tag = 'internal scratch']
  %s0 = inlined_call_operand.vmem [shape: bf16[1024,432], index: 0, kind: input, shape index: {}]
  %s1 = inlined_call_operand.vmem [shape: bf16[432,16], index: 1, kind: input, shape index: {}]
  %s2 = inlined_call_operand.vmem [shape: f32[1,16], index: 2, kind: input, shape index: {}]
  %s3 = inlined_call_operand.vmem [shape: f32[1024,16], index: 3, kind: output, shape index: {0}]
  %s4 = inlined_call_operand.vmem [shape: f32[2,1,16], index: 4, kind: output, shape index: {1}]
  %s5 = inlined_call_operand.vmem [shape: f32[2,1,16], index: 5, kind: output, shape index: {2}]
  %6 = xla_tuple %s3, %s4, %s5
  %s7 = sld [smem:[#allocation0]]
  $region61: #{down_forward.8} parent=0
    _
  %s9 = ssub.s32 1, %s7
  %s10 = scalar_select 0, %s9, %s7
  loop: start=0, step=1, limit=4
  $region2: #{down_forward.8} parent=0 // loop_pre_header
    _
  $region3: #{down_forward.8} parent=0 // loop_header
    %s12 = sphi 0, %s16
    %p13 = scmp.ge.s32.totalorder %s12, 4
    %s22 = sphi 0, %s24
    %s25 = sphi 0, %s22
    %s26 = sphi 0, %s25
    %s42 = sphi 0, %s26
    %s46 = sphi 0, %s46
    %s48 = sphi 0, %s46
    %s49 = sphi 0, %s48
    %s63 = sphi 0, %s49
    %s67 = sphi 0, %s67
    %s69 = sphi 0, %s67
    %s70 = sphi 0, %s69
    %s84 = sphi 0, %s70
    %s90 = sphi 0, %s92
    %s93 = sphi 0, %s90
    %s94 = sphi 0, %s93
    %s110 = sphi 0, %s94
    %s116 = sphi 0, %s118
    %s119 = sphi 0, %s116
    %s120 = sphi 0, %s119
    %s136 = sphi 0, %s120
    %s142 = sphi 0, %s144
    %s145 = sphi 0, %s142
    %s146 = sphi 0, %s145
    %s162 = sphi 0, %s146
  $region4: #{down_forward.8} parent=0 // loop_header_branch
    %15 = sbr.rel (%p13) target = $region8
  $region5: #{down_forward.8} parent=0 // loop_body
    %s17 = ssub.s32 %s12, 1
    %s18 = ssub.s32 %s12, 2
    %s19 = sadd.s32 %s12, 1
    %s20 = ssub.s32 %s12, %s19
    %p21 = scmp.eq.s32.totalorder %s20, 0
    %s23 = sadd.s32 %s22, 1
    %s24 = scalar_select %p21, %s22, %s23
    %p27 = pneg %p21
    %p28 = scmp.eq.s32.totalorder %s12, 1
    %p29 = por %p27, %p28
    %p30 = scmp.ne.s32.totalorder %s22, %s25
    %p31 = scmp.eq.s32.totalorder %s12, 0
    %p32 = por %p30, %p31
    %p33 = scmp.ne.s32.totalorder %s22, %s25
    %p34 = scmp.eq.s32.totalorder %s17, 1
    %p35 = por %p33, %p34
    %p36 = scmp.ne.s32.totalorder %s25, %s26
    %p37 = scmp.eq.s32.totalorder %s17, 0
    %p38 = por %p36, %p37
    %p39 = scmp.ne.s32.totalorder %s25, %s26
    %p40 = scmp.eq.s32.totalorder %s18, 1
    %p41 = por %p39, %p40
    %p43 = scmp.ne.s32.totalorder %s26, %s42
    %p44 = scmp.eq.s32.totalorder %s18, 0
    %p45 = por %p43, %p44
    %s47 = sadd.s32 %s46, 1
    %p50 = scmp.eq.s32.totalorder %s12, 1
    %p51 = scmp.ne.s32.totalorder %s46, %s48
    %p52 = scmp.eq.s32.totalorder %s12, 0
    %p53 = por %p51, %p52
    %p54 = scmp.ne.s32.totalorder %s46, %s48
    %p55 = scmp.eq.s32.totalorder %s17, 1
    %p56 = por %p54, %p55
    %p57 = scmp.ne.s32.totalorder %s48, %s49
    %p58 = scmp.eq.s32.totalorder %s17, 0
    %p59 = por %p57, %p58
    %p60 = scmp.ne.s32.totalorder %s48, %s49
    %p61 = scmp.eq.s32.totalorder %s18, 1
    %p62 = por %p60, %p61
    %p64 = scmp.ne.s32.totalorder %s49, %s63
    %p65 = scmp.eq.s32.totalorder %s18, 0
    %p66 = por %p64, %p65
    %s68 = sadd.s32 %s67, 1
    %p71 = scmp.eq.s32.totalorder %s12, 1
    %p72 = scmp.ne.s32.totalorder %s67, %s69
    %p73 = scmp.eq.s32.totalorder %s12, 0
    %p74 = por %p72, %p73
    %p75 = scmp.ne.s32.totalorder %s67, %s69
    %p76 = scmp.eq.s32.totalorder %s17, 1
    %p77 = por %p75, %p76
    %p78 = scmp.ne.s32.totalorder %s69, %s70
    %p79 = scmp.eq.s32.totalorder %s17, 0
    %p80 = por %p78, %p79
    %p81 = scmp.ne.s32.totalorder %s69, %s70
    %p82 = scmp.eq.s32.totalorder %s18, 1
    %p83 = por %p81, %p82
    %p85 = scmp.ne.s32.totalorder %s70, %s84
    %p86 = scmp.eq.s32.totalorder %s18, 0
    %p87 = por %p85, %p86
    %s88 = ssub.s32 %s12, %s19
    %p89 = scmp.eq.s32.totalorder %s88, 0
    %s91 = sadd.s32 %s90, 1
    %s92 = scalar_select %p89, %s90, %s91
    %p95 = pneg %p89
    %p96 = scmp.eq.s32.totalorder %s12, 1
    %p97 = por %p95, %p96
    %p98 = scmp.ne.s32.totalorder %s90, %s93
    %p99 = scmp.eq.s32.totalorder %s12, 0
    %p100 = por %p98, %p99
    %p101 = scmp.ne.s32.totalorder %s90, %s93
    %p102 = scmp.eq.s32.totalorder %s17, 1
    %p103 = por %p101, %p102
    %p104 = scmp.ne.s32.totalorder %s93, %s94
    %p105 = scmp.eq.s32.totalorder %s17, 0
    %p106 = por %p104, %p105
    %p107 = scmp.ne.s32.totalorder %s93, %s94
    %p108 = scmp.eq.s32.totalorder %s18, 1
    %p109 = por %p107, %p108
    %p111 = scmp.ne.s32.totalorder %s94, %s110
    %p112 = scmp.eq.s32.totalorder %s18, 0
    %p113 = por %p111, %p112
    %s114 = ssub.s32 %s12, %s19
    %p115 = scmp.eq.s32.totalorder %s114, 0
    %s117 = sadd.s32 %s116, 1
    %s118 = scalar_select %p115, %s116, %s117
    %p121 = pneg %p115
    %p122 = scmp.eq.s32.totalorder %s12, 1
    %p123 = por %p121, %p122
    %p124 = scmp.ne.s32.totalorder %s116, %s119
    %p125 = scmp.eq.s32.totalorder %s12, 0
    %p126 = por %p124, %p125
    %p127 = scmp.ne.s32.totalorder %s116, %s119
    %p128 = scmp.eq.s32.totalorder %s17, 1
    %p129 = por %p127, %p128
    %p130 = scmp.ne.s32.totalorder %s119, %s120
    %p131 = scmp.eq.s32.totalorder %s17, 0
    %p132 = por %p130, %p131
    %p133 = scmp.ne.s32.totalorder %s119, %s120
    %p134 = scmp.eq.s32.totalorder %s18, 1
    %p135 = por %p133, %p134
    %p137 = scmp.ne.s32.totalorder %s120, %s136
    %p138 = scmp.eq.s32.totalorder %s18, 0
    %p139 = por %p137, %p138
    %s140 = ssub.s32 %s12, %s19
    %p141 = scmp.eq.s32.totalorder %s140, 0
    %s143 = sadd.s32 %s142, 1
    %s144 = scalar_select %p141, %s142, %s143
    %p147 = pneg %p141
    %p148 = scmp.eq.s32.totalorder %s12, 1
    %p149 = por %p147, %p148
    %p150 = scmp.ne.s32.totalorder %s142, %s145
    %p151 = scmp.eq.s32.totalorder %s12, 0
    %p152 = por %p150, %p151
    %p153 = scmp.ne.s32.totalorder %s142, %s145
    %p154 = scmp.eq.s32.totalorder %s17, 1
    %p155 = por %p153, %p154
    %p156 = scmp.ne.s32.totalorder %s145, %s146
    %p157 = scmp.eq.s32.totalorder %s17, 0
    %p158 = por %p156, %p157
    %p159 = scmp.ne.s32.totalorder %s145, %s146
    %p160 = scmp.eq.s32.totalorder %s18, 1
    %p161 = por %p159, %p160
    %p163 = scmp.ne.s32.totalorder %s146, %s162
    %p164 = scmp.eq.s32.totalorder %s18, 0
    %p165 = por %p163, %p164
    %p166 = scmp.le.s32.totalorder 1, %s12
    %p167 = scmp.lt.s32.totalorder %s12, 3
    %p168 = pnand %p166, %p167
    %p169 = pneg %p168
    // Predicated region
    $region9: #{down_forward.8} parent=5 // pred_check
      _
    $region10: #{down_forward.8} parent=5 // pred_check_branch
      %171 = sbr.rel (%p168) target = $region12
    $region11: #{down_forward.8} parent=5 // pred_region
      %s172 = ssub.s32 %s12, 1
      // Predicated region
      $region13: #{down_forward.8} parent=11 // pred_check
        %p173 = pneg %p59
      $region14: #{down_forward.8} parent=11 // pred_check_branch
        %175 = sbr.rel (%p173) target = $region16
      $region15: #{down_forward.8} parent=11 // pred_region
        _
      $region16: #{down_forward.8} parent=11 // pred_fallthru
        _
      // Predicated region
      $region17: #{down_forward.8} parent=11 // pred_check
        %p176 = pneg %p80
      $region18: #{down_forward.8} parent=11 // pred_check_branch
        %178 = sbr.rel (%p176) target = $region20
      $region19: #{down_forward.8} parent=11 // pred_region
        _
      $region20: #{down_forward.8} parent=11 // pred_fallthru
        _
    $region12: #{down_forward.8} parent=5 // pred_fallthru
      _
    %p179 = scmp.lt.s32.totalorder %s12, 2
    // Predicated region
    $region21: #{down_forward.8} parent=5 // pred_check
      %p180 = pneg %p179
    $region22: #{down_forward.8} parent=5 // pred_check_branch
      %182 = sbr.rel (%p180) target = $region24
    $region23: #{down_forward.8} parent=5 // pred_region
      // Predicated region
      $region25: #{down_forward.8} parent=23 // pred_check
        %p183 = pneg %p32
      $region26: #{down_forward.8} parent=23 // pred_check_branch
        %185 = sbr.rel (%p183) target = $region28
      $region27: #{down_forward.8} parent=23 // pred_region
        %s186 = smul.u32 64, %s12
        %p187 = scmp.lt.s32.totalorder %s186, 127
        %s188 = scalar_select %p187, %s186, 127
        %s189 = smul.addr %s188, 4
        %s190 = smul.addr %s189, 4
        %s191 = scalar_lea.vmem %s0, %s190
        %s192 = smul.u32 64, %s12
      $region28: #{down_forward.8} parent=23 // pred_fallthru
        _
    $region24: #{down_forward.8} parent=5 // pred_fallthru
      _
    %p193 = scmp.le.s32.totalorder 1, %s12
    %p194 = scmp.lt.s32.totalorder %s12, 3
    %p195 = pnand %p193, %p194
    %p196 = pneg %p195
    // Predicated region
    $region29: #{down_forward.8} parent=5 // pred_check
      _
    $region30: #{down_forward.8} parent=5 // pred_check_branch
      %198 = sbr.rel (%p195) target = $region32
    $region31: #{down_forward.8} parent=5 // pred_region
      %s199 = ssub.s32 %s12, 1
      %s200 = smul.u32 64, %s17
      %p201 = scmp.lt.s32.totalorder %s200, 127
      %s202 = scalar_select %p201, %s200, 127
      %s203 = smul.addr %s202, 4
      %s204 = smul.addr %s203, 4
      %s205 = scalar_lea.vmem %s0, %s204
      %p206 = pneg %p38
      %p207 = pneg %p35
      %p208 = pneg %p59
      %p209 = pneg %p56
      %p210 = pneg %p80
      %p211 = pneg %p77
      %p212 = pneg %p106
      %p213 = pneg %p103
      %s214 = smul.u32 64, %s17
      %p215 = scmp.lt.s32.totalorder %s214, 127
      %s216 = scalar_select %p215, %s214, 127
      %s217 = smul.addr %s216, 8
      %s218 = scalar_lea.vmem %s3, %s217
      %p219 = pneg %p132
      %p220 = pneg %p129
      %p221 = scmp.lt.s32.totalorder %s17, 1
      %s222 = scalar_select %p221, %s17, 1
      %s223 = scalar_lea.vmem %s4, %s222
      %p224 = pneg %p158
      %p225 = pneg %p155
      %p226 = scmp.lt.s32.totalorder %s17, 1
      %s227 = scalar_select %p226, %s17, 1
      %s228 = scalar_lea.vmem %s5, %s227
      %s229 = smul.u32 64, %s17
      %p230 = scmp.lt.s32.totalorder %s229, 127
      %s231 = scalar_select %p230, %s229, 127
      %s232 = smul.addr %s231, 4
      %s233 = smul.addr %s232, 4
      %s234 = scalar_lea.vmem %s0, %s233
      %s235 = smul.u32 64, %s17
      %s236 = smul.u32 64, %s17
      %p237 = scmp.lt.s32.totalorder %s236, 127
      %s238 = scalar_select %p237, %s236, 127
      %s239 = smul.addr %s238, 8
      %s240 = scalar_lea.vmem %s3, %s239
      %s241 = smul.u32 64, %s17
      %p242 = scmp.lt.s32.totalorder %s17, 1
      %s243 = scalar_select %p242, %s17, 1
      %s244 = scalar_lea.vmem %s4, %s243
      %p245 = scmp.lt.s32.totalorder %s17, 1
      %s246 = scalar_select %p245, %s17, 1
      %s247 = scalar_lea.vmem %s5, %s246
      %v249 = vld [vmem:[%s234] sm:$0xff]
      %v250 = vld [vmem:[%s234 + $0x8] sm:$0xff]
      %v251 = vld [vmem:[%s234 + $0x10] sm:$0xff]
      %v252 = vld [vmem:[%s234 + $0x18] sm:$0xff]
      %v253 = vld [vmem:[%s234 + $0x20] sm:$0xff]
      %v254 = vld [vmem:[%s234 + $0x28] sm:$0xff]
      %v255 = vld [vmem:[%s234 + $0x30] sm:$0xff]
      %v256 = vld [vmem:[%s234 + $0x38] sm:$0xff]
      %v257 = vld [vmem:[%s234 + $0x40] sm:$0xff]
      %v258 = vld [vmem:[%s234 + $0x48] sm:$0xff]
      %v259 = vld [vmem:[%s234 + $0x50] sm:$0xff]
      %v260 = vld [vmem:[%s234 + $0x58] sm:$0xff]
      %v261 = vld [vmem:[%s234 + $0x60] sm:$0xff]
      %v262 = vld [vmem:[%s234 + $0x68] sm:$0xff]
      %v263 = vld [vmem:[%s234 + $0x70] sm:$0xff]
      %v264 = vld [vmem:[%s234 + $0x78] sm:$0xff]
      %v265 = vld [vmem:[%s234 + $0x80] sm:$0xff]
      %v266 = vld [vmem:[%s234 + $0x88] sm:$0xff]
      %v267 = vld [vmem:[%s234 + $0x90] sm:$0xff]
      %v268 = vld [vmem:[%s234 + $0x98] sm:$0xff]
      %v269 = vld [vmem:[%s234 + $0xa0] sm:$0xff]
      %v270 = vld [vmem:[%s234 + $0xa8] sm:$0xff]
      %v271 = vld [vmem:[%s234 + $0xb0] sm:$0xff]
      %v272 = vld [vmem:[%s234 + $0xb8] sm:$0xff]
      %v273 = vld [vmem:[%s234 + $0xc0] sm:$0xff]
      %v274 = vld [vmem:[%s234 + $0xc8] sm:$0xff]
      %v275 = vld [vmem:[%s234 + $0xd0] sm:$0xff]
      %v276 = vld [vmem:[%s234 + $0xd8] sm:$0xff]
      %v277 = vld [vmem:[%s234 + $0xe0] sm:$0xff]
      %v278 = vld [vmem:[%s234 + $0xe8] sm:$0xff]
      %v279 = vld [vmem:[%s234 + $0xf0] sm:$0xff]
      %v280 = vld [vmem:[%s234 + $0xf8] sm:$0xff]
      %v281 = vld [vmem:[%s234 + $0x100] sm:$0xff]
      %v282 = vld [vmem:[%s234 + $0x108] sm:$0xff]
      %v283 = vld [vmem:[%s234 + $0x110] sm:$0xff]
      %v284 = vld [vmem:[%s234 + $0x118] sm:$0xff]
      %v285 = vld [vmem:[%s234 + $0x120] sm:$0xff]
      %v286 = vld [vmem:[%s234 + $0x128] sm:$0xff]
      %v287 = vld [vmem:[%s234 + $0x130] sm:$0xff]
      %v288 = vld [vmem:[%s234 + $0x138] sm:$0xff]
      %v289 = vld [vmem:[%s234 + $0x140] sm:$0xff]
      %v290 = vld [vmem:[%s234 + $0x148] sm:$0xff]
      %v291 = vld [vmem:[%s234 + $0x150] sm:$0xff]
      %v292 = vld [vmem:[%s234 + $0x158] sm:$0xff]
      %v293 = vld [vmem:[%s234 + $0x160] sm:$0xff]
      %v294 = vld [vmem:[%s234 + $0x168] sm:$0xff]
      %v295 = vld [vmem:[%s234 + $0x170] sm:$0xff]
      %v296 = vld [vmem:[%s234 + $0x178] sm:$0xff]
      %v297 = vld [vmem:[%s234 + $0x180] sm:$0xff]
      %v298 = vld [vmem:[%s234 + $0x188] sm:$0xff]
      %v299 = vld [vmem:[%s234 + $0x190] sm:$0xff]
      %v300 = vld [vmem:[%s234 + $0x198] sm:$0xff]
      %v301 = vld [vmem:[%s234 + $0x1a0] sm:$0xff]
      %v302 = vld [vmem:[%s234 + $0x1a8] sm:$0xff]
      %v303 = vld [vmem:[%s234 + $0x1b0] sm:$0xff]
      %v304 = vld [vmem:[%s234 + $0x1b8] sm:$0xff]
      %v305 = vld [vmem:[%s234 + $0x1c0] sm:$0xff]
      %v306 = vld [vmem:[%s234 + $0x1c8] sm:$0xff]
      %v307 = vld [vmem:[%s234 + $0x1d0] sm:$0xff]
      %v308 = vld [vmem:[%s234 + $0x1d8] sm:$0xff]
      %v309 = vld [vmem:[%s234 + $0x1e0] sm:$0xff]
      %v310 = vld [vmem:[%s234 + $0x1e8] sm:$0xff]
      %v311 = vld [vmem:[%s234 + $0x1f0] sm:$0xff]
      %v312 = vld [vmem:[%s234 + $0x1f8] sm:$0xff]
      %v313 = vld [vmem:[%s234 + $0x200] sm:$0xff]
      %v314 = vld [vmem:[%s234 + $0x208] sm:$0xff]
      %v315 = vld [vmem:[%s234 + $0x210] sm:$0xff]
      %v316 = vld [vmem:[%s234 + $0x218] sm:$0xff]
      %v317 = vld [vmem:[%s234 + $0x220] sm:$0xff]
      %v318 = vld [vmem:[%s234 + $0x228] sm:$0xff]
      %v319 = vld [vmem:[%s234 + $0x230] sm:$0xff]
      %v320 = vld [vmem:[%s234 + $0x238] sm:$0xff]
      %v321 = vld [vmem:[%s234 + $0x240] sm:$0xff]
      %v322 = vld [vmem:[%s234 + $0x248] sm:$0xff]
      %v323 = vld [vmem:[%s234 + $0x250] sm:$0xff]
      %v324 = vld [vmem:[%s234 + $0x258] sm:$0xff]
      %v325 = vld [vmem:[%s234 + $0x260] sm:$0xff]
      %v326 = vld [vmem:[%s234 + $0x268] sm:$0xff]
      %v327 = vld [vmem:[%s234 + $0x270] sm:$0xff]
      %v328 = vld [vmem:[%s234 + $0x278] sm:$0xff]
      %v329 = vld [vmem:[%s234 + $0x280] sm:$0xff]
      %v330 = vld [vmem:[%s234 + $0x288] sm:$0xff]
      %v331 = vld [vmem:[%s234 + $0x290] sm:$0xff]
      %v332 = vld [vmem:[%s234 + $0x298] sm:$0xff]
      %v333 = vld [vmem:[%s234 + $0x2a0] sm:$0xff]
      %v334 = vld [vmem:[%s234 + $0x2a8] sm:$0xff]
      %v335 = vld [vmem:[%s234 + $0x2b0] sm:$0xff]
      %v336 = vld [vmem:[%s234 + $0x2b8] sm:$0xff]
      %v337 = vld [vmem:[%s234 + $0x2c0] sm:$0xff]
      %v338 = vld [vmem:[%s234 + $0x2c8] sm:$0xff]
      %v339 = vld [vmem:[%s234 + $0x2d0] sm:$0xff]
      %v340 = vld [vmem:[%s234 + $0x2d8] sm:$0xff]
      %v341 = vld [vmem:[%s234 + $0x2e0] sm:$0xff]
      %v342 = vld [vmem:[%s234 + $0x2e8] sm:$0xff]
      %v343 = vld [vmem:[%s234 + $0x2f0] sm:$0xff]
      %v344 = vld [vmem:[%s234 + $0x2f8] sm:$0xff]
      %v345 = vld [vmem:[%s234 + $0x300] sm:$0xff]
      %v346 = vld [vmem:[%s234 + $0x308] sm:$0xff]
      %v347 = vld [vmem:[%s234 + $0x310] sm:$0xff]
      %v348 = vld [vmem:[%s234 + $0x318] sm:$0xff]
      %v349 = vld [vmem:[%s234 + $0x320] sm:$0xff]
      %v350 = vld [vmem:[%s234 + $0x328] sm:$0xff]
      %v351 = vld [vmem:[%s234 + $0x330] sm:$0xff]
      %v352 = vld [vmem:[%s234 + $0x338] sm:$0xff]
      %v353 = vld [vmem:[%s234 + $0x340] sm:$0xff]
      %v354 = vld [vmem:[%s234 + $0x348] sm:$0xff]
      %v355 = vld [vmem:[%s234 + $0x350] sm:$0xff]
      %v356 = vld [vmem:[%s234 + $0x358] sm:$0xff]
      %v357 = vld [vmem:[%s234 + $0x360] sm:$0xff]
      %v358 = vld [vmem:[%s234 + $0x368] sm:$0xff]
      %v359 = vld [vmem:[%s234 + $0x370] sm:$0xff]
      %v360 = vld [vmem:[%s234 + $0x378] sm:$0xff]
      %v361 = vld [vmem:[%s234 + $0x380] sm:$0xff]
      %v362 = vld [vmem:[%s234 + $0x388] sm:$0xff]
      %v363 = vld [vmem:[%s234 + $0x390] sm:$0xff]
      %v364 = vld [vmem:[%s234 + $0x398] sm:$0xff]
      %v365 = vld [vmem:[%s234 + $0x3a0] sm:$0xff]
      %v366 = vld [vmem:[%s234 + $0x3a8] sm:$0xff]
      %v367 = vld [vmem:[%s234 + $0x3b0] sm:$0xff]
      %v368 = vld [vmem:[%s234 + $0x3b8] sm:$0xff]
      %v369 = vld [vmem:[%s234 + $0x3c0] sm:$0xff]
      %v370 = vld [vmem:[%s234 + $0x3c8] sm:$0xff]
      %v371 = vld [vmem:[%s234 + $0x3d0] sm:$0xff]
      %v372 = vld [vmem:[%s234 + $0x3d8] sm:$0xff]
      %v373 = vld [vmem:[%s234 + $0x3e0] sm:$0xff]
      %v374 = vld [vmem:[%s234 + $0x3e8] sm:$0xff]
      %v375 = vld [vmem:[%s234 + $0x3f0] sm:$0xff]
      %v376 = vld [vmem:[%s234 + $0x3f8] sm:$0xff]
      %v377 = vld [vmem:[%s1] sm:$0xf]
      %v378 = vld [vmem:[%s1 + $0x4] sm:$0xf]
      %v379 = vld [vmem:[%s1 + $0x8] sm:$0xf]
      %v380 = vld [vmem:[%s1 + $0xc] sm:$0xf]
      %v381 = vld [vmem:[%s1 + $0x10] sm:$0xf]
      %v382 = vld [vmem:[%s1 + $0x14] sm:$0xf]
      %v383 = vld [vmem:[%s1 + $0x18] sm:$0xf]
      %v384 = vld [vmem:[%s1 + $0x1c] sm:$0xf]
      %v385 = vld [vmem:[%s1 + $0x20] sm:$0xf]
      %v386 = vld [vmem:[%s1 + $0x24] sm:$0xf]
      %v387 = vld [vmem:[%s1 + $0x28] sm:$0xf]
      %v388 = vld [vmem:[%s1 + $0x2c] sm:$0xf]
      %v389 = vld [vmem:[%s1 + $0x30] sm:$0xf]
      %v390 = vld [vmem:[%s1 + $0x34] sm:$0xf]
      %v391 = vld [vmem:[%s1 + $0x38] sm:$0xf]
      %v392 = vld [vmem:[%s1 + $0x3c] sm:$0xf]
      %v393 = vld [vmem:[%s1 + $0x40] sm:$0xf]
      %v394 = vld [vmem:[%s1 + $0x44] sm:$0xf]
      %v395 = vld [vmem:[%s1 + $0x48] sm:$0xf]
      %v396 = vld [vmem:[%s1 + $0x4c] sm:$0xf]
      %v397 = vld [vmem:[%s1 + $0x50] sm:$0xf]
      %v398 = vld [vmem:[%s1 + $0x54] sm:$0xf]
      %v399 = vld [vmem:[%s1 + $0x58] sm:$0xf]
      %v400 = vld [vmem:[%s1 + $0x5c] sm:$0xf]
      %v401 = vld [vmem:[%s1 + $0x60] sm:$0xf]
      %v402 = vld [vmem:[%s1 + $0x64] sm:$0xf]
      %v403 = vld [vmem:[%s1 + $0x68] sm:$0xf]
      %v404 = vld [vmem:[%s1 + $0x6c] sm:$0xf]
      %v405 = vld [vmem:[%s1 + $0x70] sm:$0xf]
      %v406 = vld [vmem:[%s1 + $0x74] sm:$0xf]
      %v407 = vld [vmem:[%s1 + $0x78] sm:$0xf]
      %v408 = vld [vmem:[%s1 + $0x7c] sm:$0xf]
      %v409 = vld [vmem:[%s1 + $0x80] sm:$0xf]
      %v410 = vld [vmem:[%s1 + $0x84] sm:$0xf]
      %v411 = vld [vmem:[%s1 + $0x88] sm:$0xf]
      %v412 = vld [vmem:[%s1 + $0x8c] sm:$0xf]
      %v413 = vld [vmem:[%s1 + $0x90] sm:$0xf]
      %v414 = vld [vmem:[%s1 + $0x94] sm:$0xf]
      %v415 = vld [vmem:[%s1 + $0x98] sm:$0xf]
      %v416 = vld [vmem:[%s1 + $0x9c] sm:$0xf]
      %v417 = vld [vmem:[%s1 + $0xa0] sm:$0xf]
      %v418 = vld [vmem:[%s1 + $0xa4] sm:$0xf]
      %v419 = vld [vmem:[%s1 + $0xa8] sm:$0xf]
      %v420 = vld [vmem:[%s1 + $0xac] sm:$0xf]
      %v421 = vld [vmem:[%s1 + $0xb0] sm:$0xf]
      %v422 = vld [vmem:[%s1 + $0xb4] sm:$0xf]
      %v423 = vld [vmem:[%s1 + $0xb8] sm:$0xf]
      %v424 = vld [vmem:[%s1 + $0xbc] sm:$0xf]
      %v425 = vld [vmem:[%s1 + $0xc0] sm:$0xf]
      %v426 = vld [vmem:[%s1 + $0xc4] sm:$0xf]
      %v427 = vld [vmem:[%s1 + $0xc8] sm:$0xf]
      %v428 = vld [vmem:[%s1 + $0xcc] sm:$0xf]
      %v429 = vld [vmem:[%s1 + $0xd0] sm:$0xf]
      %v430 = vld [vmem:[%s1 + $0xd4] sm:$0xf]
      %v559 = vunpack.c.l.b16 %v249
      %v560 = vunpack.c.h.b16 %v249
      %v561 = vunpack.c.l.b16 %v250
      %v562 = vunpack.c.h.b16 %v250
      %v563 = vunpack.c.l.b16 %v251
      %v564 = vunpack.c.h.b16 %v251
      %v565 = vunpack.c.l.b16 %v252
      %v566 = vunpack.c.h.b16 %v252
      %v567 = vunpack.c.l.b16 %v253
      %v568 = vunpack.c.h.b16 %v253
      %v569 = vunpack.c.l.b16 %v254
      %v570 = vunpack.c.h.b16 %v254
      %v571 = vunpack.c.l.b16 %v255
      %v572 = vunpack.c.h.b16 %v255
      %v573 = vunpack.c.l.b16 %v256
      %v574 = vunpack.c.h.b16 %v256
      %v575 = vunpack.c.l.b16 %v257
      %v576 = vunpack.c.h.b16 %v257
      %v577 = vunpack.c.l.b16 %v258
      %v578 = vunpack.c.h.b16 %v258
      %v579 = vunpack.c.l.b16 %v259
      %v580 = vunpack.c.h.b16 %v259
      %v581 = vunpack.c.l.b16 %v260
      %v582 = vunpack.c.h.b16 %v260
      %v583 = vunpack.c.l.b16 %v261
      %v584 = vunpack.c.h.b16 %v261
      %v585 = vunpack.c.l.b16 %v262
      %v586 = vunpack.c.h.b16 %v262
      %v587 = vunpack.c.l.b16 %v263
      %v588 = vunpack.c.h.b16 %v263
      %v589 = vunpack.c.l.b16 %v264
      %v590 = vunpack.c.h.b16 %v264
      %v591 = vunpack.c.l.b16 %v265
      %v592 = vunpack.c.h.b16 %v265
      %v593 = vunpack.c.l.b16 %v266
      %v594 = vunpack.c.h.b16 %v266
      %v595 = vunpack.c.l.b16 %v267
      %v596 = vunpack.c.h.b16 %v267
      %v597 = vunpack.c.l.b16 %v268
      %v598 = vunpack.c.h.b16 %v268
      %v599 = vunpack.c.l.b16 %v269
      %v600 = vunpack.c.h.b16 %v269
      %v601 = vunpack.c.l.b16 %v270
      %v602 = vunpack.c.h.b16 %v270
      %v603 = vunpack.c.l.b16 %v271
      %v604 = vunpack.c.h.b16 %v271
      %v605 = vunpack.c.l.b16 %v272
      %v606 = vunpack.c.h.b16 %v272
      %v607 = vunpack.c.l.b16 %v273
      %v608 = vunpack.c.h.b16 %v273
      %v609 = vunpack.c.l.b16 %v274
      %v610 = vunpack.c.h.b16 %v274
      %v611 = vunpack.c.l.b16 %v275
      %v612 = vunpack.c.h.b16 %v275
      %v613 = vunpack.c.l.b16 %v276
      %v614 = vunpack.c.h.b16 %v276
      %v615 = vunpack.c.l.b16 %v277
      %v616 = vunpack.c.h.b16 %v277
      %v617 = vunpack.c.l.b16 %v278
      %v618 = vunpack.c.h.b16 %v278
      %v619 = vunpack.c.l.b16 %v279
      %v620 = vunpack.c.h.b16 %v279
      %v621 = vunpack.c.l.b16 %v280
      %v622 = vunpack.c.h.b16 %v280
      %v623 = vunpack.c.l.b16 %v281
      %v624 = vunpack.c.h.b16 %v281
      %v625 = vunpack.c.l.b16 %v282
      %v626 = vunpack.c.h.b16 %v282
      %v627 = vunpack.c.l.b16 %v283
      %v628 = vunpack.c.h.b16 %v283
      %v629 = vunpack.c.l.b16 %v284
      %v630 = vunpack.c.h.b16 %v284
      %v631 = vunpack.c.l.b16 %v285
      %v632 = vunpack.c.h.b16 %v285
      %v633 = vunpack.c.l.b16 %v286
      %v634 = vunpack.c.h.b16 %v286
      %v635 = vunpack.c.l.b16 %v287
      %v636 = vunpack.c.h.b16 %v287
      %v637 = vunpack.c.l.b16 %v288
      %v638 = vunpack.c.h.b16 %v288
      %v639 = vunpack.c.l.b16 %v289
      %v640 = vunpack.c.h.b16 %v289
      %v641 = vunpack.c.l.b16 %v290
      %v642 = vunpack.c.h.b16 %v290
      %v643 = vunpack.c.l.b16 %v291
      %v644 = vunpack.c.h.b16 %v291
      %v645 = vunpack.c.l.b16 %v292
      %v646 = vunpack.c.h.b16 %v292
      %v647 = vunpack.c.l.b16 %v293
      %v648 = vunpack.c.h.b16 %v293
      %v649 = vunpack.c.l.b16 %v294
      %v650 = vunpack.c.h.b16 %v294
      %v651 = vunpack.c.l.b16 %v295
      %v652 = vunpack.c.h.b16 %v295
      %v653 = vunpack.c.l.b16 %v296
      %v654 = vunpack.c.h.b16 %v296
      %v655 = vunpack.c.l.b16 %v297
      %v656 = vunpack.c.h.b16 %v297
      %v657 = vunpack.c.l.b16 %v298
      %v658 = vunpack.c.h.b16 %v298
      %v659 = vunpack.c.l.b16 %v299
      %v660 = vunpack.c.h.b16 %v299
      %v661 = vunpack.c.l.b16 %v300
      %v662 = vunpack.c.h.b16 %v300
      %v663 = vunpack.c.l.b16 %v301
      %v664 = vunpack.c.h.b16 %v301
      %v665 = vunpack.c.l.b16 %v302
      %v666 = vunpack.c.h.b16 %v302
      %v667 = vunpack.c.l.b16 %v303
      %v668 = vunpack.c.h.b16 %v303
      %v669 = vunpack.c.l.b16 %v304
      %v670 = vunpack.c.h.b16 %v304
      %v671 = vunpack.c.l.b16 %v305
      %v672 = vunpack.c.h.b16 %v305
      %v673 = vunpack.c.l.b16 %v306
      %v674 = vunpack.c.h.b16 %v306
      %v675 = vunpack.c.l.b16 %v307
      %v676 = vunpack.c.h.b16 %v307
      %v677 = vunpack.c.l.b16 %v308
      %v678 = vunpack.c.h.b16 %v308
      %v679 = vunpack.c.l.b16 %v309
      %v680 = vunpack.c.h.b16 %v309
      %v681 = vunpack.c.l.b16 %v310
      %v682 = vunpack.c.h.b16 %v310
      %v683 = vunpack.c.l.b16 %v311
      %v684 = vunpack.c.h.b16 %v311
      %v685 = vunpack.c.l.b16 %v312
      %v686 = vunpack.c.h.b16 %v312
      %v687 = vunpack.c.l.b16 %v313
      %v688 = vunpack.c.h.b16 %v313
      %v689 = vunpack.c.l.b16 %v314
      %v690 = vunpack.c.h.b16 %v314
      %v691 = vunpack.c.l.b16 %v315
      %v692 = vunpack.c.h.b16 %v315
      %v693 = vunpack.c.l.b16 %v316
      %v694 = vunpack.c.h.b16 %v316
      %v695 = vunpack.c.l.b16 %v317
      %v696 = vunpack.c.h.b16 %v317
      %v697 = vunpack.c.l.b16 %v318
      %v698 = vunpack.c.h.b16 %v318
      %v699 = vunpack.c.l.b16 %v319
      %v700 = vunpack.c.h.b16 %v319
      %v701 = vunpack.c.l.b16 %v320
      %v702 = vunpack.c.h.b16 %v320
      %v703 = vunpack.c.l.b16 %v321
      %v704 = vunpack.c.h.b16 %v321
      %v705 = vunpack.c.l.b16 %v322
      %v706 = vunpack.c.h.b16 %v322
      %v707 = vunpack.c.l.b16 %v323
      %v708 = vunpack.c.h.b16 %v323
      %v709 = vunpack.c.l.b16 %v324
      %v710 = vunpack.c.h.b16 %v324
      %v711 = vunpack.c.l.b16 %v325
      %v712 = vunpack.c.h.b16 %v325
      %v713 = vunpack.c.l.b16 %v326
      %v714 = vunpack.c.h.b16 %v326
      %v715 = vunpack.c.l.b16 %v327
      %v716 = vunpack.c.h.b16 %v327
      %v717 = vunpack.c.l.b16 %v328
      %v718 = vunpack.c.h.b16 %v328
      %v719 = vunpack.c.l.b16 %v329
      %v720 = vunpack.c.h.b16 %v329
      %v721 = vunpack.c.l.b16 %v330
      %v722 = vunpack.c.h.b16 %v330
      %v723 = vunpack.c.l.b16 %v331
      %v724 = vunpack.c.h.b16 %v331
      %v725 = vunpack.c.l.b16 %v332
      %v726 = vunpack.c.h.b16 %v332
      %v727 = vunpack.c.l.b16 %v333
      %v728 = vunpack.c.h.b16 %v333
      %v729 = vunpack.c.l.b16 %v334
      %v730 = vunpack.c.h.b16 %v334
      %v731 = vunpack.c.l.b16 %v335
      %v732 = vunpack.c.h.b16 %v335
      %v733 = vunpack.c.l.b16 %v336
      %v734 = vunpack.c.h.b16 %v336
      %v735 = vunpack.c.l.b16 %v337
      %v736 = vunpack.c.h.b16 %v337
      %v737 = vunpack.c.l.b16 %v338
      %v738 = vunpack.c.h.b16 %v338
      %v739 = vunpack.c.l.b16 %v339
      %v740 = vunpack.c.h.b16 %v339
      %v741 = vunpack.c.l.b16 %v340
      %v742 = vunpack.c.h.b16 %v340
      %v743 = vunpack.c.l.b16 %v341
      %v744 = vunpack.c.h.b16 %v341
      %v745 = vunpack.c.l.b16 %v342
      %v746 = vunpack.c.h.b16 %v342
      %v747 = vunpack.c.l.b16 %v343
      %v748 = vunpack.c.h.b16 %v343
      %v749 = vunpack.c.l.b16 %v344
      %v750 = vunpack.c.h.b16 %v344
      %v751 = vunpack.c.l.b16 %v345
      %v752 = vunpack.c.h.b16 %v345
      %v753 = vunpack.c.l.b16 %v346
      %v754 = vunpack.c.h.b16 %v346
      %v755 = vunpack.c.l.b16 %v347
      %v756 = vunpack.c.h.b16 %v347
      %v757 = vunpack.c.l.b16 %v348
      %v758 = vunpack.c.h.b16 %v348
      %v759 = vunpack.c.l.b16 %v349
      %v760 = vunpack.c.h.b16 %v349
      %v761 = vunpack.c.l.b16 %v350
      %v762 = vunpack.c.h.b16 %v350
      %v763 = vunpack.c.l.b16 %v351
      %v764 = vunpack.c.h.b16 %v351
      %v765 = vunpack.c.l.b16 %v352
      %v766 = vunpack.c.h.b16 %v352
      %v767 = vunpack.c.l.b16 %v353
      %v768 = vunpack.c.h.b16 %v353
      %v769 = vunpack.c.l.b16 %v354
      %v770 = vunpack.c.h.b16 %v354
      %v771 = vunpack.c.l.b16 %v355
      %v772 = vunpack.c.h.b16 %v355
      %v773 = vunpack.c.l.b16 %v356
      %v774 = vunpack.c.h.b16 %v356
      %v775 = vunpack.c.l.b16 %v357
      %v776 = vunpack.c.h.b16 %v357
      %v777 = vunpack.c.l.b16 %v358
      %v778 = vunpack.c.h.b16 %v358
      %v779 = vunpack.c.l.b16 %v359
      %v780 = vunpack.c.h.b16 %v359
      %v781 = vunpack.c.l.b16 %v360
      %v782 = vunpack.c.h.b16 %v360
      %v783 = vunpack.c.l.b16 %v361
      %v784 = vunpack.c.h.b16 %v361
      %v785 = vunpack.c.l.b16 %v362
      %v786 = vunpack.c.h.b16 %v362
      %v787 = vunpack.c.l.b16 %v363
      %v788 = vunpack.c.h.b16 %v363
      %v789 = vunpack.c.l.b16 %v364
      %v790 = vunpack.c.h.b16 %v364
      %v791 = vunpack.c.l.b16 %v365
      %v792 = vunpack.c.h.b16 %v365
      %v793 = vunpack.c.l.b16 %v366
      %v794 = vunpack.c.h.b16 %v366
      %v795 = vunpack.c.l.b16 %v367
      %v796 = vunpack.c.h.b16 %v367
      %v797 = vunpack.c.l.b16 %v368
      %v798 = vunpack.c.h.b16 %v368
      %v799 = vunpack.c.l.b16 %v369
      %v800 = vunpack.c.h.b16 %v369
      %v801 = vunpack.c.l.b16 %v370
      %v802 = vunpack.c.h.b16 %v370
      %v803 = vunpack.c.l.b16 %v371
      %v804 = vunpack.c.h.b16 %v371
      %v805 = vunpack.c.l.b16 %v372
      %v806 = vunpack.c.h.b16 %v372
      %v807 = vunpack.c.l.b16 %v373
      %v808 = vunpack.c.h.b16 %v373
      %v809 = vunpack.c.l.b16 %v374
      %v810 = vunpack.c.h.b16 %v374
      %v811 = vunpack.c.l.b16 %v375
      %v812 = vunpack.c.h.b16 %v375
      %v813 = vunpack.c.l.b16 %v376
      %v814 = vunpack.c.h.b16 %v376
      %v815 = vpack.c.b16 %v563, %v559
      %v816 = vpack.c.b16 %v564, %v560
      %v817 = vpack.c.b16 %v565, %v561
      %v818 = vpack.c.b16 %v566, %v562
      %v819 = vpack.c.b16 %v571, %v567
      %v820 = vpack.c.b16 %v572, %v568
      %v821 = vpack.c.b16 %v573, %v569
      %v822 = vpack.c.b16 %v574, %v570
      %v823 = vpack.c.b16 %v579, %v575
      %v824 = vpack.c.b16 %v580, %v576
      %v825 = vpack.c.b16 %v581, %v577
      %v826 = vpack.c.b16 %v582, %v578
      %v827 = vpack.c.b16 %v587, %v583
      %v828 = vpack.c.b16 %v588, %v584
      %v829 = vpack.c.b16 %v589, %v585
      %v830 = vpack.c.b16 %v590, %v586
      %v831 = vpack.c.b16 %v595, %v591
      %v832 = vpack.c.b16 %v596, %v592
      %v833 = vpack.c.b16 %v597, %v593
      %v834 = vpack.c.b16 %v598, %v594
      %v835 = vpack.c.b16 %v603, %v599
      %v836 = vpack.c.b16 %v604, %v600
      %v837 = vpack.c.b16 %v605, %v601
      %v838 = vpack.c.b16 %v606, %v602
      %v839 = vpack.c.b16 %v611, %v607
      %v840 = vpack.c.b16 %v612, %v608
      %v841 = vpack.c.b16 %v613, %v609
      %v842 = vpack.c.b16 %v614, %v610
      %v843 = vpack.c.b16 %v619, %v615
      %v844 = vpack.c.b16 %v620, %v616
      %v845 = vpack.c.b16 %v621, %v617
      %v846 = vpack.c.b16 %v622, %v618
      %v847 = vpack.c.b16 %v627, %v623
      %v848 = vpack.c.b16 %v628, %v624
      %v849 = vpack.c.b16 %v629, %v625
      %v850 = vpack.c.b16 %v630, %v626
      %v851 = vpack.c.b16 %v635, %v631
      %v852 = vpack.c.b16 %v636, %v632
      %v853 = vpack.c.b16 %v637, %v633
      %v854 = vpack.c.b16 %v638, %v634
      %v855 = vpack.c.b16 %v643, %v639
      %v856 = vpack.c.b16 %v644, %v640
      %v857 = vpack.c.b16 %v645, %v641
      %v858 = vpack.c.b16 %v646, %v642
      %v859 = vpack.c.b16 %v651, %v647
      %v860 = vpack.c.b16 %v652, %v648
      %v861 = vpack.c.b16 %v653, %v649
      %v862 = vpack.c.b16 %v654, %v650
      %v863 = vpack.c.b16 %v659, %v655
      %v864 = vpack.c.b16 %v660, %v656
      %v865 = vpack.c.b16 %v661, %v657
      %v866 = vpack.c.b16 %v662, %v658
      %v867 = vpack.c.b16 %v667, %v663
      %v868 = vpack.c.b16 %v668, %v664
      %v869 = vpack.c.b16 %v669, %v665
      %v870 = vpack.c.b16 %v670, %v666
      %v871 = vpack.c.b16 %v675, %v671
      %v872 = vpack.c.b16 %v676, %v672
      %v873 = vpack.c.b16 %v677, %v673
      %v874 = vpack.c.b16 %v678, %v674
      %v875 = vpack.c.b16 %v683, %v679
      %v876 = vpack.c.b16 %v684, %v680
      %v877 = vpack.c.b16 %v685, %v681
      %v878 = vpack.c.b16 %v686, %v682
      %v879 = vpack.c.b16 %v691, %v687
      %v880 = vpack.c.b16 %v692, %v688
      %v881 = vpack.c.b16 %v693, %v689
      %v882 = vpack.c.b16 %v694, %v690
      %v883 = vpack.c.b16 %v699, %v695
      %v884 = vpack.c.b16 %v700, %v696
      %v885 = vpack.c.b16 %v701, %v697
      %v886 = vpack.c.b16 %v702, %v698
      %v887 = vpack.c.b16 %v707, %v703
      %v888 = vpack.c.b16 %v708, %v704
      %v889 = vpack.c.b16 %v709, %v705
      %v890 = vpack.c.b16 %v710, %v706
      %v891 = vpack.c.b16 %v715, %v711
      %v892 = vpack.c.b16 %v716, %v712
      %v893 = vpack.c.b16 %v717, %v713
      %v894 = vpack.c.b16 %v718, %v714
      %v895 = vpack.c.b16 %v723, %v719
      %v896 = vpack.c.b16 %v724, %v720
      %v897 = vpack.c.b16 %v725, %v721
      %v898 = vpack.c.b16 %v726, %v722
      %v899 = vpack.c.b16 %v731, %v727
      %v900 = vpack.c.b16 %v732, %v728
      %v901 = vpack.c.b16 %v733, %v729
      %v902 = vpack.c.b16 %v734, %v730
      %v903 = vpack.c.b16 %v739, %v735
      %v904 = vpack.c.b16 %v740, %v736
      %v905 = vpack.c.b16 %v741, %v737
      %v906 = vpack.c.b16 %v742, %v738
      %v907 = vpack.c.b16 %v747, %v743
      %v908 = vpack.c.b16 %v748, %v744
      %v909 = vpack.c.b16 %v749, %v745
      %v910 = vpack.c.b16 %v750, %v746
      %v911 = vpack.c.b16 %v755, %v751
      %v912 = vpack.c.b16 %v756, %v752
      %v913 = vpack.c.b16 %v757, %v753
      %v914 = vpack.c.b16 %v758, %v754
      %v915 = vpack.c.b16 %v763, %v759
      %v916 = vpack.c.b16 %v764, %v760
      %v917 = vpack.c.b16 %v765, %v761
      %v918 = vpack.c.b16 %v766, %v762
      %v919 = vpack.c.b16 %v771, %v767
      %v920 = vpack.c.b16 %v772, %v768
      %v921 = vpack.c.b16 %v773, %v769
      %v922 = vpack.c.b16 %v774, %v770
      %v923 = vpack.c.b16 %v779, %v775
      %v924 = vpack.c.b16 %v780, %v776
      %v925 = vpack.c.b16 %v781, %v777
      %v926 = vpack.c.b16 %v782, %v778
      %v927 = vpack.c.b16 %v787, %v783
      %v928 = vpack.c.b16 %v788, %v784
      %v929 = vpack.c.b16 %v789, %v785
      %v930 = vpack.c.b16 %v790, %v786
      %v931 = vpack.c.b16 %v795, %v791
      %v932 = vpack.c.b16 %v796, %v792
      %v933 = vpack.c.b16 %v797, %v793
      %v934 = vpack.c.b16 %v798, %v794
      %v935 = vpack.c.b16 %v803, %v799
      %v936 = vpack.c.b16 %v804, %v800
      %v937 = vpack.c.b16 %v805, %v801
      %v938 = vpack.c.b16 %v806, %v802
      %v939 = vpack.c.b16 %v811, %v807
      %v940 = vpack.c.b16 %v812, %v808
      %v941 = vpack.c.b16 %v813, %v809
      %v942 = vpack.c.b16 %v814, %v810
      %v1093 = vunpack.c.l.b16 %v377
      %v1094 = vunpack.c.l.b16 %v378
      %v1095 = vunpack.c.l.b16 %v379
      %v1096 = vunpack.c.l.b16 %v380
      %v1097 = vunpack.c.l.b16 %v381
      %v1098 = vunpack.c.l.b16 %v382
      %v1099 = vunpack.c.l.b16 %v383
      %v1100 = vunpack.c.l.b16 %v384
      %v1101 = vunpack.c.l.b16 %v385
      %v1102 = vunpack.c.l.b16 %v386
      %v1103 = vunpack.c.l.b16 %v387
      %v1104 = vunpack.c.l.b16 %v388
      %v1105 = vunpack.c.l.b16 %v389
      %v1106 = vunpack.c.l.b16 %v390
      %v1107 = vunpack.c.l.b16 %v391
      %v1108 = vunpack.c.l.b16 %v392
      %v1109 = vunpack.c.l.b16 %v393
      %v1110 = vunpack.c.l.b16 %v394
      %v1111 = vunpack.c.l.b16 %v395
      %v1112 = vunpack.c.l.b16 %v396
      %v1113 = vunpack.c.l.b16 %v397
      %v1114 = vunpack.c.l.b16 %v398
      %v1115 = vunpack.c.l.b16 %v399
      %v1116 = vunpack.c.l.b16 %v400
      %v1117 = vunpack.c.l.b16 %v401
      %v1118 = vunpack.c.l.b16 %v402
      %v1119 = vunpack.c.l.b16 %v403
      %v1120 = vunpack.c.l.b16 %v404
      %v1121 = vunpack.c.l.b16 %v405
      %v1122 = vunpack.c.l.b16 %v406
      %v1123 = vunpack.c.l.b16 %v407
      %v1124 = vunpack.c.l.b16 %v408
      %v1125 = vunpack.c.l.b16 %v409
      %v1126 = vunpack.c.l.b16 %v410
      %v1127 = vunpack.c.l.b16 %v411
      %v1128 = vunpack.c.l.b16 %v412
      %v1129 = vunpack.c.l.b16 %v413
      %v1130 = vunpack.c.l.b16 %v414
      %v1131 = vunpack.c.l.b16 %v415
      %v1132 = vunpack.c.l.b16 %v416
      %v1133 = vunpack.c.l.b16 %v417
      %v1134 = vunpack.c.l.b16 %v418
      %v1135 = vunpack.c.l.b16 %v419
      %v1136 = vunpack.c.l.b16 %v420
      %v1137 = vunpack.c.l.b16 %v421
      %v1138 = vunpack.c.l.b16 %v422
      %v1139 = vunpack.c.l.b16 %v423
      %v1140 = vunpack.c.l.b16 %v424
      %v1141 = vunpack.c.l.b16 %v425
      %v1142 = vunpack.c.l.b16 %v426
      %v1143 = vunpack.c.l.b16 %v427
      %v1144 = vunpack.c.l.b16 %v428
      %v1145 = vunpack.c.l.b16 %v429
      %v1146 = vunpack.c.l.b16 %v430
      %v1147 = vpack.c.b16 %v1094, %v1093
      %v1148 = vpack.c.b16 %v1096, %v1095
      %v1149 = vpack.c.b16 %v1098, %v1097
      %v1150 = vpack.c.b16 %v1100, %v1099
      %v1151 = vpack.c.b16 %v1102, %v1101
      %v1152 = vpack.c.b16 %v1104, %v1103
      %v1153 = vpack.c.b16 %v1106, %v1105
      %v1154 = vpack.c.b16 %v1108, %v1107
      %v1155 = vpack.c.b16 %v1110, %v1109
      %v1156 = vpack.c.b16 %v1112, %v1111
      %v1157 = vpack.c.b16 %v1114, %v1113
      %v1158 = vpack.c.b16 %v1116, %v1115
      %v1159 = vpack.c.b16 %v1118, %v1117
      %v1160 = vpack.c.b16 %v1120, %v1119
      %v1161 = vpack.c.b16 %v1122, %v1121
      %v1162 = vpack.c.b16 %v1124, %v1123
      %v1163 = vpack.c.b16 %v1126, %v1125
      %v1164 = vpack.c.b16 %v1128, %v1127
      %v1165 = vpack.c.b16 %v1130, %v1129
      %v1166 = vpack.c.b16 %v1132, %v1131
      %v1167 = vpack.c.b16 %v1134, %v1133
      %v1168 = vpack.c.b16 %v1136, %v1135
      %v1169 = vpack.c.b16 %v1138, %v1137
      %v1170 = vpack.c.b16 %v1140, %v1139
      %v1171 = vpack.c.b16 %v1142, %v1141
      %v1172 = vpack.c.b16 %v1144, %v1143
      %v1173 = vpack.c.b16 %v1146, %v1145
      %vm1201 = vcmask 392192
      %v1203 = vsel %vm1201, %v818, 0
      %v1206 = vsel %vm1201, %v822, 0
      %v1209 = vsel %vm1201, %v826, 0
      %v1212 = vsel %vm1201, %v830, 0
      %v1215 = vsel %vm1201, %v834, 0
      %v1218 = vsel %vm1201, %v838, 0
      %v1221 = vsel %vm1201, %v842, 0
      %v1224 = vsel %vm1201, %v846, 0
      %v1227 = vsel %vm1201, %v850, 0
      %v1230 = vsel %vm1201, %v854, 0
      %v1233 = vsel %vm1201, %v858, 0
      %v1236 = vsel %vm1201, %v862, 0
      %v1239 = vsel %vm1201, %v866, 0
      %v1242 = vsel %vm1201, %v870, 0
      %v1245 = vsel %vm1201, %v874, 0
      %v1248 = vsel %vm1201, %v878, 0
      %v1251 = vsel %vm1201, %v882, 0
      %v1254 = vsel %vm1201, %v886, 0
      %v1257 = vsel %vm1201, %v890, 0
      %v1260 = vsel %vm1201, %v894, 0
      %v1263 = vsel %vm1201, %v898, 0
      %v1266 = vsel %vm1201, %v902, 0
      %v1269 = vsel %vm1201, %v906, 0
      %v1272 = vsel %vm1201, %v910, 0
      %v1275 = vsel %vm1201, %v914, 0
      %v1278 = vsel %vm1201, %v918, 0
      %v1281 = vsel %vm1201, %v922, 0
      %v1284 = vsel %vm1201, %v926, 0
      %v1287 = vsel %vm1201, %v930, 0
      %v1290 = vsel %vm1201, %v934, 0
      %v1293 = vsel %vm1201, %v938, 0
      %v1296 = vsel %vm1201, %v942, 0
      %1298 = vmatpush.bf16.msra.mxu0 %v1154
      %1299 = vmatpush.bf16.msra.mxu0 %v1153
      %1300 = vmatpush.bf16.msra.mxu0 %v1152
      %1301 = vmatpush.bf16.msra.mxu0 %v1151
      %1302 = vmatpush.bf16.msra.mxu0 %v1150
      %1303 = vmatpush.bf16.msra.mxu0 %v1149
      %1304 = vmatpush.bf16.msra.mxu0 %v1148
      %1305 = vmatpush.bf16.msra.mxu0 %v1147
      %1306 = vmatmul.bf16.gmra.mxu0 %v815
      %v1307 = vpop.f32.mrf.mxu0
      %v1308 = vadd.f32 0.0, %v1307
      %v1309 = vpop.f32.mrf.mxu0
      %v1310 = vadd.f32 0.0, %v1309
      %1311 = vmatmul.bf16.gmra.mxu0 %v819
      %v1312 = vpop.f32.mrf.mxu0
      %v1313 = vadd.f32 0.0, %v1312
      %v1314 = vpop.f32.mrf.mxu0
      %v1315 = vadd.f32 0.0, %v1314
      %1316 = vmatmul.bf16.gmra.mxu0 %v823
      %v1317 = vpop.f32.mrf.mxu0
      %v1318 = vadd.f32 0.0, %v1317
      %v1319 = vpop.f32.mrf.mxu0
      %v1320 = vadd.f32 0.0, %v1319
      %1321 = vmatmul.bf16.gmra.mxu0 %v827
      %v1322 = vpop.f32.mrf.mxu0
      %v1323 = vadd.f32 0.0, %v1322
      %v1324 = vpop.f32.mrf.mxu0
      %v1325 = vadd.f32 0.0, %v1324
      %1326 = vmatmul.bf16.gmra.mxu0 %v831
      %v1327 = vpop.f32.mrf.mxu0
      %v1328 = vadd.f32 0.0, %v1327
      %v1329 = vpop.f32.mrf.mxu0
      %v1330 = vadd.f32 0.0, %v1329
      %1331 = vmatmul.bf16.gmra.mxu0 %v835
      %v1332 = vpop.f32.mrf.mxu0
      %v1333 = vadd.f32 0.0, %v1332
      %v1334 = vpop.f32.mrf.mxu0
      %v1335 = vadd.f32 0.0, %v1334
      %1336 = vmatmul.bf16.gmra.mxu0 %v839
      %v1337 = vpop.f32.mrf.mxu0
      %v1338 = vadd.f32 0.0, %v1337
      %v1339 = vpop.f32.mrf.mxu0
      %v1340 = vadd.f32 0.0, %v1339
      %1341 = vmatmul.bf16.gmra.mxu0 %v843
      %v1342 = vpop.f32.mrf.mxu0
      %v1343 = vadd.f32 0.0, %v1342
      %v1344 = vpop.f32.mrf.mxu0
      %v1345 = vadd.f32 0.0, %v1344
      %1346 = vmatmul.bf16.gmra.mxu0 %v847
      %v1347 = vpop.f32.mrf.mxu0
      %v1348 = vadd.f32 0.0, %v1347
      %v1349 = vpop.f32.mrf.mxu0
      %v1350 = vadd.f32 0.0, %v1349
      %1351 = vmatmul.bf16.gmra.mxu0 %v851
      %v1352 = vpop.f32.mrf.mxu0
      %v1353 = vadd.f32 0.0, %v1352
      %v1354 = vpop.f32.mrf.mxu0
      %v1355 = vadd.f32 0.0, %v1354
      %1356 = vmatmul.bf16.gmra.mxu0 %v855
      %v1357 = vpop.f32.mrf.mxu0
      %v1358 = vadd.f32 0.0, %v1357
      %v1359 = vpop.f32.mrf.mxu0
      %v1360 = vadd.f32 0.0, %v1359
      %1361 = vmatmul.bf16.gmra.mxu0 %v859
      %v1362 = vpop.f32.mrf.mxu0
      %v1363 = vadd.f32 0.0, %v1362
      %v1364 = vpop.f32.mrf.mxu0
      %v1365 = vadd.f32 0.0, %v1364
      %1366 = vmatmul.bf16.gmra.mxu0 %v863
      %v1367 = vpop.f32.mrf.mxu0
      %v1368 = vadd.f32 0.0, %v1367
      %v1369 = vpop.f32.mrf.mxu0
      %v1370 = vadd.f32 0.0, %v1369
      %1371 = vmatmul.bf16.gmra.mxu0 %v867
      %v1372 = vpop.f32.mrf.mxu0
      %v1373 = vadd.f32 0.0, %v1372
      %v1374 = vpop.f32.mrf.mxu0
      %v1375 = vadd.f32 0.0, %v1374
      %1376 = vmatmul.bf16.gmra.mxu0 %v871
      %v1377 = vpop.f32.mrf.mxu0
      %v1378 = vadd.f32 0.0, %v1377
      %v1379 = vpop.f32.mrf.mxu0
      %v1380 = vadd.f32 0.0, %v1379
      %1381 = vmatmul.bf16.gmra.mxu0 %v875
      %v1382 = vpop.f32.mrf.mxu0
      %v1383 = vadd.f32 0.0, %v1382
      %v1384 = vpop.f32.mrf.mxu0
      %v1385 = vadd.f32 0.0, %v1384
      %1386 = vmatmul.bf16.gmra.mxu0 %v879
      %v1387 = vpop.f32.mrf.mxu0
      %v1388 = vadd.f32 0.0, %v1387
      %v1389 = vpop.f32.mrf.mxu0
      %v1390 = vadd.f32 0.0, %v1389
      %1391 = vmatmul.bf16.gmra.mxu0 %v883
      %v1392 = vpop.f32.mrf.mxu0
      %v1393 = vadd.f32 0.0, %v1392
      %v1394 = vpop.f32.mrf.mxu0
      %v1395 = vadd.f32 0.0, %v1394
      %1396 = vmatmul.bf16.gmra.mxu0 %v887
      %v1397 = vpop.f32.mrf.mxu0
      %v1398 = vadd.f32 0.0, %v1397
      %v1399 = vpop.f32.mrf.mxu0
      %v1400 = vadd.f32 0.0, %v1399
      %1401 = vmatmul.bf16.gmra.mxu0 %v891
      %v1402 = vpop.f32.mrf.mxu0
      %v1403 = vadd.f32 0.0, %v1402
      %v1404 = vpop.f32.mrf.mxu0
      %v1405 = vadd.f32 0.0, %v1404
      %1406 = vmatmul.bf16.gmra.mxu0 %v895
      %v1407 = vpop.f32.mrf.mxu0
      %v1408 = vadd.f32 0.0, %v1407
      %v1409 = vpop.f32.mrf.mxu0
      %v1410 = vadd.f32 0.0, %v1409
      %1411 = vmatmul.bf16.gmra.mxu0 %v899
      %v1412 = vpop.f32.mrf.mxu0
      %v1413 = vadd.f32 0.0, %v1412
      %v1414 = vpop.f32.mrf.mxu0
      %v1415 = vadd.f32 0.0, %v1414
      %1416 = vmatmul.bf16.gmra.mxu0 %v903
      %v1417 = vpop.f32.mrf.mxu0
      %v1418 = vadd.f32 0.0, %v1417
      %v1419 = vpop.f32.mrf.mxu0
      %v1420 = vadd.f32 0.0, %v1419
      %1421 = vmatmul.bf16.gmra.mxu0 %v907
      %v1422 = vpop.f32.mrf.mxu0
      %v1423 = vadd.f32 0.0, %v1422
      %v1424 = vpop.f32.mrf.mxu0
      %v1425 = vadd.f32 0.0, %v1424
      %1426 = vmatmul.bf16.gmra.mxu0 %v911
      %v1427 = vpop.f32.mrf.mxu0
      %v1428 = vadd.f32 0.0, %v1427
      %v1429 = vpop.f32.mrf.mxu0
      %v1430 = vadd.f32 0.0, %v1429
      %1431 = vmatmul.bf16.gmra.mxu0 %v915
      %v1432 = vpop.f32.mrf.mxu0
      %v1433 = vadd.f32 0.0, %v1432
      %v1434 = vpop.f32.mrf.mxu0
      %v1435 = vadd.f32 0.0, %v1434
      %1436 = vmatmul.bf16.gmra.mxu0 %v919
      %v1437 = vpop.f32.mrf.mxu0
      %v1438 = vadd.f32 0.0, %v1437
      %v1439 = vpop.f32.mrf.mxu0
      %v1440 = vadd.f32 0.0, %v1439
      %1441 = vmatmul.bf16.gmra.mxu0 %v923
      %v1442 = vpop.f32.mrf.mxu0
      %v1443 = vadd.f32 0.0, %v1442
      %v1444 = vpop.f32.mrf.mxu0
      %v1445 = vadd.f32 0.0, %v1444
      %1446 = vmatmul.bf16.gmra.mxu0 %v927
      %v1447 = vpop.f32.mrf.mxu0
      %v1448 = vadd.f32 0.0, %v1447
      %v1449 = vpop.f32.mrf.mxu0
      %v1450 = vadd.f32 0.0, %v1449
      %1451 = vmatmul.bf16.gmra.mxu0 %v931
      %v1452 = vpop.f32.mrf.mxu0
      %v1453 = vadd.f32 0.0, %v1452
      %v1454 = vpop.f32.mrf.mxu0
      %v1455 = vadd.f32 0.0, %v1454
      %1456 = vmatmul.bf16.gmra.mxu0 %v935
      %v1457 = vpop.f32.mrf.mxu0
      %v1458 = vadd.f32 0.0, %v1457
      %v1459 = vpop.f32.mrf.mxu0
      %v1460 = vadd.f32 0.0, %v1459
      %1461 = vmatmul.bf16.gmra.mxu0 %v939
      %v1462 = vpop.f32.mrf.mxu0
      %v1463 = vadd.f32 0.0, %v1462
      %v1464 = vpop.f32.mrf.mxu0
      %v1465 = vadd.f32 0.0, %v1464
      %1466 = vdwg.mxu0
      %1467 = vmatpush.bf16.msra.mxu0 %v1162
      %1468 = vmatpush.bf16.msra.mxu0 %v1161
      %1469 = vmatpush.bf16.msra.mxu0 %v1160
      %1470 = vmatpush.bf16.msra.mxu0 %v1159
      %1471 = vmatpush.bf16.msra.mxu0 %v1158
      %1472 = vmatpush.bf16.msra.mxu0 %v1157
      %1473 = vmatpush.bf16.msra.mxu0 %v1156
      %1474 = vmatpush.bf16.msra.mxu0 %v1155
      %1475 = vmatmul.bf16.gmra.mxu0 %v816
      %v1476 = vpop.f32.mrf.mxu0
      %v1477 = vadd.f32 %v1308, %v1476
      %v1478 = vpop.f32.mrf.mxu0
      %v1479 = vadd.f32 %v1310, %v1478
      %1480 = vmatmul.bf16.gmra.mxu0 %v820
      %v1481 = vpop.f32.mrf.mxu0
      %v1482 = vadd.f32 %v1313, %v1481
      %v1483 = vpop.f32.mrf.mxu0
      %v1484 = vadd.f32 %v1315, %v1483
      %1485 = vmatmul.bf16.gmra.mxu0 %v824
      %v1486 = vpop.f32.mrf.mxu0
      %v1487 = vadd.f32 %v1318, %v1486
      %v1488 = vpop.f32.mrf.mxu0
      %v1489 = vadd.f32 %v1320, %v1488
      %1490 = vmatmul.bf16.gmra.mxu0 %v828
      %v1491 = vpop.f32.mrf.mxu0
      %v1492 = vadd.f32 %v1323, %v1491
      %v1493 = vpop.f32.mrf.mxu0
      %v1494 = vadd.f32 %v1325, %v1493
      %1495 = vmatmul.bf16.gmra.mxu0 %v832
      %v1496 = vpop.f32.mrf.mxu0
      %v1497 = vadd.f32 %v1328, %v1496
      %v1498 = vpop.f32.mrf.mxu0
      %v1499 = vadd.f32 %v1330, %v1498
      %1500 = vmatmul.bf16.gmra.mxu0 %v836
      %v1501 = vpop.f32.mrf.mxu0
      %v1502 = vadd.f32 %v1333, %v1501
      %v1503 = vpop.f32.mrf.mxu0
      %v1504 = vadd.f32 %v1335, %v1503
      %1505 = vmatmul.bf16.gmra.mxu0 %v840
      %v1506 = vpop.f32.mrf.mxu0
      %v1507 = vadd.f32 %v1338, %v1506
      %v1508 = vpop.f32.mrf.mxu0
      %v1509 = vadd.f32 %v1340, %v1508
      %1510 = vmatmul.bf16.gmra.mxu0 %v844
      %v1511 = vpop.f32.mrf.mxu0
      %v1512 = vadd.f32 %v1343, %v1511
      %v1513 = vpop.f32.mrf.mxu0
      %v1514 = vadd.f32 %v1345, %v1513
      %1515 = vmatmul.bf16.gmra.mxu0 %v848
      %v1516 = vpop.f32.mrf.mxu0
      %v1517 = vadd.f32 %v1348, %v1516
      %v1518 = vpop.f32.mrf.mxu0
      %v1519 = vadd.f32 %v1350, %v1518
      %1520 = vmatmul.bf16.gmra.mxu0 %v852
      %v1521 = vpop.f32.mrf.mxu0
      %v1522 = vadd.f32 %v1353, %v1521
      %v1523 = vpop.f32.mrf.mxu0
      %v1524 = vadd.f32 %v1355, %v1523
      %1525 = vmatmul.bf16.gmra.mxu0 %v856
      %v1526 = vpop.f32.mrf.mxu0
      %v1527 = vadd.f32 %v1358, %v1526
      %v1528 = vpop.f32.mrf.mxu0
      %v1529 = vadd.f32 %v1360, %v1528
      %1530 = vmatmul.bf16.gmra.mxu0 %v860
      %v1531 = vpop.f32.mrf.mxu0
      %v1532 = vadd.f32 %v1363, %v1531
      %v1533 = vpop.f32.mrf.mxu0
      %v1534 = vadd.f32 %v1365, %v1533
      %1535 = vmatmul.bf16.gmra.mxu0 %v864
      %v1536 = vpop.f32.mrf.mxu0
      %v1537 = vadd.f32 %v1368, %v1536
      %v1538 = vpop.f32.mrf.mxu0
      %v1539 = vadd.f32 %v1370, %v1538
      %1540 = vmatmul.bf16.gmra.mxu0 %v868
      %v1541 = vpop.f32.mrf.mxu0
      %v1542 = vadd.f32 %v1373, %v1541
      %v1543 = vpop.f32.mrf.mxu0
      %v1544 = vadd.f32 %v1375, %v1543
      %1545 = vmatmul.bf16.gmra.mxu0 %v872
      %v1546 = vpop.f32.mrf.mxu0
      %v1547 = vadd.f32 %v1378, %v1546
      %v1548 = vpop.f32.mrf.mxu0
      %v1549 = vadd.f32 %v1380, %v1548
      %1550 = vmatmul.bf16.gmra.mxu0 %v876
      %v1551 = vpop.f32.mrf.mxu0
      %v1552 = vadd.f32 %v1383, %v1551
      %v1553 = vpop.f32.mrf.mxu0
      %v1554 = vadd.f32 %v1385, %v1553
      %1555 = vmatmul.bf16.gmra.mxu0 %v880
      %v1556 = vpop.f32.mrf.mxu0
      %v1557 = vadd.f32 %v1388, %v1556
      %v1558 = vpop.f32.mrf.mxu0
      %v1559 = vadd.f32 %v1390, %v1558
      %1560 = vmatmul.bf16.gmra.mxu0 %v884
      %v1561 = vpop.f32.mrf.mxu0
      %v1562 = vadd.f32 %v1393, %v1561
      %v1563 = vpop.f32.mrf.mxu0
      %v1564 = vadd.f32 %v1395, %v1563
      %1565 = vmatmul.bf16.gmra.mxu0 %v888
      %v1566 = vpop.f32.mrf.mxu0
      %v1567 = vadd.f32 %v1398, %v1566
      %v1568 = vpop.f32.mrf.mxu0
      %v1569 = vadd.f32 %v1400, %v1568
      %1570 = vmatmul.bf16.gmra.mxu0 %v892
      %v1571 = vpop.f32.mrf.mxu0
      %v1572 = vadd.f32 %v1403, %v1571
      %v1573 = vpop.f32.mrf.mxu0
      %v1574 = vadd.f32 %v1405, %v1573
      %1575 = vmatmul.bf16.gmra.mxu0 %v896
      %v1576 = vpop.f32.mrf.mxu0
      %v1577 = vadd.f32 %v1408, %v1576
      %v1578 = vpop.f32.mrf.mxu0
      %v1579 = vadd.f32 %v1410, %v1578
      %1580 = vmatmul.bf16.gmra.mxu0 %v900
      %v1581 = vpop.f32.mrf.mxu0
      %v1582 = vadd.f32 %v1413, %v1581
      %v1583 = vpop.f32.mrf.mxu0
      %v1584 = vadd.f32 %v1415, %v1583
      %1585 = vmatmul.bf16.gmra.mxu0 %v904
      %v1586 = vpop.f32.mrf.mxu0
      %v1587 = vadd.f32 %v1418, %v1586
      %v1588 = vpop.f32.mrf.mxu0
      %v1589 = vadd.f32 %v1420, %v1588
      %1590 = vmatmul.bf16.gmra.mxu0 %v908
      %v1591 = vpop.f32.mrf.mxu0
      %v1592 = vadd.f32 %v1423, %v1591
      %v1593 = vpop.f32.mrf.mxu0
      %v1594 = vadd.f32 %v1425, %v1593
      %1595 = vmatmul.bf16.gmra.mxu0 %v912
      %v1596 = vpop.f32.mrf.mxu0
      %v1597 = vadd.f32 %v1428, %v1596
      %v1598 = vpop.f32.mrf.mxu0
      %v1599 = vadd.f32 %v1430, %v1598
      %1600 = vmatmul.bf16.gmra.mxu0 %v916
      %v1601 = vpop.f32.mrf.mxu0
      %v1602 = vadd.f32 %v1433, %v1601
      %v1603 = vpop.f32.mrf.mxu0
      %v1604 = vadd.f32 %v1435, %v1603
      %1605 = vmatmul.bf16.gmra.mxu0 %v920
      %v1606 = vpop.f32.mrf.mxu0
      %v1607 = vadd.f32 %v1438, %v1606
      %v1608 = vpop.f32.mrf.mxu0
      %v1609 = vadd.f32 %v1440, %v1608
      %1610 = vmatmul.bf16.gmra.mxu0 %v924
      %v1611 = vpop.f32.mrf.mxu0
      %v1612 = vadd.f32 %v1443, %v1611
      %v1613 = vpop.f32.mrf.mxu0
      %v1614 = vadd.f32 %v1445, %v1613
      %1615 = vmatmul.bf16.gmra.mxu0 %v928
      %v1616 = vpop.f32.mrf.mxu0
      %v1617 = vadd.f32 %v1448, %v1616
      %v1618 = vpop.f32.mrf.mxu0
      %v1619 = vadd.f32 %v1450, %v1618
      %1620 = vmatmul.bf16.gmra.mxu0 %v932
      %v1621 = vpop.f32.mrf.mxu0
      %v1622 = vadd.f32 %v1453, %v1621
      %v1623 = vpop.f32.mrf.mxu0
      %v1624 = vadd.f32 %v1455, %v1623
      %1625 = vmatmul.bf16.gmra.mxu0 %v936
      %v1626 = vpop.f32.mrf.mxu0
      %v1627 = vadd.f32 %v1458, %v1626
      %v1628 = vpop.f32.mrf.mxu0
      %v1629 = vadd.f32 %v1460, %v1628
      %1630 = vmatmul.bf16.gmra.mxu0 %v940
      %v1631 = vpop.f32.mrf.mxu0
      %v1632 = vadd.f32 %v1463, %v1631
      %v1633 = vpop.f32.mrf.mxu0
      %v1634 = vadd.f32 %v1465, %v1633
      %1635 = vdwg.mxu0
      %1636 = vmatpush.bf16.msra.mxu0 %v1170
      %1637 = vmatpush.bf16.msra.mxu0 %v1169
      %1638 = vmatpush.bf16.msra.mxu0 %v1168
      %1639 = vmatpush.bf16.msra.mxu0 %v1167
      %1640 = vmatpush.bf16.msra.mxu0 %v1166
      %1641 = vmatpush.bf16.msra.mxu0 %v1165
      %1642 = vmatpush.bf16.msra.mxu0 %v1164
      %1643 = vmatpush.bf16.msra.mxu0 %v1163
      %1644 = vmatmul.bf16.gmra.mxu0 %v817
      %v1645 = vpop.f32.mrf.mxu0
      %v1646 = vadd.f32 %v1477, %v1645
      %v1647 = vpop.f32.mrf.mxu0
      %v1648 = vadd.f32 %v1479, %v1647
      %1649 = vmatmul.bf16.gmra.mxu0 %v821
      %v1650 = vpop.f32.mrf.mxu0
      %v1651 = vadd.f32 %v1482, %v1650
      %v1652 = vpop.f32.mrf.mxu0
      %v1653 = vadd.f32 %v1484, %v1652
      %1654 = vmatmul.bf16.gmra.mxu0 %v825
      %v1655 = vpop.f32.mrf.mxu0
      %v1656 = vadd.f32 %v1487, %v1655
      %v1657 = vpop.f32.mrf.mxu0
      %v1658 = vadd.f32 %v1489, %v1657
      %1659 = vmatmul.bf16.gmra.mxu0 %v829
      %v1660 = vpop.f32.mrf.mxu0
      %v1661 = vadd.f32 %v1492, %v1660
      %v1662 = vpop.f32.mrf.mxu0
      %v1663 = vadd.f32 %v1494, %v1662
      %1664 = vmatmul.bf16.gmra.mxu0 %v833
      %v1665 = vpop.f32.mrf.mxu0
      %v1666 = vadd.f32 %v1497, %v1665
      %v1667 = vpop.f32.mrf.mxu0
      %v1668 = vadd.f32 %v1499, %v1667
      %1669 = vmatmul.bf16.gmra.mxu0 %v837
      %v1670 = vpop.f32.mrf.mxu0
      %v1671 = vadd.f32 %v1502, %v1670
      %v1672 = vpop.f32.mrf.mxu0
      %v1673 = vadd.f32 %v1504, %v1672
      %1674 = vmatmul.bf16.gmra.mxu0 %v841
      %v1675 = vpop.f32.mrf.mxu0
      %v1676 = vadd.f32 %v1507, %v1675
      %v1677 = vpop.f32.mrf.mxu0
      %v1678 = vadd.f32 %v1509, %v1677
      %1679 = vmatmul.bf16.gmra.mxu0 %v845
      %v1680 = vpop.f32.mrf.mxu0
      %v1681 = vadd.f32 %v1512, %v1680
      %v1682 = vpop.f32.mrf.mxu0
      %v1683 = vadd.f32 %v1514, %v1682
      %1684 = vmatmul.bf16.gmra.mxu0 %v849
      %v1685 = vpop.f32.mrf.mxu0
      %v1686 = vadd.f32 %v1517, %v1685
      %v1687 = vpop.f32.mrf.mxu0
      %v1688 = vadd.f32 %v1519, %v1687
      %1689 = vmatmul.bf16.gmra.mxu0 %v853
      %v1690 = vpop.f32.mrf.mxu0
      %v1691 = vadd.f32 %v1522, %v1690
      %v1692 = vpop.f32.mrf.mxu0
      %v1693 = vadd.f32 %v1524, %v1692
      %1694 = vmatmul.bf16.gmra.mxu0 %v857
      %v1695 = vpop.f32.mrf.mxu0
      %v1696 = vadd.f32 %v1527, %v1695
      %v1697 = vpop.f32.mrf.mxu0
      %v1698 = vadd.f32 %v1529, %v1697
      %1699 = vmatmul.bf16.gmra.mxu0 %v861
      %v1700 = vpop.f32.mrf.mxu0
      %v1701 = vadd.f32 %v1532, %v1700
      %v1702 = vpop.f32.mrf.mxu0
      %v1703 = vadd.f32 %v1534, %v1702
      %1704 = vmatmul.bf16.gmra.mxu0 %v865
      %v1705 = vpop.f32.mrf.mxu0
      %v1706 = vadd.f32 %v1537, %v1705
      %v1707 = vpop.f32.mrf.mxu0
      %v1708 = vadd.f32 %v1539, %v1707
      %1709 = vmatmul.bf16.gmra.mxu0 %v869
      %v1710 = vpop.f32.mrf.mxu0
      %v1711 = vadd.f32 %v1542, %v1710
      %v1712 = vpop.f32.mrf.mxu0
      %v1713 = vadd.f32 %v1544, %v1712
      %1714 = vmatmul.bf16.gmra.mxu0 %v873
      %v1715 = vpop.f32.mrf.mxu0
      %v1716 = vadd.f32 %v1547, %v1715
      %v1717 = vpop.f32.mrf.mxu0
      %v1718 = vadd.f32 %v1549, %v1717
      %1719 = vmatmul.bf16.gmra.mxu0 %v877
      %v1720 = vpop.f32.mrf.mxu0
      %v1721 = vadd.f32 %v1552, %v1720
      %v1722 = vpop.f32.mrf.mxu0
      %v1723 = vadd.f32 %v1554, %v1722
      %1724 = vmatmul.bf16.gmra.mxu0 %v881
      %v1725 = vpop.f32.mrf.mxu0
      %v1726 = vadd.f32 %v1557, %v1725
      %v1727 = vpop.f32.mrf.mxu0
      %v1728 = vadd.f32 %v1559, %v1727
      %1729 = vmatmul.bf16.gmra.mxu0 %v885
      %v1730 = vpop.f32.mrf.mxu0
      %v1731 = vadd.f32 %v1562, %v1730
      %v1732 = vpop.f32.mrf.mxu0
      %v1733 = vadd.f32 %v1564, %v1732
      %1734 = vmatmul.bf16.gmra.mxu0 %v889
      %v1735 = vpop.f32.mrf.mxu0
      %v1736 = vadd.f32 %v1567, %v1735
      %v1737 = vpop.f32.mrf.mxu0
      %v1738 = vadd.f32 %v1569, %v1737
      %1739 = vmatmul.bf16.gmra.mxu0 %v893
      %v1740 = vpop.f32.mrf.mxu0
      %v1741 = vadd.f32 %v1572, %v1740
      %v1742 = vpop.f32.mrf.mxu0
      %v1743 = vadd.f32 %v1574, %v1742
      %1744 = vmatmul.bf16.gmra.mxu0 %v897
      %v1745 = vpop.f32.mrf.mxu0
      %v1746 = vadd.f32 %v1577, %v1745
      %v1747 = vpop.f32.mrf.mxu0
      %v1748 = vadd.f32 %v1579, %v1747
      %1749 = vmatmul.bf16.gmra.mxu0 %v901
      %v1750 = vpop.f32.mrf.mxu0
      %v1751 = vadd.f32 %v1582, %v1750
      %v1752 = vpop.f32.mrf.mxu0
      %v1753 = vadd.f32 %v1584, %v1752
      %1754 = vmatmul.bf16.gmra.mxu0 %v905
      %v1755 = vpop.f32.mrf.mxu0
      %v1756 = vadd.f32 %v1587, %v1755
      %v1757 = vpop.f32.mrf.mxu0
      %v1758 = vadd.f32 %v1589, %v1757
      %1759 = vmatmul.bf16.gmra.mxu0 %v909
      %v1760 = vpop.f32.mrf.mxu0
      %v1761 = vadd.f32 %v1592, %v1760
      %v1762 = vpop.f32.mrf.mxu0
      %v1763 = vadd.f32 %v1594, %v1762
      %1764 = vmatmul.bf16.gmra.mxu0 %v913
      %v1765 = vpop.f32.mrf.mxu0
      %v1766 = vadd.f32 %v1597, %v1765
      %v1767 = vpop.f32.mrf.mxu0
      %v1768 = vadd.f32 %v1599, %v1767
      %1769 = vmatmul.bf16.gmra.mxu0 %v917
      %v1770 = vpop.f32.mrf.mxu0
      %v1771 = vadd.f32 %v1602, %v1770
      %v1772 = vpop.f32.mrf.mxu0
      %v1773 = vadd.f32 %v1604, %v1772
      %1774 = vmatmul.bf16.gmra.mxu0 %v921
      %v1775 = vpop.f32.mrf.mxu0
      %v1776 = vadd.f32 %v1607, %v1775
      %v1777 = vpop.f32.mrf.mxu0
      %v1778 = vadd.f32 %v1609, %v1777
      %1779 = vmatmul.bf16.gmra.mxu0 %v925
      %v1780 = vpop.f32.mrf.mxu0
      %v1781 = vadd.f32 %v1612, %v1780
      %v1782 = vpop.f32.mrf.mxu0
      %v1783 = vadd.f32 %v1614, %v1782
      %1784 = vmatmul.bf16.gmra.mxu0 %v929
      %v1785 = vpop.f32.mrf.mxu0
      %v1786 = vadd.f32 %v1617, %v1785
      %v1787 = vpop.f32.mrf.mxu0
      %v1788 = vadd.f32 %v1619, %v1787
      %1789 = vmatmul.bf16.gmra.mxu0 %v933
      %v1790 = vpop.f32.mrf.mxu0
      %v1791 = vadd.f32 %v1622, %v1790
      %v1792 = vpop.f32.mrf.mxu0
      %v1793 = vadd.f32 %v1624, %v1792
      %1794 = vmatmul.bf16.gmra.mxu0 %v937
      %v1795 = vpop.f32.mrf.mxu0
      %v1796 = vadd.f32 %v1627, %v1795
      %v1797 = vpop.f32.mrf.mxu0
      %v1798 = vadd.f32 %v1629, %v1797
      %1799 = vmatmul.bf16.gmra.mxu0 %v941
      %v1800 = vpop.f32.mrf.mxu0
      %v1801 = vadd.f32 %v1632, %v1800
      %v1802 = vpop.f32.mrf.mxu0
      %v1803 = vadd.f32 %v1634, %v1802
      %1804 = vdwg.mxu0
      %1805 = vmatpush.bf16.msra.mxu0 0
      %1806 = vmatpush.bf16.msra.mxu0 0
      %1807 = vmatpush.bf16.msra.mxu0 0
      %1808 = vmatpush.bf16.msra.mxu0 0
      %1809 = vmatpush.bf16.msra.mxu0 0
      %1810 = vmatpush.bf16.msra.mxu0 %v1173
      %1811 = vmatpush.bf16.msra.mxu0 %v1172
      %1812 = vmatpush.bf16.msra.mxu0 %v1171
      %1813 = vmatmul.bf16.gmra.mxu0 %v1203
      %v1814 = vpop.f32.mrf.mxu0
      %v1815 = vadd.f32 %v1646, %v1814
      %v1816 = vpop.f32.mrf.mxu0
      %v1817 = vadd.f32 %v1648, %v1816
      %1818 = vmatmul.bf16.gmra.mxu0 %v1206
      %v1819 = vpop.f32.mrf.mxu0
      %v1820 = vadd.f32 %v1651, %v1819
      %v1821 = vpop.f32.mrf.mxu0
      %v1822 = vadd.f32 %v1653, %v1821
      %1823 = vmatmul.bf16.gmra.mxu0 %v1209
      %v1824 = vpop.f32.mrf.mxu0
      %v1825 = vadd.f32 %v1656, %v1824
      %v1826 = vpop.f32.mrf.mxu0
      %v1827 = vadd.f32 %v1658, %v1826
      %1828 = vmatmul.bf16.gmra.mxu0 %v1212
      %v1829 = vpop.f32.mrf.mxu0
      %v1830 = vadd.f32 %v1661, %v1829
      %v1831 = vpop.f32.mrf.mxu0
      %v1832 = vadd.f32 %v1663, %v1831
      %1833 = vmatmul.bf16.gmra.mxu0 %v1215
      %v1834 = vpop.f32.mrf.mxu0
      %v1835 = vadd.f32 %v1666, %v1834
      %v1836 = vpop.f32.mrf.mxu0
      %v1837 = vadd.f32 %v1668, %v1836
      %1838 = vmatmul.bf16.gmra.mxu0 %v1218
      %v1839 = vpop.f32.mrf.mxu0
      %v1840 = vadd.f32 %v1671, %v1839
      %v1841 = vpop.f32.mrf.mxu0
      %v1842 = vadd.f32 %v1673, %v1841
      %1843 = vmatmul.bf16.gmra.mxu0 %v1221
      %v1844 = vpop.f32.mrf.mxu0
      %v1845 = vadd.f32 %v1676, %v1844
      %v1846 = vpop.f32.mrf.mxu0
      %v1847 = vadd.f32 %v1678, %v1846
      %1848 = vmatmul.bf16.gmra.mxu0 %v1224
      %v1849 = vpop.f32.mrf.mxu0
      %v1850 = vadd.f32 %v1681, %v1849
      %v1851 = vpop.f32.mrf.mxu0
      %v1852 = vadd.f32 %v1683, %v1851
      %1853 = vmatmul.bf16.gmra.mxu0 %v1227
      %v1854 = vpop.f32.mrf.mxu0
      %v1855 = vadd.f32 %v1686, %v1854
      %v1856 = vpop.f32.mrf.mxu0
      %v1857 = vadd.f32 %v1688, %v1856
      %1858 = vmatmul.bf16.gmra.mxu0 %v1230
      %v1859 = vpop.f32.mrf.mxu0
      %v1860 = vadd.f32 %v1691, %v1859
      %v1861 = vpop.f32.mrf.mxu0
      %v1862 = vadd.f32 %v1693, %v1861
      %1863 = vmatmul.bf16.gmra.mxu0 %v1233
      %v1864 = vpop.f32.mrf.mxu0
      %v1865 = vadd.f32 %v1696, %v1864
      %v1866 = vpop.f32.mrf.mxu0
      %v1867 = vadd.f32 %v1698, %v1866
      %1868 = vmatmul.bf16.gmra.mxu0 %v1236
      %v1869 = vpop.f32.mrf.mxu0
      %v1870 = vadd.f32 %v1701, %v1869
      %v1871 = vpop.f32.mrf.mxu0
      %v1872 = vadd.f32 %v1703, %v1871
      %1873 = vmatmul.bf16.gmra.mxu0 %v1239
      %v1874 = vpop.f32.mrf.mxu0
      %v1875 = vadd.f32 %v1706, %v1874
      %v1876 = vpop.f32.mrf.mxu0
      %v1877 = vadd.f32 %v1708, %v1876
      %1878 = vmatmul.bf16.gmra.mxu0 %v1242
      %v1879 = vpop.f32.mrf.mxu0
      %v1880 = vadd.f32 %v1711, %v1879
      %v1881 = vpop.f32.mrf.mxu0
      %v1882 = vadd.f32 %v1713, %v1881
      %1883 = vmatmul.bf16.gmra.mxu0 %v1245
      %v1884 = vpop.f32.mrf.mxu0
      %v1885 = vadd.f32 %v1716, %v1884
      %v1886 = vpop.f32.mrf.mxu0
      %v1887 = vadd.f32 %v1718, %v1886
      %1888 = vmatmul.bf16.gmra.mxu0 %v1248
      %v1889 = vpop.f32.mrf.mxu0
      %v1890 = vadd.f32 %v1721, %v1889
      %v1891 = vpop.f32.mrf.mxu0
      %v1892 = vadd.f32 %v1723, %v1891
      %1893 = vmatmul.bf16.gmra.mxu0 %v1251
      %v1894 = vpop.f32.mrf.mxu0
      %v1895 = vadd.f32 %v1726, %v1894
      %v1896 = vpop.f32.mrf.mxu0
      %v1897 = vadd.f32 %v1728, %v1896
      %1898 = vmatmul.bf16.gmra.mxu0 %v1254
      %v1899 = vpop.f32.mrf.mxu0
      %v1900 = vadd.f32 %v1731, %v1899
      %v1901 = vpop.f32.mrf.mxu0
      %v1902 = vadd.f32 %v1733, %v1901
      %1903 = vmatmul.bf16.gmra.mxu0 %v1257
      %v1904 = vpop.f32.mrf.mxu0
      %v1905 = vadd.f32 %v1736, %v1904
      %v1906 = vpop.f32.mrf.mxu0
      %v1907 = vadd.f32 %v1738, %v1906
      %1908 = vmatmul.bf16.gmra.mxu0 %v1260
      %v1909 = vpop.f32.mrf.mxu0
      %v1910 = vadd.f32 %v1741, %v1909
      %v1911 = vpop.f32.mrf.mxu0
      %v1912 = vadd.f32 %v1743, %v1911
      %1913 = vmatmul.bf16.gmra.mxu0 %v1263
      %v1914 = vpop.f32.mrf.mxu0
      %v1915 = vadd.f32 %v1746, %v1914
      %v1916 = vpop.f32.mrf.mxu0
      %v1917 = vadd.f32 %v1748, %v1916
      %1918 = vmatmul.bf16.gmra.mxu0 %v1266
      %v1919 = vpop.f32.mrf.mxu0
      %v1920 = vadd.f32 %v1751, %v1919
      %v1921 = vpop.f32.mrf.mxu0
      %v1922 = vadd.f32 %v1753, %v1921
      %1923 = vmatmul.bf16.gmra.mxu0 %v1269
      %v1924 = vpop.f32.mrf.mxu0
      %v1925 = vadd.f32 %v1756, %v1924
      %v1926 = vpop.f32.mrf.mxu0
      %v1927 = vadd.f32 %v1758, %v1926
      %1928 = vmatmul.bf16.gmra.mxu0 %v1272
      %v1929 = vpop.f32.mrf.mxu0
      %v1930 = vadd.f32 %v1761, %v1929
      %v1931 = vpop.f32.mrf.mxu0
      %v1932 = vadd.f32 %v1763, %v1931
      %1933 = vmatmul.bf16.gmra.mxu0 %v1275
      %v1934 = vpop.f32.mrf.mxu0
      %v1935 = vadd.f32 %v1766, %v1934
      %v1936 = vpop.f32.mrf.mxu0
      %v1937 = vadd.f32 %v1768, %v1936
      %1938 = vmatmul.bf16.gmra.mxu0 %v1278
      %v1939 = vpop.f32.mrf.mxu0
      %v1940 = vadd.f32 %v1771, %v1939
      %v1941 = vpop.f32.mrf.mxu0
      %v1942 = vadd.f32 %v1773, %v1941
      %1943 = vmatmul.bf16.gmra.mxu0 %v1281
      %v1944 = vpop.f32.mrf.mxu0
      %v1945 = vadd.f32 %v1776, %v1944
      %v1946 = vpop.f32.mrf.mxu0
      %v1947 = vadd.f32 %v1778, %v1946
      %1948 = vmatmul.bf16.gmra.mxu0 %v1284
      %v1949 = vpop.f32.mrf.mxu0
      %v1950 = vadd.f32 %v1781, %v1949
      %v1951 = vpop.f32.mrf.mxu0
      %v1952 = vadd.f32 %v1783, %v1951
      %1953 = vmatmul.bf16.gmra.mxu0 %v1287
      %v1954 = vpop.f32.mrf.mxu0
      %v1955 = vadd.f32 %v1786, %v1954
      %v1956 = vpop.f32.mrf.mxu0
      %v1957 = vadd.f32 %v1788, %v1956
      %1958 = vmatmul.bf16.gmra.mxu0 %v1290
      %v1959 = vpop.f32.mrf.mxu0
      %v1960 = vadd.f32 %v1791, %v1959
      %v1961 = vpop.f32.mrf.mxu0
      %v1962 = vadd.f32 %v1793, %v1961
      %1963 = vmatmul.bf16.gmra.mxu0 %v1293
      %v1964 = vpop.f32.mrf.mxu0
      %v1965 = vadd.f32 %v1796, %v1964
      %v1966 = vpop.f32.mrf.mxu0
      %v1967 = vadd.f32 %v1798, %v1966
      %1968 = vmatmul.bf16.gmra.mxu0 %v1296
      %v1969 = vpop.f32.mrf.mxu0
      %v1970 = vadd.f32 %v1801, %v1969
      %v1971 = vpop.f32.mrf.mxu0
      %v1972 = vadd.f32 %v1803, %v1971
      %1973 = vdwg.mxu0
      %v1974 = vld [vmem:[%s2] sm:$0x1]
      %v1976 = vperm.slane %v1974, 0
      %v1978 = vadd.f32 %v1815, %v1976
      %v1979 = vadd.f32 %v1817, %v1976
      %v1980 = vadd.f32 %v1820, %v1976
      %v1981 = vadd.f32 %v1822, %v1976
      %v1982 = vadd.f32 %v1825, %v1976
      %v1983 = vadd.f32 %v1827, %v1976
      %v1984 = vadd.f32 %v1830, %v1976
      %v1985 = vadd.f32 %v1832, %v1976
      %v1986 = vadd.f32 %v1835, %v1976
      %v1987 = vadd.f32 %v1837, %v1976
      %v1988 = vadd.f32 %v1840, %v1976
      %v1989 = vadd.f32 %v1842, %v1976
      %v1990 = vadd.f32 %v1845, %v1976
      %v1991 = vadd.f32 %v1847, %v1976
      %v1992 = vadd.f32 %v1850, %v1976
      %v1993 = vadd.f32 %v1852, %v1976
      %v1994 = vadd.f32 %v1855, %v1976
      %v1995 = vadd.f32 %v1857, %v1976
      %v1996 = vadd.f32 %v1860, %v1976
      %v1997 = vadd.f32 %v1862, %v1976
      %v1998 = vadd.f32 %v1865, %v1976
      %v1999 = vadd.f32 %v1867, %v1976
      %v2000 = vadd.f32 %v1870, %v1976
      %v2001 = vadd.f32 %v1872, %v1976
      %v2002 = vadd.f32 %v1875, %v1976
      %v2003 = vadd.f32 %v1877, %v1976
      %v2004 = vadd.f32 %v1880, %v1976
      %v2005 = vadd.f32 %v1882, %v1976
      %v2006 = vadd.f32 %v1885, %v1976
      %v2007 = vadd.f32 %v1887, %v1976
      %v2008 = vadd.f32 %v1890, %v1976
      %v2009 = vadd.f32 %v1892, %v1976
      %v2010 = vadd.f32 %v1895, %v1976
      %v2011 = vadd.f32 %v1897, %v1976
      %v2012 = vadd.f32 %v1900, %v1976
      %v2013 = vadd.f32 %v1902, %v1976
      %v2014 = vadd.f32 %v1905, %v1976
      %v2015 = vadd.f32 %v1907, %v1976
      %v2016 = vadd.f32 %v1910, %v1976
      %v2017 = vadd.f32 %v1912, %v1976
      %v2018 = vadd.f32 %v1915, %v1976
      %v2019 = vadd.f32 %v1917, %v1976
      %v2020 = vadd.f32 %v1920, %v1976
      %v2021 = vadd.f32 %v1922, %v1976
      %v2022 = vadd.f32 %v1925, %v1976
      %v2023 = vadd.f32 %v1927, %v1976
      %v2024 = vadd.f32 %v1930, %v1976
      %v2025 = vadd.f32 %v1932, %v1976
      %v2026 = vadd.f32 %v1935, %v1976
      %v2027 = vadd.f32 %v1937, %v1976
      %v2028 = vadd.f32 %v1940, %v1976
      %v2029 = vadd.f32 %v1942, %v1976
      %v2030 = vadd.f32 %v1945, %v1976
      %v2031 = vadd.f32 %v1947, %v1976
      %v2032 = vadd.f32 %v1950, %v1976
      %v2033 = vadd.f32 %v1952, %v1976
      %v2034 = vadd.f32 %v1955, %v1976
      %v2035 = vadd.f32 %v1957, %v1976
      %v2036 = vadd.f32 %v1960, %v1976
      %v2037 = vadd.f32 %v1962, %v1976
      %v2038 = vadd.f32 %v1965, %v1976
      %v2039 = vadd.f32 %v1967, %v1976
      %v2040 = vadd.f32 %v1970, %v1976
      %v2041 = vadd.f32 %v1972, %v1976
      %vm2042 = vcmask 130048
      %2043 = vst.msk [vmem:[%s240] sm:$0xff] %vm2042, %v1978
      %2044 = vst.msk [vmem:[%s240 + $0x8] sm:$0xff] %vm2042, %v1979
      %2045 = vst.msk [vmem:[%s240 + $0x10] sm:$0xff] %vm2042, %v1980
      %2046 = vst.msk [vmem:[%s240 + $0x18] sm:$0xff] %vm2042, %v1981
      %2047 = vst.msk [vmem:[%s240 + $0x20] sm:$0xff] %vm2042, %v1982
      %2048 = vst.msk [vmem:[%s240 + $0x28] sm:$0xff] %vm2042, %v1983
      %2049 = vst.msk [vmem:[%s240 + $0x30] sm:$0xff] %vm2042, %v1984
      %2050 = vst.msk [vmem:[%s240 + $0x38] sm:$0xff] %vm2042, %v1985
      %2051 = vst.msk [vmem:[%s240 + $0x40] sm:$0xff] %vm2042, %v1986
      %2052 = vst.msk [vmem:[%s240 + $0x48] sm:$0xff] %vm2042, %v1987
      %2053 = vst.msk [vmem:[%s240 + $0x50] sm:$0xff] %vm2042, %v1988
      %2054 = vst.msk [vmem:[%s240 + $0x58] sm:$0xff] %vm2042, %v1989
      %2055 = vst.msk [vmem:[%s240 + $0x60] sm:$0xff] %vm2042, %v1990
      %2056 = vst.msk [vmem:[%s240 + $0x68] sm:$0xff] %vm2042, %v1991
      %2057 = vst.msk [vmem:[%s240 + $0x70] sm:$0xff] %vm2042, %v1992
      %2058 = vst.msk [vmem:[%s240 + $0x78] sm:$0xff] %vm2042, %v1993
      %2059 = vst.msk [vmem:[%s240 + $0x80] sm:$0xff] %vm2042, %v1994
      %2060 = vst.msk [vmem:[%s240 + $0x88] sm:$0xff] %vm2042, %v1995
      %2061 = vst.msk [vmem:[%s240 + $0x90] sm:$0xff] %vm2042, %v1996
      %2062 = vst.msk [vmem:[%s240 + $0x98] sm:$0xff] %vm2042, %v1997
      %2063 = vst.msk [vmem:[%s240 + $0xa0] sm:$0xff] %vm2042, %v1998
      %2064 = vst.msk [vmem:[%s240 + $0xa8] sm:$0xff] %vm2042, %v1999
      %2065 = vst.msk [vmem:[%s240 + $0xb0] sm:$0xff] %vm2042, %v2000
      %2066 = vst.msk [vmem:[%s240 + $0xb8] sm:$0xff] %vm2042, %v2001
      %2067 = vst.msk [vmem:[%s240 + $0xc0] sm:$0xff] %vm2042, %v2002
      %2068 = vst.msk [vmem:[%s240 + $0xc8] sm:$0xff] %vm2042, %v2003
      %2069 = vst.msk [vmem:[%s240 + $0xd0] sm:$0xff] %vm2042, %v2004
      %2070 = vst.msk [vmem:[%s240 + $0xd8] sm:$0xff] %vm2042, %v2005
      %2071 = vst.msk [vmem:[%s240 + $0xe0] sm:$0xff] %vm2042, %v2006
      %2072 = vst.msk [vmem:[%s240 + $0xe8] sm:$0xff] %vm2042, %v2007
      %2073 = vst.msk [vmem:[%s240 + $0xf0] sm:$0xff] %vm2042, %v2008
      %2074 = vst.msk [vmem:[%s240 + $0xf8] sm:$0xff] %vm2042, %v2009
      %2075 = vst.msk [vmem:[%s240 + $0x100] sm:$0xff] %vm2042, %v2010
      %2076 = vst.msk [vmem:[%s240 + $0x108] sm:$0xff] %vm2042, %v2011
      %2077 = vst.msk [vmem:[%s240 + $0x110] sm:$0xff] %vm2042, %v2012
      %2078 = vst.msk [vmem:[%s240 + $0x118] sm:$0xff] %vm2042, %v2013
      %2079 = vst.msk [vmem:[%s240 + $0x120] sm:$0xff] %vm2042, %v2014
      %2080 = vst.msk [vmem:[%s240 + $0x128] sm:$0xff] %vm2042, %v2015
      %2081 = vst.msk [vmem:[%s240 + $0x130] sm:$0xff] %vm2042, %v2016
      %2082 = vst.msk [vmem:[%s240 + $0x138] sm:$0xff] %vm2042, %v2017
      %2083 = vst.msk [vmem:[%s240 + $0x140] sm:$0xff] %vm2042, %v2018
      %2084 = vst.msk [vmem:[%s240 + $0x148] sm:$0xff] %vm2042, %v2019
      %2085 = vst.msk [vmem:[%s240 + $0x150] sm:$0xff] %vm2042, %v2020
      %2086 = vst.msk [vmem:[%s240 + $0x158] sm:$0xff] %vm2042, %v2021
      %2087 = vst.msk [vmem:[%s240 + $0x160] sm:$0xff] %vm2042, %v2022
      %2088 = vst.msk [vmem:[%s240 + $0x168] sm:$0xff] %vm2042, %v2023
      %2089 = vst.msk [vmem:[%s240 + $0x170] sm:$0xff] %vm2042, %v2024
      %2090 = vst.msk [vmem:[%s240 + $0x178] sm:$0xff] %vm2042, %v2025
      %2091 = vst.msk [vmem:[%s240 + $0x180] sm:$0xff] %vm2042, %v2026
      %2092 = vst.msk [vmem:[%s240 + $0x188] sm:$0xff] %vm2042, %v2027
      %2093 = vst.msk [vmem:[%s240 + $0x190] sm:$0xff] %vm2042, %v2028
      %2094 = vst.msk [vmem:[%s240 + $0x198] sm:$0xff] %vm2042, %v2029
      %2095 = vst.msk [vmem:[%s240 + $0x1a0] sm:$0xff] %vm2042, %v2030
      %2096 = vst.msk [vmem:[%s240 + $0x1a8] sm:$0xff] %vm2042, %v2031
      %2097 = vst.msk [vmem:[%s240 + $0x1b0] sm:$0xff] %vm2042, %v2032
      %2098 = vst.msk [vmem:[%s240 + $0x1b8] sm:$0xff] %vm2042, %v2033
      %2099 = vst.msk [vmem:[%s240 + $0x1c0] sm:$0xff] %vm2042, %v2034
      %2100 = vst.msk [vmem:[%s240 + $0x1c8] sm:$0xff] %vm2042, %v2035
      %2101 = vst.msk [vmem:[%s240 + $0x1d0] sm:$0xff] %vm2042, %v2036
      %2102 = vst.msk [vmem:[%s240 + $0x1d8] sm:$0xff] %vm2042, %v2037
      %2103 = vst.msk [vmem:[%s240 + $0x1e0] sm:$0xff] %vm2042, %v2038
      %2104 = vst.msk [vmem:[%s240 + $0x1e8] sm:$0xff] %vm2042, %v2039
      %2105 = vst.msk [vmem:[%s240 + $0x1f0] sm:$0xff] %vm2042, %v2040
      %2106 = vst.msk [vmem:[%s240 + $0x1f8] sm:$0xff] %vm2042, %v2041
      %v2107 = vsel %vm2042, %v1815, 0.0
      %v2108 = vsel %vm2042, %v1817, 0.0
      %v2109 = vadd.f32 %v2107, %v2108
      %v2110 = vsel %vm2042, %v1820, 0.0
      %v2111 = vadd.f32 %v2109, %v2110
      %v2112 = vsel %vm2042, %v1822, 0.0
      %v2113 = vadd.f32 %v2111, %v2112
      %v2114 = vsel %vm2042, %v1825, 0.0
      %v2115 = vadd.f32 %v2113, %v2114
      %v2116 = vsel %vm2042, %v1827, 0.0
      %v2117 = vadd.f32 %v2115, %v2116
      %v2118 = vsel %vm2042, %v1830, 0.0
      %v2119 = vadd.f32 %v2117, %v2118
      %v2120 = vsel %vm2042, %v1832, 0.0
      %v2121 = vadd.f32 %v2119, %v2120
      %v2122 = vsel %vm2042, %v1835, 0.0
      %v2123 = vadd.f32 %v2121, %v2122
      %v2124 = vsel %vm2042, %v1837, 0.0
      %v2125 = vadd.f32 %v2123, %v2124
      %v2126 = vsel %vm2042, %v1840, 0.0
      %v2127 = vadd.f32 %v2125, %v2126
      %v2128 = vsel %vm2042, %v1842, 0.0
      %v2129 = vadd.f32 %v2127, %v2128
      %v2130 = vsel %vm2042, %v1845, 0.0
      %v2131 = vadd.f32 %v2129, %v2130
      %v2132 = vsel %vm2042, %v1847, 0.0
      %v2133 = vadd.f32 %v2131, %v2132
      %v2134 = vsel %vm2042, %v1850, 0.0
      %v2135 = vadd.f32 %v2133, %v2134
      %v2136 = vsel %vm2042, %v1852, 0.0
      %v2137 = vadd.f32 %v2135, %v2136
      %v2138 = vsel %vm2042, %v1855, 0.0
      %v2139 = vadd.f32 %v2137, %v2138
      %v2140 = vsel %vm2042, %v1857, 0.0
      %v2141 = vadd.f32 %v2139, %v2140
      %v2142 = vsel %vm2042, %v1860, 0.0
      %v2143 = vadd.f32 %v2141, %v2142
      %v2144 = vsel %vm2042, %v1862, 0.0
      %v2145 = vadd.f32 %v2143, %v2144
      %v2146 = vsel %vm2042, %v1865, 0.0
      %v2147 = vadd.f32 %v2145, %v2146
      %v2148 = vsel %vm2042, %v1867, 0.0
      %v2149 = vadd.f32 %v2147, %v2148
      %v2150 = vsel %vm2042, %v1870, 0.0
      %v2151 = vadd.f32 %v2149, %v2150
      %v2152 = vsel %vm2042, %v1872, 0.0
      %v2153 = vadd.f32 %v2151, %v2152
      %v2154 = vsel %vm2042, %v1875, 0.0
      %v2155 = vadd.f32 %v2153, %v2154
      %v2156 = vsel %vm2042, %v1877, 0.0
      %v2157 = vadd.f32 %v2155, %v2156
      %v2158 = vsel %vm2042, %v1880, 0.0
      %v2159 = vadd.f32 %v2157, %v2158
      %v2160 = vsel %vm2042, %v1882, 0.0
      %v2161 = vadd.f32 %v2159, %v2160
      %v2162 = vsel %vm2042, %v1885, 0.0
      %v2163 = vadd.f32 %v2161, %v2162
      %v2164 = vsel %vm2042, %v1887, 0.0
      %v2165 = vadd.f32 %v2163, %v2164
      %v2166 = vsel %vm2042, %v1890, 0.0
      %v2167 = vadd.f32 %v2165, %v2166
      %v2168 = vsel %vm2042, %v1892, 0.0
      %v2169 = vadd.f32 %v2167, %v2168
      %v2170 = vsel %vm2042, %v1895, 0.0
      %v2171 = vadd.f32 %v2169, %v2170
      %v2172 = vsel %vm2042, %v1897, 0.0
      %v2173 = vadd.f32 %v2171, %v2172
      %v2174 = vsel %vm2042, %v1900, 0.0
      %v2175 = vadd.f32 %v2173, %v2174
      %v2176 = vsel %vm2042, %v1902, 0.0
      %v2177 = vadd.f32 %v2175, %v2176
      %v2178 = vsel %vm2042, %v1905, 0.0
      %v2179 = vadd.f32 %v2177, %v2178
      %v2180 = vsel %vm2042, %v1907, 0.0
      %v2181 = vadd.f32 %v2179, %v2180
      %v2182 = vsel %vm2042, %v1910, 0.0
      %v2183 = vadd.f32 %v2181, %v2182
      %v2184 = vsel %vm2042, %v1912, 0.0
      %v2185 = vadd.f32 %v2183, %v2184
      %v2186 = vsel %vm2042, %v1915, 0.0
      %v2187 = vadd.f32 %v2185, %v2186
      %v2188 = vsel %vm2042, %v1917, 0.0
      %v2189 = vadd.f32 %v2187, %v2188
      %v2190 = vsel %vm2042, %v1920, 0.0
      %v2191 = vadd.f32 %v2189, %v2190
      %v2192 = vsel %vm2042, %v1922, 0.0
      %v2193 = vadd.f32 %v2191, %v2192
      %v2194 = vsel %vm2042, %v1925, 0.0
      %v2195 = vadd.f32 %v2193, %v2194
      %v2196 = vsel %vm2042, %v1927, 0.0
      %v2197 = vadd.f32 %v2195, %v2196
      %v2198 = vsel %vm2042, %v1930, 0.0
      %v2199 = vadd.f32 %v2197, %v2198
      %v2200 = vsel %vm2042, %v1932, 0.0
      %v2201 = vadd.f32 %v2199, %v2200
      %v2202 = vsel %vm2042, %v1935, 0.0
      %v2203 = vadd.f32 %v2201, %v2202
      %v2204 = vsel %vm2042, %v1937, 0.0
      %v2205 = vadd.f32 %v2203, %v2204
      %v2206 = vsel %vm2042, %v1940, 0.0
      %v2207 = vadd.f32 %v2205, %v2206
      %v2208 = vsel %vm2042, %v1942, 0.0
      %v2209 = vadd.f32 %v2207, %v2208
      %v2210 = vsel %vm2042, %v1945, 0.0
      %v2211 = vadd.f32 %v2209, %v2210
      %v2212 = vsel %vm2042, %v1947, 0.0
      %v2213 = vadd.f32 %v2211, %v2212
      %v2214 = vsel %vm2042, %v1950, 0.0
      %v2215 = vadd.f32 %v2213, %v2214
      %v2216 = vsel %vm2042, %v1952, 0.0
      %v2217 = vadd.f32 %v2215, %v2216
      %v2218 = vsel %vm2042, %v1955, 0.0
      %v2219 = vadd.f32 %v2217, %v2218
      %v2220 = vsel %vm2042, %v1957, 0.0
      %v2221 = vadd.f32 %v2219, %v2220
      %v2222 = vsel %vm2042, %v1960, 0.0
      %v2223 = vadd.f32 %v2221, %v2222
      %v2224 = vsel %vm2042, %v1962, 0.0
      %v2225 = vadd.f32 %v2223, %v2224
      %v2226 = vsel %vm2042, %v1965, 0.0
      %v2227 = vadd.f32 %v2225, %v2226
      %v2228 = vsel %vm2042, %v1967, 0.0
      %v2229 = vadd.f32 %v2227, %v2228
      %v2230 = vsel %vm2042, %v1970, 0.0
      %v2231 = vadd.f32 %v2229, %v2230
      %v2232 = vsel %vm2042, %v1972, 0.0
      %v2233 = vadd.f32 %v2231, %v2232
      %v2234 = vrot.slane %v2233, 4
      %v2235 = vadd.f32 %v2233, %v2234
      %v2236 = vrot.slane %v2235, 2
      %v2237 = vadd.f32 %v2235, %v2236
      %v2238 = vrot.slane %v2237, 1
      %v2239 = vadd.f32 %v2237, %v2238
      %vm2240 = vcmask 122880
      %2241 = vst.msk [vmem:[%s244] sm:$0x1] %vm2240, %v2239
      %v2242 = vmul.f32 %v1815, %v1815
      %v2243 = vmul.f32 %v1817, %v1817
      %v2244 = vmul.f32 %v1820, %v1820
      %v2245 = vmul.f32 %v1822, %v1822
      %v2246 = vmul.f32 %v1825, %v1825
      %v2247 = vmul.f32 %v1827, %v1827
      %v2248 = vmul.f32 %v1830, %v1830
      %v2249 = vmul.f32 %v1832, %v1832
      %v2250 = vmul.f32 %v1835, %v1835
      %v2251 = vmul.f32 %v1837, %v1837
      %v2252 = vmul.f32 %v1840, %v1840
      %v2253 = vmul.f32 %v1842, %v1842
      %v2254 = vmul.f32 %v1845, %v1845
      %v2255 = vmul.f32 %v1847, %v1847
      %v2256 = vmul.f32 %v1850, %v1850
      %v2257 = vmul.f32 %v1852, %v1852
      %v2258 = vmul.f32 %v1855, %v1855
      %v2259 = vmul.f32 %v1857, %v1857
      %v2260 = vmul.f32 %v1860, %v1860
      %v2261 = vmul.f32 %v1862, %v1862
      %v2262 = vmul.f32 %v1865, %v1865
      %v2263 = vmul.f32 %v1867, %v1867
      %v2264 = vmul.f32 %v1870, %v1870
      %v2265 = vmul.f32 %v1872, %v1872
      %v2266 = vmul.f32 %v1875, %v1875
      %v2267 = vmul.f32 %v1877, %v1877
      %v2268 = vmul.f32 %v1880, %v1880
      %v2269 = vmul.f32 %v1882, %v1882
      %v2270 = vmul.f32 %v1885, %v1885
      %v2271 = vmul.f32 %v1887, %v1887
      %v2272 = vmul.f32 %v1890, %v1890
      %v2273 = vmul.f32 %v1892, %v1892
      %v2274 = vmul.f32 %v1895, %v1895
      %v2275 = vmul.f32 %v1897, %v1897
      %v2276 = vmul.f32 %v1900, %v1900
      %v2277 = vmul.f32 %v1902, %v1902
      %v2278 = vmul.f32 %v1905, %v1905
      %v2279 = vmul.f32 %v1907, %v1907
      %v2280 = vmul.f32 %v1910, %v1910
      %v2281 = vmul.f32 %v1912, %v1912
      %v2282 = vmul.f32 %v1915, %v1915
      %v2283 = vmul.f32 %v1917, %v1917
      %v2284 = vmul.f32 %v1920, %v1920
      %v2285 = vmul.f32 %v1922, %v1922
      %v2286 = vmul.f32 %v1925, %v1925
      %v2287 = vmul.f32 %v1927, %v1927
      %v2288 = vmul.f32 %v1930, %v1930
      %v2289 = vmul.f32 %v1932, %v1932
      %v2290 = vmul.f32 %v1935, %v1935
      %v2291 = vmul.f32 %v1937, %v1937
      %v2292 = vmul.f32 %v1940, %v1940
      %v2293 = vmul.f32 %v1942, %v1942
      %v2294 = vmul.f32 %v1945, %v1945
      %v2295 = vmul.f32 %v1947, %v1947
      %v2296 = vmul.f32 %v1950, %v1950
      %v2297 = vmul.f32 %v1952, %v1952
      %v2298 = vmul.f32 %v1955, %v1955
      %v2299 = vmul.f32 %v1957, %v1957
      %v2300 = vmul.f32 %v1960, %v1960
      %v2301 = vmul.f32 %v1962, %v1962
      %v2302 = vmul.f32 %v1965, %v1965
      %v2303 = vmul.f32 %v1967, %v1967
      %v2304 = vmul.f32 %v1970, %v1970
      %v2305 = vmul.f32 %v1972, %v1972
      %v2306 = vsel %vm2042, %v2242, 0.0
      %v2307 = vsel %vm2042, %v2243, 0.0
      %v2308 = vadd.f32 %v2306, %v2307
      %v2309 = vsel %vm2042, %v2244, 0.0
      %v2310 = vadd.f32 %v2308, %v2309
      %v2311 = vsel %vm2042, %v2245, 0.0
      %v2312 = vadd.f32 %v2310, %v2311
      %v2313 = vsel %vm2042, %v2246, 0.0
      %v2314 = vadd.f32 %v2312, %v2313
      %v2315 = vsel %vm2042, %v2247, 0.0
      %v2316 = vadd.f32 %v2314, %v2315
      %v2317 = vsel %vm2042, %v2248, 0.0
      %v2318 = vadd.f32 %v2316, %v2317
      %v2319 = vsel %vm2042, %v2249, 0.0
      %v2320 = vadd.f32 %v2318, %v2319
      %v2321 = vsel %vm2042, %v2250, 0.0
      %v2322 = vadd.f32 %v2320, %v2321
      %v2323 = vsel %vm2042, %v2251, 0.0
      %v2324 = vadd.f32 %v2322, %v2323
      %v2325 = vsel %vm2042, %v2252, 0.0
      %v2326 = vadd.f32 %v2324, %v2325
      %v2327 = vsel %vm2042, %v2253, 0.0
      %v2328 = vadd.f32 %v2326, %v2327
      %v2329 = vsel %vm2042, %v2254, 0.0
      %v2330 = vadd.f32 %v2328, %v2329
      %v2331 = vsel %vm2042, %v2255, 0.0
      %v2332 = vadd.f32 %v2330, %v2331
      %v2333 = vsel %vm2042, %v2256, 0.0
      %v2334 = vadd.f32 %v2332, %v2333
      %v2335 = vsel %vm2042, %v2257, 0.0
      %v2336 = vadd.f32 %v2334, %v2335
      %v2337 = vsel %vm2042, %v2258, 0.0
      %v2338 = vadd.f32 %v2336, %v2337
      %v2339 = vsel %vm2042, %v2259, 0.0
      %v2340 = vadd.f32 %v2338, %v2339
      %v2341 = vsel %vm2042, %v2260, 0.0
      %v2342 = vadd.f32 %v2340, %v2341
      %v2343 = vsel %vm2042, %v2261, 0.0
      %v2344 = vadd.f32 %v2342, %v2343
      %v2345 = vsel %vm2042, %v2262, 0.0
      %v2346 = vadd.f32 %v2344, %v2345
      %v2347 = vsel %vm2042, %v2263, 0.0
      %v2348 = vadd.f32 %v2346, %v2347
      %v2349 = vsel %vm2042, %v2264, 0.0
      %v2350 = vadd.f32 %v2348, %v2349
      %v2351 = vsel %vm2042, %v2265, 0.0
      %v2352 = vadd.f32 %v2350, %v2351
      %v2353 = vsel %vm2042, %v2266, 0.0
      %v2354 = vadd.f32 %v2352, %v2353
      %v2355 = vsel %vm2042, %v2267, 0.0
      %v2356 = vadd.f32 %v2354, %v2355
      %v2357 = vsel %vm2042, %v2268, 0.0
      %v2358 = vadd.f32 %v2356, %v2357
      %v2359 = vsel %vm2042, %v2269, 0.0
      %v2360 = vadd.f32 %v2358, %v2359
      %v2361 = vsel %vm2042, %v2270, 0.0
      %v2362 = vadd.f32 %v2360, %v2361
      %v2363 = vsel %vm2042, %v2271, 0.0
      %v2364 = vadd.f32 %v2362, %v2363
      %v2365 = vsel %vm2042, %v2272, 0.0
      %v2366 = vadd.f32 %v2364, %v2365
      %v2367 = vsel %vm2042, %v2273, 0.0
      %v2368 = vadd.f32 %v2366, %v2367
      %v2369 = vsel %vm2042, %v2274, 0.0
      %v2370 = vadd.f32 %v2368, %v2369
      %v2371 = vsel %vm2042, %v2275, 0.0
      %v2372 = vadd.f32 %v2370, %v2371
      %v2373 = vsel %vm2042, %v2276, 0.0
      %v2374 = vadd.f32 %v2372, %v2373
      %v2375 = vsel %vm2042, %v2277, 0.0
      %v2376 = vadd.f32 %v2374, %v2375
      %v2377 = vsel %vm2042, %v2278, 0.0
      %v2378 = vadd.f32 %v2376, %v2377
      %v2379 = vsel %vm2042, %v2279, 0.0
      %v2380 = vadd.f32 %v2378, %v2379
      %v2381 = vsel %vm2042, %v2280, 0.0
      %v2382 = vadd.f32 %v2380, %v2381
      %v2383 = vsel %vm2042, %v2281, 0.0
      %v2384 = vadd.f32 %v2382, %v2383
      %v2385 = vsel %vm2042, %v2282, 0.0
      %v2386 = vadd.f32 %v2384, %v2385
      %v2387 = vsel %vm2042, %v2283, 0.0
      %v2388 = vadd.f32 %v2386, %v2387
      %v2389 = vsel %vm2042, %v2284, 0.0
      %v2390 = vadd.f32 %v2388, %v2389
      %v2391 = vsel %vm2042, %v2285, 0.0
      %v2392 = vadd.f32 %v2390, %v2391
      %v2393 = vsel %vm2042, %v2286, 0.0
      %v2394 = vadd.f32 %v2392, %v2393
      %v2395 = vsel %vm2042, %v2287, 0.0
      %v2396 = vadd.f32 %v2394, %v2395
      %v2397 = vsel %vm2042, %v2288, 0.0
      %v2398 = vadd.f32 %v2396, %v2397
      %v2399 = vsel %vm2042, %v2289, 0.0
      %v2400 = vadd.f32 %v2398, %v2399
      %v2401 = vsel %vm2042, %v2290, 0.0
      %v2402 = vadd.f32 %v2400, %v2401
      %v2403 = vsel %vm2042, %v2291, 0.0
      %v2404 = vadd.f32 %v2402, %v2403
      %v2405 = vsel %vm2042, %v2292, 0.0
      %v2406 = vadd.f32 %v2404, %v2405
      %v2407 = vsel %vm2042, %v2293, 0.0
      %v2408 = vadd.f32 %v2406, %v2407
      %v2409 = vsel %vm2042, %v2294, 0.0
      %v2410 = vadd.f32 %v2408, %v2409
      %v2411 = vsel %vm2042, %v2295, 0.0
      %v2412 = vadd.f32 %v2410, %v2411
      %v2413 = vsel %vm2042, %v2296, 0.0
      %v2414 = vadd.f32 %v2412, %v2413
      %v2415 = vsel %vm2042, %v2297, 0.0
      %v2416 = vadd.f32 %v2414, %v2415
      %v2417 = vsel %vm2042, %v2298, 0.0
      %v2418 = vadd.f32 %v2416, %v2417
      %v2419 = vsel %vm2042, %v2299, 0.0
      %v2420 = vadd.f32 %v2418, %v2419
      %v2421 = vsel %vm2042, %v2300, 0.0
      %v2422 = vadd.f32 %v2420, %v2421
      %v2423 = vsel %vm2042, %v2301, 0.0
      %v2424 = vadd.f32 %v2422, %v2423
      %v2425 = vsel %vm2042, %v2302, 0.0
      %v2426 = vadd.f32 %v2424, %v2425
      %v2427 = vsel %vm2042, %v2303, 0.0
      %v2428 = vadd.f32 %v2426, %v2427
      %v2429 = vsel %vm2042, %v2304, 0.0
      %v2430 = vadd.f32 %v2428, %v2429
      %v2431 = vsel %vm2042, %v2305, 0.0
      %v2432 = vadd.f32 %v2430, %v2431
      %v2433 = vrot.slane %v2432, 4
      %v2434 = vadd.f32 %v2432, %v2433
      %v2435 = vrot.slane %v2434, 2
      %v2436 = vadd.f32 %v2434, %v2435
      %v2437 = vrot.slane %v2436, 1
      %v2438 = vadd.f32 %v2436, %v2437
      %2439 = vst.msk [vmem:[%s247] sm:$0x1] %vm2240, %v2438
      %s2440 = smul.u32 64, %s17
      %p2441 = scmp.lt.s32.totalorder %s2440, 127
      %s2442 = scalar_select %p2441, %s2440, 127
      %s2443 = smul.addr %s2442, 8
      %s2444 = scalar_lea.vmem %s3, %s2443
      %p2445 = scmp.lt.s32.totalorder %s17, 1
      %s2446 = scalar_select %p2445, %s17, 1
      %s2447 = scalar_lea.vmem %s4, %s2446
      %p2448 = scmp.lt.s32.totalorder %s17, 1
      %s2449 = scalar_select %p2448, %s17, 1
      %s2450 = scalar_lea.vmem %s5, %s2449
      // Predicated region
      $region33: #{down_forward.8} parent=31 // pred_check
        %p2451 = pneg %p103
      $region34: #{down_forward.8} parent=31 // pred_check_branch
        %2453 = sbr.rel (%p2451) target = $region36
      $region35: #{down_forward.8} parent=31 // pred_region
        %s2454 = smul.u32 64, %s17
      $region36: #{down_forward.8} parent=31 // pred_fallthru
        _
      // Predicated region
      $region37: #{down_forward.8} parent=31 // pred_check
        %p2455 = pneg %p129
      $region38: #{down_forward.8} parent=31 // pred_check_branch
        %2457 = sbr.rel (%p2455) target = $region40
      $region39: #{down_forward.8} parent=31 // pred_region
        _
      $region40: #{down_forward.8} parent=31 // pred_fallthru
        _
      // Predicated region
      $region41: #{down_forward.8} parent=31 // pred_check
        %p2458 = pneg %p155
      $region42: #{down_forward.8} parent=31 // pred_check_branch
        %2460 = sbr.rel (%p2458) target = $region44
      $region43: #{down_forward.8} parent=31 // pred_region
        _
      $region44: #{down_forward.8} parent=31 // pred_fallthru
        _
    $region32: #{down_forward.8} parent=5 // pred_fallthru
      _
    %p2461 = scmp.le.s32.totalorder 2, %s12
    // Predicated region
    $region45: #{down_forward.8} parent=5 // pred_check
      %p2462 = pneg %p2461
    $region46: #{down_forward.8} parent=5 // pred_check_branch
      %2464 = sbr.rel (%p2462) target = $region48
    $region47: #{down_forward.8} parent=5 // pred_region
      %s2465 = ssub.s32 %s12, 2
      // Predicated region
      $region49: #{down_forward.8} parent=47 // pred_check
        %p2466 = pneg %p109
      $region50: #{down_forward.8} parent=47 // pred_check_branch
        %2468 = sbr.rel (%p2466) target = $region52
      $region51: #{down_forward.8} parent=47 // pred_region
        %s2469 = smul.u32 64, %s18
        %p2470 = scmp.lt.s32.totalorder %s2469, 127
        %s2471 = scalar_select %p2470, %s2469, 127
        %s2472 = smul.addr %s2471, 8
        %s2473 = scalar_lea.vmem %s3, %s2472
      $region52: #{down_forward.8} parent=47 // pred_fallthru
        _
      // Predicated region
      $region53: #{down_forward.8} parent=47 // pred_check
        %p2474 = pneg %p135
      $region54: #{down_forward.8} parent=47 // pred_check_branch
        %2476 = sbr.rel (%p2474) target = $region56
      $region55: #{down_forward.8} parent=47 // pred_region
        %p2477 = scmp.lt.s32.totalorder %s18, 1
        %s2478 = scalar_select %p2477, %s18, 1
        %s2479 = scalar_lea.vmem %s4, %s2478
      $region56: #{down_forward.8} parent=47 // pred_fallthru
        _
      // Predicated region
      $region57: #{down_forward.8} parent=47 // pred_check
        %p2480 = pneg %p161
      $region58: #{down_forward.8} parent=47 // pred_check_branch
        %2482 = sbr.rel (%p2480) target = $region60
      $region59: #{down_forward.8} parent=47 // pred_region
        %p2483 = scmp.lt.s32.totalorder %s18, 1
        %s2484 = scalar_select %p2483, %s18, 1
        %s2485 = scalar_lea.vmem %s5, %s2484
      $region60: #{down_forward.8} parent=47 // pred_fallthru
        _
    $region48: #{down_forward.8} parent=5 // pred_fallthru
      _
  $region6: #{down_forward.8} parent=0 // loop_footer
    %s16 = sadd.s32 1, %s12
  $region7: #{down_forward.8} parent=0 // loop_footer_branch
    %11 = sbr.rel target = $region3
  $region8: #{down_forward.8} parent=0 // loop_exit
    _

</llo_original>
